<compile_context>
chip_gen: v7x
topology: tpu7x:2x2x1
jax: 0.10.0
libtpu: 0.0.40
codegen_flags: <defaults>
</compile_context>

<pallas_src>
import math
import functools

import jax
import jax.numpy as jnp
from jax.experimental import pallas as pl
from jax.experimental.pallas import tpu as pltpu

RRELU_SLOPE = (1.0 / 8.0 + 1.0 / 3.0) / 2.0   # torch.nn.RReLU() eval-mode slope
GCN_MATMUL_DTYPE = jnp.bfloat16               # MXU-native GCN operands (f32 accumulation)
LANE = 128                                    # lane-dense packing width for the param slab

_VMEM = pl.BlockSpec(memory_space=pltpu.MemorySpace.VMEM)


# ------------------------- fused Pallas kernel -------------------------

def _evolvegcn_kernel(adj_ref, feat_ref, p_ref, out_ref, *, T, layout):
    """Evolve both GCN weight matrices T GRU steps, then run both GCN layers
    for the final timestep only.  `layout[name] = (row_start, n_rows, n_cols)`
    describes the single packed parameter slab `p_ref` (lanes padded to 128)."""

    r1, c1 = layout["wall1"][2], layout["wb1"][2]
    r2, c2 = layout["wall2"][2], layout["wb2"][2]

    def evolve(wall_name, wb_name, r, c):
        row_w = layout[wall_name][0]
        row_b = layout[wb_name][0]
        # Fused hidden-independent gate LHS: one matmul yields Wu@q,Wr@q,Wh@q,Uu@q,Ur@q.
        gates = p_ref[row_w:row_w + 5 * r, 0:r]            # (5r, r)
        u_h = p_ref[row_w + 5 * r:row_w + 6 * r, 0:r]      # (r, r)
        q = p_ref[row_b:row_b + r, 0:c]                    # GCN init weights (r, c)
        b_u = p_ref[row_b + 1 * r:row_b + 2 * r, 0:c]
        b_r = p_ref[row_b + 2 * r:row_b + 3 * r, 0:c]
        b_h = p_ref[row_b + 3 * r:row_b + 4 * r, 0:c]

        def step(_, q):
            fused = jnp.dot(gates, q, preferred_element_type=jnp.float32)   # (5r, c)
            upd = jax.nn.sigmoid(fused[0 * r:1 * r] + fused[3 * r:4 * r] + b_u)
            rst = jax.nn.sigmoid(fused[1 * r:2 * r] + fused[4 * r:5 * r] + b_r)
            hcp = jnp.tanh(fused[2 * r:3 * r]
                           + jnp.dot(u_h, rst * q, preferred_element_type=jnp.float32)
                           + b_h)
            return (1.0 - upd) * q + upd * hcp

        if T <= 16:                      # serially dependent chain: unroll small T
            for t in range(T):
                q = step(t, q)
        else:                            # keep code size bounded for long sequences
            q = jax.lax.fori_loop(0, T, step, q)
        return q

    w1 = evolve("wall1", "wb1", r1, c1)      # evolved layer-1 GCN weights (f32)
    w2 = evolve("wall2", "wb2", r2, c2)      # evolved layer-2 GCN weights (f32)

    adj = adj_ref[...].astype(GCN_MATMUL_DTYPE)

    def gcn(a, x, w):
        x = x.astype(GCN_MATMUL_DTYPE)
        w_c = w.astype(GCN_MATMUL_DTYPE)
        d_in, d_out = w.shape
        if d_in <= d_out:
            # contract the smaller feature dim against adj first
            ax = jnp.dot(a, x, preferred_element_type=jnp.float32)
            y = jnp.dot(ax.astype(GCN_MATMUL_DTYPE), w_c,
                        preferred_element_type=jnp.float32)
        else:
            xw = jnp.dot(x, w_c, preferred_element_type=jnp.float32)
            y = jnp.dot(a, xw.astype(GCN_MATMUL_DTYPE),
                        preferred_element_type=jnp.float32)
        return jnp.where(y >= 0.0, y, RRELU_SLOPE * y)

    h1 = gcn(adj, feat_ref[...], w1)          # layer-1 GCN, final timestep only
    out_ref[...] = gcn(adj, h1, w2).astype(out_ref.dtype)   # layer-2 GCN


# ------------------------- host-side packing & wrapper -------------------------

def _pack_layer(params):
    """One GRCU layer -> (wall (6r,r) = [Wu;Wr;Wh;Uu;Ur;Uh], wb (4r,c) = [W_init;bu;br;bh])."""
    Wu, Uu, bu, Wr, Ur, br, Wh, Uh, bh = params["gru"]
    wall = jnp.concatenate([Wu, Wr, Wh, Uu, Ur, Uh], axis=0)
    wb = jnp.concatenate([params["gcn_w"], bu, br, bh], axis=0)
    return wall, wb


def _pack_params(params1, params2):
    """Pack all 12 parameter tensors into one lane-dense (rows, 128) f32 slab."""
    pieces, layout = [], {}
    row = 0

    def add(name, arr):
        nonlocal row
        nrows, ncols = arr.shape
        assert ncols <= LANE, (name, arr.shape)
        layout[name] = (row, nrows, ncols)
        pieces.append(jnp.pad(arr.astype(jnp.float32), ((0, 0), (0, LANE - ncols))))
        row += nrows
        pad_rows = (-row) % 8            # keep every section start sublane-aligned
        if pad_rows:
            pieces.append(jnp.zeros((pad_rows, LANE), jnp.float32))
            row += pad_rows

    wall1, wb1 = _pack_layer(params1)
    wall2, wb2 = _pack_layer(params2)
    add("wall1", wall1)
    add("wb1", wb1)
    add("wall2", wall2)
    add("wb2", wb2)
    return jnp.concatenate(pieces, axis=0), layout


def evolvegcn_forward(params1, params2, adj_list, features_list):
    """Matches EvolveGCNModel.forward: returns node embeddings of the LAST timestep."""
    T = len(adj_list)
    adj_last = adj_list[-1]
    feat_last = features_list[-1]
    slab, layout = _pack_params(params1, params2)

    n = adj_last.shape[0]
    c2 = params2["gcn_w"].shape[1]

    kernel = functools.partial(_evolvegcn_kernel, T=T, layout=layout)
    return pl.pallas_call(
        kernel,
        out_shape=jax.ShapeDtypeStruct((n, c2), jnp.float32),
        in_specs=[_VMEM, _VMEM, _VMEM],     # adj, feat, packed param slab
        out_specs=_VMEM,
    )(adj_last, feat_last, slab)


# ------------------------- pure-JAX reference (for verification) -------------------------

def _reference_forward(params1, params2, adj_list, features_list):
    def gru(q, p):
        Wu, Uu, bu, Wr, Ur, br, Wh, Uh, bh = p
        upd = jax.nn.sigmoid(Wu @ q + Uu @ q + bu)
        rst = jax.nn.sigmoid(Wr @ q + Ur @ q + br)
        hc = jnp.tanh(Wh @ q + Uh @ (rst * q) + bh)
        return (1.0 - upd) * q + upd * hc

    def grcu(params, adjs, feats):
        w = params["gcn_w"]
        outs = []
        for a, f in zip(adjs, feats):
            w = gru(w, params["gru"])
            y = a @ (f @ w)
            outs.append(jnp.where(y >= 0.0, y, RRELU_SLOPE * y))
        return outs

    new_feats = grcu(params1, adj_list, features_list)
    return grcu(params2, adj_list, new_feats)[-1]


# ------------------------- parameter init (deterministic) -------------------------

def init_gate_params(key, rows, cols):
    # mat_GRU_gate.reset_param: uniform(-1/sqrt(t.size(1)), +); W, U are (rows, rows)
    stdv = 1.0 / math.sqrt(rows)
    kw, ku = jax.random.split(key)
    W = jax.random.uniform(kw, (rows, rows), jnp.float32, -stdv, stdv)
    U = jax.random.uniform(ku, (rows, rows), jnp.float32, -stdv, stdv)
    b = jnp.zeros((rows, cols), jnp.float32)
    return W, U, b


def init_grcu_params(key, layer_in, layer_out):
    k0, k1, k2, k3 = jax.random.split(key, 4)
    bound = math.sqrt(6.0 / (layer_in + layer_out))  # xavier_uniform_
    gcn_w = jax.random.uniform(k0, (layer_in, layer_out), jnp.float32, -bound, bound)
    update = init_gate_params(k1, layer_in, layer_out)
    reset = init_gate_params(k2, layer_in, layer_out)
    htilda = init_gate_params(k3, layer_in, layer_out)
    return {"gcn_w": gcn_w, "gru": update + reset + htilda}


# ------------------------- main -------------------------

if __name__ == "__main__":
    key = jax.random.PRNGKey(0)
    N, T = 32, 4
    layer_1_in, layer_1_out, layer_2_out = 16, 32, 16

    k_p1, k_p2, k_adj, k_feat = jax.random.split(key, 4)
    params1 = init_grcu_params(k_p1, layer_1_in, layer_1_out)
    params2 = init_grcu_params(k_p2, layer_1_out, layer_2_out)

    adj_keys = jax.random.split(k_adj, T)
    feat_keys = jax.random.split(k_feat, T)

    adj_list = []
    for kk in adj_keys:
        a = (jax.random.uniform(kk, (N, N)) < 0.2).astype(jnp.float32)
        deg = jnp.maximum(a.sum(axis=1, keepdims=True), 1.0)
        adj_list.append(a / deg)  # row-normalized dense adjacency

    features_list = [
        jax.random.normal(kk, (N, layer_1_in), dtype=jnp.float32) for kk in feat_keys
    ]

    out = evolvegcn_forward(params1, params2, adj_list, features_list)
    out = jax.block_until_ready(out)
    assert out.shape == (N, layer_2_out)

    ref = jax.block_until_ready(
        _reference_forward(params1, params2, adj_list, features_list))
    # Tolerance reflects bf16 MXU operands in the two GCN layers (GRU math is f32).
    tol = 5e-2 if GCN_MATMUL_DTYPE == jnp.bfloat16 else 1e-3
    assert jnp.allclose(out, ref, rtol=tol, atol=tol), (
        float(jnp.max(jnp.abs(out - ref))))

    print("KERNEL_OK")
</pallas_src>

<mosaic_0001>
module attributes {stable_mosaic.version = 11 : i64} {
  func.func @_evolvegcn_kernel(%arg0: memref<32x32xf32, #tpu.memory_space<vmem>>, %arg1: memref<32x16xf32, #tpu.memory_space<vmem>>, %arg2: memref<480x128xf32, #tpu.memory_space<vmem>>, %arg3: memref<32x16xf32, #tpu.memory_space<vmem>>) attributes {dimension_semantics = [], scalar_prefetch = 0 : i64, scratch_operands = 0 : i64, tpu.core_type = #tpu.core_type<tc>} {
    %c0 = arith.constant 0 : index
    %c0_0 = arith.constant 0 : index
    %0 = vector.load %arg2[%c0, %c0_0] : memref<480x128xf32, #tpu.memory_space<vmem>>, vector<80x16xf32>
    %c80 = arith.constant 80 : index
    %c0_1 = arith.constant 0 : index
    %1 = vector.load %arg2[%c80, %c0_1] : memref<480x128xf32, #tpu.memory_space<vmem>>, vector<16x16xf32>
    %c96 = arith.constant 96 : index
    %c0_2 = arith.constant 0 : index
    %2 = vector.load %arg2[%c96, %c0_2] : memref<480x128xf32, #tpu.memory_space<vmem>>, vector<16x32xf32>
    %c112 = arith.constant 112 : index
    %c0_3 = arith.constant 0 : index
    %3 = vector.load %arg2[%c112, %c0_3] : memref<480x128xf32, #tpu.memory_space<vmem>>, vector<16x32xf32>
    %c128 = arith.constant 128 : index
    %c0_4 = arith.constant 0 : index
    %4 = vector.load %arg2[%c128, %c0_4] : memref<480x128xf32, #tpu.memory_space<vmem>>, vector<16x32xf32>
    %c144 = arith.constant 144 : index
    %c0_5 = arith.constant 0 : index
    %5 = vector.load %arg2[%c144, %c0_5] : memref<480x128xf32, #tpu.memory_space<vmem>>, vector<16x32xf32>
    %cst = arith.constant dense<0.000000e+00> : vector<80x32xf32>
    %6 = tpu.matmul %0, %2, %cst {dimension_numbers = #tpu.dot_dimension_numbers<[1], [0], [0], [1], [0, 0, 1, 1], [], []>} : vector<80x16xf32>, vector<16x32xf32>, vector<80x32xf32> -> vector<80x32xf32>
    %7 = vector.extract_strided_slice %6 {offsets = [0, 0], sizes = [16, 32], strides = [1, 1]} : vector<80x32xf32> to vector<16x32xf32>
    %8 = vector.extract_strided_slice %6 {offsets = [48, 0], sizes = [16, 32], strides = [1, 1]} : vector<80x32xf32> to vector<16x32xf32>
    %9 = arith.addf %7, %8 : vector<16x32xf32>
    %10 = arith.addf %9, %3 : vector<16x32xf32>
    %11 = arith.negf %10 : vector<16x32xf32>
    %12 = math.exp %11 : vector<16x32xf32>
    %cst_6 = arith.constant 1.000000e+00 : f32
    %13 = vector.broadcast %cst_6 : f32 to vector<16x32xf32>
    %14 = arith.addf %13, %12 : vector<16x32xf32>
    %15 = arith.divf %13, %14 : vector<16x32xf32>
    %16 = vector.extract_strided_slice %6 {offsets = [16, 0], sizes = [16, 32], strides = [1, 1]} : vector<80x32xf32> to vector<16x32xf32>
    %17 = vector.extract_strided_slice %6 {offsets = [64, 0], sizes = [16, 32], strides = [1, 1]} : vector<80x32xf32> to vector<16x32xf32>
    %18 = arith.addf %16, %17 : vector<16x32xf32>
    %19 = arith.addf %18, %4 : vector<16x32xf32>
    %20 = arith.negf %19 : vector<16x32xf32>
    %21 = math.exp %20 : vector<16x32xf32>
    %cst_7 = arith.constant 1.000000e+00 : f32
    %22 = vector.broadcast %cst_7 : f32 to vector<16x32xf32>
    %23 = arith.addf %22, %21 : vector<16x32xf32>
    %24 = arith.divf %22, %23 : vector<16x32xf32>
    %25 = vector.extract_strided_slice %6 {offsets = [32, 0], sizes = [16, 32], strides = [1, 1]} : vector<80x32xf32> to vector<16x32xf32>
    %26 = arith.mulf %24, %2 : vector<16x32xf32>
    %cst_8 = arith.constant dense<0.000000e+00> : vector<16x32xf32>
    %27 = tpu.matmul %1, %26, %cst_8 {dimension_numbers = #tpu.dot_dimension_numbers<[1], [0], [0], [1], [0, 0, 1, 1], [], []>} : vector<16x16xf32>, vector<16x32xf32>, vector<16x32xf32> -> vector<16x32xf32>
    %28 = arith.addf %25, %27 : vector<16x32xf32>
    %29 = arith.addf %28, %5 : vector<16x32xf32>
    %30 = math.tanh %29 : vector<16x32xf32>
    %cst_9 = arith.constant 1.000000e+00 : f32
    %31 = vector.broadcast %cst_9 : f32 to vector<16x32xf32>
    %32 = arith.subf %31, %15 : vector<16x32xf32>
    %33 = arith.mulf %32, %2 : vector<16x32xf32>
    %34 = arith.mulf %15, %30 : vector<16x32xf32>
    %35 = arith.addf %33, %34 : vector<16x32xf32>
    %cst_10 = arith.constant dense<0.000000e+00> : vector<80x32xf32>
    %36 = tpu.matmul %0, %35, %cst_10 {dimension_numbers = #tpu.dot_dimension_numbers<[1], [0], [0], [1], [0, 0, 1, 1], [], []>} : vector<80x16xf32>, vector<16x32xf32>, vector<80x32xf32> -> vector<80x32xf32>
    %37 = vector.extract_strided_slice %36 {offsets = [0, 0], sizes = [16, 32], strides = [1, 1]} : vector<80x32xf32> to vector<16x32xf32>
    %38 = vector.extract_strided_slice %36 {offsets = [48, 0], sizes = [16, 32], strides = [1, 1]} : vector<80x32xf32> to vector<16x32xf32>
    %39 = arith.addf %37, %38 : vector<16x32xf32>
    %40 = arith.addf %39, %3 : vector<16x32xf32>
    %41 = arith.negf %40 : vector<16x32xf32>
    %42 = math.exp %41 : vector<16x32xf32>
    %cst_11 = arith.constant 1.000000e+00 : f32
    %43 = vector.broadcast %cst_11 : f32 to vector<16x32xf32>
    %44 = arith.addf %43, %42 : vector<16x32xf32>
    %45 = arith.divf %43, %44 : vector<16x32xf32>
    %46 = vector.extract_strided_slice %36 {offsets = [16, 0], sizes = [16, 32], strides = [1, 1]} : vector<80x32xf32> to vector<16x32xf32>
    %47 = vector.extract_strided_slice %36 {offsets = [64, 0], sizes = [16, 32], strides = [1, 1]} : vector<80x32xf32> to vector<16x32xf32>
    %48 = arith.addf %46, %47 : vector<16x32xf32>
    %49 = arith.addf %48, %4 : vector<16x32xf32>
    %50 = arith.negf %49 : vector<16x32xf32>
    %51 = math.exp %50 : vector<16x32xf32>
    %cst_12 = arith.constant 1.000000e+00 : f32
    %52 = vector.broadcast %cst_12 : f32 to vector<16x32xf32>
    %53 = arith.addf %52, %51 : vector<16x32xf32>
    %54 = arith.divf %52, %53 : vector<16x32xf32>
    %55 = vector.extract_strided_slice %36 {offsets = [32, 0], sizes = [16, 32], strides = [1, 1]} : vector<80x32xf32> to vector<16x32xf32>
    %56 = arith.mulf %54, %35 : vector<16x32xf32>
    %cst_13 = arith.constant dense<0.000000e+00> : vector<16x32xf32>
    %57 = tpu.matmul %1, %56, %cst_13 {dimension_numbers = #tpu.dot_dimension_numbers<[1], [0], [0], [1], [0, 0, 1, 1], [], []>} : vector<16x16xf32>, vector<16x32xf32>, vector<16x32xf32> -> vector<16x32xf32>
    %58 = arith.addf %55, %57 : vector<16x32xf32>
    %59 = arith.addf %58, %5 : vector<16x32xf32>
    %60 = math.tanh %59 : vector<16x32xf32>
    %cst_14 = arith.constant 1.000000e+00 : f32
    %61 = vector.broadcast %cst_14 : f32 to vector<16x32xf32>
    %62 = arith.subf %61, %45 : vector<16x32xf32>
    %63 = arith.mulf %62, %35 : vector<16x32xf32>
    %64 = arith.mulf %45, %60 : vector<16x32xf32>
    %65 = arith.addf %63, %64 : vector<16x32xf32>
    %cst_15 = arith.constant dense<0.000000e+00> : vector<80x32xf32>
    %66 = tpu.matmul %0, %65, %cst_15 {dimension_numbers = #tpu.dot_dimension_numbers<[1], [0], [0], [1], [0, 0, 1, 1], [], []>} : vector<80x16xf32>, vector<16x32xf32>, vector<80x32xf32> -> vector<80x32xf32>
    %67 = vector.extract_strided_slice %66 {offsets = [0, 0], sizes = [16, 32], strides = [1, 1]} : vector<80x32xf32> to vector<16x32xf32>
    %68 = vector.extract_strided_slice %66 {offsets = [48, 0], sizes = [16, 32], strides = [1, 1]} : vector<80x32xf32> to vector<16x32xf32>
    %69 = arith.addf %67, %68 : vector<16x32xf32>
    %70 = arith.addf %69, %3 : vector<16x32xf32>
    %71 = arith.negf %70 : vector<16x32xf32>
    %72 = math.exp %71 : vector<16x32xf32>
    %cst_16 = arith.constant 1.000000e+00 : f32
    %73 = vector.broadcast %cst_16 : f32 to vector<16x32xf32>
    %74 = arith.addf %73, %72 : vector<16x32xf32>
    %75 = arith.divf %73, %74 : vector<16x32xf32>
    %76 = vector.extract_strided_slice %66 {offsets = [16, 0], sizes = [16, 32], strides = [1, 1]} : vector<80x32xf32> to vector<16x32xf32>
    %77 = vector.extract_strided_slice %66 {offsets = [64, 0], sizes = [16, 32], strides = [1, 1]} : vector<80x32xf32> to vector<16x32xf32>
    %78 = arith.addf %76, %77 : vector<16x32xf32>
    %79 = arith.addf %78, %4 : vector<16x32xf32>
    %80 = arith.negf %79 : vector<16x32xf32>
    %81 = math.exp %80 : vector<16x32xf32>
    %cst_17 = arith.constant 1.000000e+00 : f32
    %82 = vector.broadcast %cst_17 : f32 to vector<16x32xf32>
    %83 = arith.addf %82, %81 : vector<16x32xf32>
    %84 = arith.divf %82, %83 : vector<16x32xf32>
    %85 = vector.extract_strided_slice %66 {offsets = [32, 0], sizes = [16, 32], strides = [1, 1]} : vector<80x32xf32> to vector<16x32xf32>
    %86 = arith.mulf %84, %65 : vector<16x32xf32>
    %cst_18 = arith.constant dense<0.000000e+00> : vector<16x32xf32>
    %87 = tpu.matmul %1, %86, %cst_18 {dimension_numbers = #tpu.dot_dimension_numbers<[1], [0], [0], [1], [0, 0, 1, 1], [], []>} : vector<16x16xf32>, vector<16x32xf32>, vector<16x32xf32> -> vector<16x32xf32>
    %88 = arith.addf %85, %87 : vector<16x32xf32>
    %89 = arith.addf %88, %5 : vector<16x32xf32>
    %90 = math.tanh %89 : vector<16x32xf32>
    %cst_19 = arith.constant 1.000000e+00 : f32
    %91 = vector.broadcast %cst_19 : f32 to vector<16x32xf32>
    %92 = arith.subf %91, %75 : vector<16x32xf32>
    %93 = arith.mulf %92, %65 : vector<16x32xf32>
    %94 = arith.mulf %75, %90 : vector<16x32xf32>
    %95 = arith.addf %93, %94 : vector<16x32xf32>
    %cst_20 = arith.constant dense<0.000000e+00> : vector<80x32xf32>
    %96 = tpu.matmul %0, %95, %cst_20 {dimension_numbers = #tpu.dot_dimension_numbers<[1], [0], [0], [1], [0, 0, 1, 1], [], []>} : vector<80x16xf32>, vector<16x32xf32>, vector<80x32xf32> -> vector<80x32xf32>
    %97 = vector.extract_strided_slice %96 {offsets = [0, 0], sizes = [16, 32], strides = [1, 1]} : vector<80x32xf32> to vector<16x32xf32>
    %98 = vector.extract_strided_slice %96 {offsets = [48, 0], sizes = [16, 32], strides = [1, 1]} : vector<80x32xf32> to vector<16x32xf32>
    %99 = arith.addf %97, %98 : vector<16x32xf32>
    %100 = arith.addf %99, %3 : vector<16x32xf32>
    %101 = arith.negf %100 : vector<16x32xf32>
    %102 = math.exp %101 : vector<16x32xf32>
    %cst_21 = arith.constant 1.000000e+00 : f32
    %103 = vector.broadcast %cst_21 : f32 to vector<16x32xf32>
    %104 = arith.addf %103, %102 : vector<16x32xf32>
    %105 = arith.divf %103, %104 : vector<16x32xf32>
    %106 = vector.extract_strided_slice %96 {offsets = [16, 0], sizes = [16, 32], strides = [1, 1]} : vector<80x32xf32> to vector<16x32xf32>
    %107 = vector.extract_strided_slice %96 {offsets = [64, 0], sizes = [16, 32], strides = [1, 1]} : vector<80x32xf32> to vector<16x32xf32>
    %108 = arith.addf %106, %107 : vector<16x32xf32>
    %109 = arith.addf %108, %4 : vector<16x32xf32>
    %110 = arith.negf %109 : vector<16x32xf32>
    %111 = math.exp %110 : vector<16x32xf32>
    %cst_22 = arith.constant 1.000000e+00 : f32
    %112 = vector.broadcast %cst_22 : f32 to vector<16x32xf32>
    %113 = arith.addf %112, %111 : vector<16x32xf32>
    %114 = arith.divf %112, %113 : vector<16x32xf32>
    %115 = vector.extract_strided_slice %96 {offsets = [32, 0], sizes = [16, 32], strides = [1, 1]} : vector<80x32xf32> to vector<16x32xf32>
    %116 = arith.mulf %114, %95 : vector<16x32xf32>
    %cst_23 = arith.constant dense<0.000000e+00> : vector<16x32xf32>
    %117 = tpu.matmul %1, %116, %cst_23 {dimension_numbers = #tpu.dot_dimension_numbers<[1], [0], [0], [1], [0, 0, 1, 1], [], []>} : vector<16x16xf32>, vector<16x32xf32>, vector<16x32xf32> -> vector<16x32xf32>
    %118 = arith.addf %115, %117 : vector<16x32xf32>
    %119 = arith.addf %118, %5 : vector<16x32xf32>
    %120 = math.tanh %119 : vector<16x32xf32>
    %cst_24 = arith.constant 1.000000e+00 : f32
    %121 = vector.broadcast %cst_24 : f32 to vector<16x32xf32>
    %122 = arith.subf %121, %105 : vector<16x32xf32>
    %123 = arith.mulf %122, %95 : vector<16x32xf32>
    %124 = arith.mulf %105, %120 : vector<16x32xf32>
    %125 = arith.addf %123, %124 : vector<16x32xf32>
    %c160 = arith.constant 160 : index
    %c0_25 = arith.constant 0 : index
    %126 = vector.load %arg2[%c160, %c0_25] : memref<480x128xf32, #tpu.memory_space<vmem>>, vector<160x32xf32>
    %c320 = arith.constant 320 : index
    %c0_26 = arith.constant 0 : index
    %127 = vector.load %arg2[%c320, %c0_26] : memref<480x128xf32, #tpu.memory_space<vmem>>, vector<32x32xf32>
    %c352 = arith.constant 352 : index
    %c0_27 = arith.constant 0 : index
    %128 = vector.load %arg2[%c352, %c0_27] : memref<480x128xf32, #tpu.memory_space<vmem>>, vector<32x16xf32>
    %c384 = arith.constant 384 : index
    %c0_28 = arith.constant 0 : index
    %129 = vector.load %arg2[%c384, %c0_28] : memref<480x128xf32, #tpu.memory_space<vmem>>, vector<32x16xf32>
    %c416 = arith.constant 416 : index
    %c0_29 = arith.constant 0 : index
    %130 = vector.load %arg2[%c416, %c0_29] : memref<480x128xf32, #tpu.memory_space<vmem>>, vector<32x16xf32>
    %c448 = arith.constant 448 : index
    %c0_30 = arith.constant 0 : index
    %131 = vector.load %arg2[%c448, %c0_30] : memref<480x128xf32, #tpu.memory_space<vmem>>, vector<32x16xf32>
    %cst_31 = arith.constant dense<0.000000e+00> : vector<160x16xf32>
    %132 = tpu.matmul %126, %128, %cst_31 {dimension_numbers = #tpu.dot_dimension_numbers<[1], [0], [0], [1], [0, 0, 1, 1], [], []>} : vector<160x32xf32>, vector<32x16xf32>, vector<160x16xf32> -> vector<160x16xf32>
    %133 = vector.extract_strided_slice %132 {offsets = [0, 0], sizes = [32, 16], strides = [1, 1]} : vector<160x16xf32> to vector<32x16xf32>
    %134 = vector.extract_strided_slice %132 {offsets = [96, 0], sizes = [32, 16], strides = [1, 1]} : vector<160x16xf32> to vector<32x16xf32>
    %135 = arith.addf %133, %134 : vector<32x16xf32>
    %136 = arith.addf %135, %129 : vector<32x16xf32>
    %137 = arith.negf %136 : vector<32x16xf32>
    %138 = math.exp %137 : vector<32x16xf32>
    %cst_32 = arith.constant 1.000000e+00 : f32
    %139 = vector.broadcast %cst_32 : f32 to vector<32x16xf32>
    %140 = arith.addf %139, %138 : vector<32x16xf32>
    %141 = arith.divf %139, %140 : vector<32x16xf32>
    %142 = vector.extract_strided_slice %132 {offsets = [32, 0], sizes = [32, 16], strides = [1, 1]} : vector<160x16xf32> to vector<32x16xf32>
    %143 = vector.extract_strided_slice %132 {offsets = [128, 0], sizes = [32, 16], strides = [1, 1]} : vector<160x16xf32> to vector<32x16xf32>
    %144 = arith.addf %142, %143 : vector<32x16xf32>
    %145 = arith.addf %144, %130 : vector<32x16xf32>
    %146 = arith.negf %145 : vector<32x16xf32>
    %147 = math.exp %146 : vector<32x16xf32>
    %cst_33 = arith.constant 1.000000e+00 : f32
    %148 = vector.broadcast %cst_33 : f32 to vector<32x16xf32>
    %149 = arith.addf %148, %147 : vector<32x16xf32>
    %150 = arith.divf %148, %149 : vector<32x16xf32>
    %151 = vector.extract_strided_slice %132 {offsets = [64, 0], sizes = [32, 16], strides = [1, 1]} : vector<160x16xf32> to vector<32x16xf32>
    %152 = arith.mulf %150, %128 : vector<32x16xf32>
    %cst_34 = arith.constant dense<0.000000e+00> : vector<32x16xf32>
    %153 = tpu.matmul %127, %152, %cst_34 {dimension_numbers = #tpu.dot_dimension_numbers<[1], [0], [0], [1], [0, 0, 1, 1], [], []>} : vector<32x32xf32>, vector<32x16xf32>, vector<32x16xf32> -> vector<32x16xf32>
    %154 = arith.addf %151, %153 : vector<32x16xf32>
    %155 = arith.addf %154, %131 : vector<32x16xf32>
    %156 = math.tanh %155 : vector<32x16xf32>
    %cst_35 = arith.constant 1.000000e+00 : f32
    %157 = vector.broadcast %cst_35 : f32 to vector<32x16xf32>
    %158 = arith.subf %157, %141 : vector<32x16xf32>
    %159 = arith.mulf %158, %128 : vector<32x16xf32>
    %160 = arith.mulf %141, %156 : vector<32x16xf32>
    %161 = arith.addf %159, %160 : vector<32x16xf32>
    %cst_36 = arith.constant dense<0.000000e+00> : vector<160x16xf32>
    %162 = tpu.matmul %126, %161, %cst_36 {dimension_numbers = #tpu.dot_dimension_numbers<[1], [0], [0], [1], [0, 0, 1, 1], [], []>} : vector<160x32xf32>, vector<32x16xf32>, vector<160x16xf32> -> vector<160x16xf32>
    %163 = vector.extract_strided_slice %162 {offsets = [0, 0], sizes = [32, 16], strides = [1, 1]} : vector<160x16xf32> to vector<32x16xf32>
    %164 = vector.extract_strided_slice %162 {offsets = [96, 0], sizes = [32, 16], strides = [1, 1]} : vector<160x16xf32> to vector<32x16xf32>
    %165 = arith.addf %163, %164 : vector<32x16xf32>
    %166 = arith.addf %165, %129 : vector<32x16xf32>
    %167 = arith.negf %166 : vector<32x16xf32>
    %168 = math.exp %167 : vector<32x16xf32>
    %cst_37 = arith.constant 1.000000e+00 : f32
    %169 = vector.broadcast %cst_37 : f32 to vector<32x16xf32>
    %170 = arith.addf %169, %168 : vector<32x16xf32>
    %171 = arith.divf %169, %170 : vector<32x16xf32>
    %172 = vector.extract_strided_slice %162 {offsets = [32, 0], sizes = [32, 16], strides = [1, 1]} : vector<160x16xf32> to vector<32x16xf32>
    %173 = vector.extract_strided_slice %162 {offsets = [128, 0], sizes = [32, 16], strides = [1, 1]} : vector<160x16xf32> to vector<32x16xf32>
    %174 = arith.addf %172, %173 : vector<32x16xf32>
    %175 = arith.addf %174, %130 : vector<32x16xf32>
    %176 = arith.negf %175 : vector<32x16xf32>
    %177 = math.exp %176 : vector<32x16xf32>
    %cst_38 = arith.constant 1.000000e+00 : f32
    %178 = vector.broadcast %cst_38 : f32 to vector<32x16xf32>
    %179 = arith.addf %178, %177 : vector<32x16xf32>
    %180 = arith.divf %178, %179 : vector<32x16xf32>
    %181 = vector.extract_strided_slice %162 {offsets = [64, 0], sizes = [32, 16], strides = [1, 1]} : vector<160x16xf32> to vector<32x16xf32>
    %182 = arith.mulf %180, %161 : vector<32x16xf32>
    %cst_39 = arith.constant dense<0.000000e+00> : vector<32x16xf32>
    %183 = tpu.matmul %127, %182, %cst_39 {dimension_numbers = #tpu.dot_dimension_numbers<[1], [0], [0], [1], [0, 0, 1, 1], [], []>} : vector<32x32xf32>, vector<32x16xf32>, vector<32x16xf32> -> vector<32x16xf32>
    %184 = arith.addf %181, %183 : vector<32x16xf32>
    %185 = arith.addf %184, %131 : vector<32x16xf32>
    %186 = math.tanh %185 : vector<32x16xf32>
    %cst_40 = arith.constant 1.000000e+00 : f32
    %187 = vector.broadcast %cst_40 : f32 to vector<32x16xf32>
    %188 = arith.subf %187, %171 : vector<32x16xf32>
    %189 = arith.mulf %188, %161 : vector<32x16xf32>
    %190 = arith.mulf %171, %186 : vector<32x16xf32>
    %191 = arith.addf %189, %190 : vector<32x16xf32>
    %cst_41 = arith.constant dense<0.000000e+00> : vector<160x16xf32>
    %192 = tpu.matmul %126, %191, %cst_41 {dimension_numbers = #tpu.dot_dimension_numbers<[1], [0], [0], [1], [0, 0, 1, 1], [], []>} : vector<160x32xf32>, vector<32x16xf32>, vector<160x16xf32> -> vector<160x16xf32>
    %193 = vector.extract_strided_slice %192 {offsets = [0, 0], sizes = [32, 16], strides = [1, 1]} : vector<160x16xf32> to vector<32x16xf32>
    %194 = vector.extract_strided_slice %192 {offsets = [96, 0], sizes = [32, 16], strides = [1, 1]} : vector<160x16xf32> to vector<32x16xf32>
    %195 = arith.addf %193, %194 : vector<32x16xf32>
    %196 = arith.addf %195, %129 : vector<32x16xf32>
    %197 = arith.negf %196 : vector<32x16xf32>
    %198 = math.exp %197 : vector<32x16xf32>
    %cst_42 = arith.constant 1.000000e+00 : f32
    %199 = vector.broadcast %cst_42 : f32 to vector<32x16xf32>
    %200 = arith.addf %199, %198 : vector<32x16xf32>
    %201 = arith.divf %199, %200 : vector<32x16xf32>
    %202 = vector.extract_strided_slice %192 {offsets = [32, 0], sizes = [32, 16], strides = [1, 1]} : vector<160x16xf32> to vector<32x16xf32>
    %203 = vector.extract_strided_slice %192 {offsets = [128, 0], sizes = [32, 16], strides = [1, 1]} : vector<160x16xf32> to vector<32x16xf32>
    %204 = arith.addf %202, %203 : vector<32x16xf32>
    %205 = arith.addf %204, %130 : vector<32x16xf32>
    %206 = arith.negf %205 : vector<32x16xf32>
    %207 = math.exp %206 : vector<32x16xf32>
    %cst_43 = arith.constant 1.000000e+00 : f32
    %208 = vector.broadcast %cst_43 : f32 to vector<32x16xf32>
    %209 = arith.addf %208, %207 : vector<32x16xf32>
    %210 = arith.divf %208, %209 : vector<32x16xf32>
    %211 = vector.extract_strided_slice %192 {offsets = [64, 0], sizes = [32, 16], strides = [1, 1]} : vector<160x16xf32> to vector<32x16xf32>
    %212 = arith.mulf %210, %191 : vector<32x16xf32>
    %cst_44 = arith.constant dense<0.000000e+00> : vector<32x16xf32>
    %213 = tpu.matmul %127, %212, %cst_44 {dimension_numbers = #tpu.dot_dimension_numbers<[1], [0], [0], [1], [0, 0, 1, 1], [], []>} : vector<32x32xf32>, vector<32x16xf32>, vector<32x16xf32> -> vector<32x16xf32>
    %214 = arith.addf %211, %213 : vector<32x16xf32>
    %215 = arith.addf %214, %131 : vector<32x16xf32>
    %216 = math.tanh %215 : vector<32x16xf32>
    %cst_45 = arith.constant 1.000000e+00 : f32
    %217 = vector.broadcast %cst_45 : f32 to vector<32x16xf32>
    %218 = arith.subf %217, %201 : vector<32x16xf32>
    %219 = arith.mulf %218, %191 : vector<32x16xf32>
    %220 = arith.mulf %201, %216 : vector<32x16xf32>
    %221 = arith.addf %219, %220 : vector<32x16xf32>
    %cst_46 = arith.constant dense<0.000000e+00> : vector<160x16xf32>
    %222 = tpu.matmul %126, %221, %cst_46 {dimension_numbers = #tpu.dot_dimension_numbers<[1], [0], [0], [1], [0, 0, 1, 1], [], []>} : vector<160x32xf32>, vector<32x16xf32>, vector<160x16xf32> -> vector<160x16xf32>
    %223 = vector.extract_strided_slice %222 {offsets = [0, 0], sizes = [32, 16], strides = [1, 1]} : vector<160x16xf32> to vector<32x16xf32>
    %224 = vector.extract_strided_slice %222 {offsets = [96, 0], sizes = [32, 16], strides = [1, 1]} : vector<160x16xf32> to vector<32x16xf32>
    %225 = arith.addf %223, %224 : vector<32x16xf32>
    %226 = arith.addf %225, %129 : vector<32x16xf32>
    %227 = arith.negf %226 : vector<32x16xf32>
    %228 = math.exp %227 : vector<32x16xf32>
    %cst_47 = arith.constant 1.000000e+00 : f32
    %229 = vector.broadcast %cst_47 : f32 to vector<32x16xf32>
    %230 = arith.addf %229, %228 : vector<32x16xf32>
    %231 = arith.divf %229, %230 : vector<32x16xf32>
    %232 = vector.extract_strided_slice %222 {offsets = [32, 0], sizes = [32, 16], strides = [1, 1]} : vector<160x16xf32> to vector<32x16xf32>
    %233 = vector.extract_strided_slice %222 {offsets = [128, 0], sizes = [32, 16], strides = [1, 1]} : vector<160x16xf32> to vector<32x16xf32>
    %234 = arith.addf %232, %233 : vector<32x16xf32>
    %235 = arith.addf %234, %130 : vector<32x16xf32>
    %236 = arith.negf %235 : vector<32x16xf32>
    %237 = math.exp %236 : vector<32x16xf32>
    %cst_48 = arith.constant 1.000000e+00 : f32
    %238 = vector.broadcast %cst_48 : f32 to vector<32x16xf32>
    %239 = arith.addf %238, %237 : vector<32x16xf32>
    %240 = arith.divf %238, %239 : vector<32x16xf32>
    %241 = vector.extract_strided_slice %222 {offsets = [64, 0], sizes = [32, 16], strides = [1, 1]} : vector<160x16xf32> to vector<32x16xf32>
    %242 = arith.mulf %240, %221 : vector<32x16xf32>
    %cst_49 = arith.constant dense<0.000000e+00> : vector<32x16xf32>
    %243 = tpu.matmul %127, %242, %cst_49 {dimension_numbers = #tpu.dot_dimension_numbers<[1], [0], [0], [1], [0, 0, 1, 1], [], []>} : vector<32x32xf32>, vector<32x16xf32>, vector<32x16xf32> -> vector<32x16xf32>
    %244 = arith.addf %241, %243 : vector<32x16xf32>
    %245 = arith.addf %244, %131 : vector<32x16xf32>
    %246 = math.tanh %245 : vector<32x16xf32>
    %cst_50 = arith.constant 1.000000e+00 : f32
    %247 = vector.broadcast %cst_50 : f32 to vector<32x16xf32>
    %248 = arith.subf %247, %231 : vector<32x16xf32>
    %249 = arith.mulf %248, %221 : vector<32x16xf32>
    %250 = arith.mulf %231, %246 : vector<32x16xf32>
    %251 = arith.addf %249, %250 : vector<32x16xf32>
    %c0_51 = arith.constant 0 : index
    %c0_52 = arith.constant 0 : index
    %252 = vector.load %arg0[%c0_51, %c0_52] : memref<32x32xf32, #tpu.memory_space<vmem>>, vector<32x32xf32>
    %253 = arith.truncf %252 : vector<32x32xf32> to vector<32x32xbf16>
    %c0_53 = arith.constant 0 : index
    %c0_54 = arith.constant 0 : index
    %254 = vector.load %arg1[%c0_53, %c0_54] : memref<32x16xf32, #tpu.memory_space<vmem>>, vector<32x16xf32>
    %255 = arith.truncf %254 : vector<32x16xf32> to vector<32x16xbf16>
    %256 = arith.truncf %125 : vector<16x32xf32> to vector<16x32xbf16>
    %cst_55 = arith.constant dense<0.000000e+00> : vector<32x16xf32>
    %257 = tpu.matmul %253, %255, %cst_55 {dimension_numbers = #tpu.dot_dimension_numbers<[1], [0], [0], [1], [0, 0, 1, 1], [], []>} : vector<32x32xbf16>, vector<32x16xbf16>, vector<32x16xf32> -> vector<32x16xf32>
    %258 = arith.truncf %257 : vector<32x16xf32> to vector<32x16xbf16>
    %cst_56 = arith.constant dense<0.000000e+00> : vector<32x32xf32>
    %259 = tpu.matmul %258, %256, %cst_56 {dimension_numbers = #tpu.dot_dimension_numbers<[1], [0], [0], [1], [0, 0, 1, 1], [], []>} : vector<32x16xbf16>, vector<16x32xbf16>, vector<32x32xf32> -> vector<32x32xf32>
    %cst_57 = arith.constant 0.000000e+00 : f32
    %260 = vector.broadcast %cst_57 : f32 to vector<32x32xf32>
    %261 = arith.cmpf oge, %259, %260 : vector<32x32xf32>
    %cst_58 = arith.constant 0.229166672 : f32
    %262 = vector.broadcast %cst_58 : f32 to vector<32x32xf32>
    %263 = arith.mulf %262, %259 : vector<32x32xf32>
    %264 = arith.select %261, %259, %263 : vector<32x32xi1>, vector<32x32xf32>
    %265 = arith.truncf %264 : vector<32x32xf32> to vector<32x32xbf16>
    %266 = arith.truncf %251 : vector<32x16xf32> to vector<32x16xbf16>
    %cst_59 = arith.constant dense<0.000000e+00> : vector<32x16xf32>
    %267 = tpu.matmul %265, %266, %cst_59 {dimension_numbers = #tpu.dot_dimension_numbers<[1], [0], [0], [1], [0, 0, 1, 1], [], []>} : vector<32x32xbf16>, vector<32x16xbf16>, vector<32x16xf32> -> vector<32x16xf32>
    %268 = arith.truncf %267 : vector<32x16xf32> to vector<32x16xbf16>
    %cst_60 = arith.constant dense<0.000000e+00> : vector<32x16xf32>
    %269 = tpu.matmul %253, %268, %cst_60 {dimension_numbers = #tpu.dot_dimension_numbers<[1], [0], [0], [1], [0, 0, 1, 1], [], []>} : vector<32x32xbf16>, vector<32x16xbf16>, vector<32x16xf32> -> vector<32x16xf32>
    %cst_61 = arith.constant 0.000000e+00 : f32
    %270 = vector.broadcast %cst_61 : f32 to vector<32x16xf32>
    %271 = arith.cmpf oge, %269, %270 : vector<32x16xf32>
    %cst_62 = arith.constant 0.229166672 : f32
    %272 = vector.broadcast %cst_62 : f32 to vector<32x16xf32>
    %273 = arith.mulf %272, %269 : vector<32x16xf32>
    %274 = arith.select %271, %269, %273 : vector<32x16xi1>, vector<32x16xf32>
    %c0_63 = arith.constant 0 : index
    %c0_64 = arith.constant 0 : index
    %275 = vector.load %arg3[%c0_63, %c0_64] : memref<32x16xf32, #tpu.memory_space<vmem>>, vector<32x16xf32>
    tpu.vector_store %arg3[%c0_63, %c0_64], %274 {strides = array<i32>} : memref<32x16xf32, #tpu.memory_space<vmem>>, vector<32x16xf32>,
    return
  }
}

</mosaic_0001>

<llo_original>
// kernel: tpu_custom_call.1
$region0: #{tpu_custom_call.1}
  #allocation0 [shape = 'u32[]', space=smem, size = 0x4, offset = 0x4, fixed_abs, tag = 'smem constant byte address 0x4 - core index']
  #allocation1 [shape = 'u32[144,128]{1,0:T(1,128)}', space=vmem, size = 0x12000, scoped, tag = 'internal scratch']
  %s0 = inlined_call_operand.vmem [shape: f32[32,32], index: 0, kind: input, shape index: {}]
  %s1 = inlined_call_operand.vmem [shape: f32[32,16], index: 1, kind: input, shape index: {}]
  %s2 = inlined_call_operand.hbm [shape: f32[480,128], index: 2, kind: input, shape index: {}]
  %s3 = inlined_call_operand.vmem [shape: f32[32,16], index: 3, kind: output, shape index: {}]
  %s4 = sld [smem:[#allocation0]]
  $region26: #{tpu_custom_call.1} parent=0
    _
  %s6 = ssub.s32 1, %s4
  %s7 = scalar_select 0, %s6, %s4
  $region1: #{tpu_custom_call.1} parent=0
    #allocation2 [shape = 'u8[245760]{0}', space=vmem, size = 0x3c000, scoped, tag = 'input window, operand 2, single buffered']
    #allocation3 [shape = 's32[1]{0}', space=sflag, size = 0x4, scoped, tag = 'scoped memory for tpu_custom_call.1']
    %8 = vsyncpa [#allocation3], 0
    // Predicated region
    $region2: #{tpu_custom_call.1} parent=1 // pred_check
      _
    $region3: #{tpu_custom_call.1} parent=1 // pred_check_branch
      %10 = sbr.rel (0) target = $region5
    $region4: #{tpu_custom_call.1} parent=1 // pred_region
      _
    $region5: #{tpu_custom_call.1} parent=1 // pred_fallthru
      _
    // Predicated region
    $region6: #{tpu_custom_call.1} parent=1 // pred_check
      _
    $region7: #{tpu_custom_call.1} parent=1 // pred_check_branch
      %12 = sbr.rel (0) target = $region9
    $region8: #{tpu_custom_call.1} parent=1 // pred_region
      _
    $region9: #{tpu_custom_call.1} parent=1 // pred_fallthru
      _
    // Predicated region
    $region10: #{tpu_custom_call.1} parent=1 // pred_check
      _
    $region11: #{tpu_custom_call.1} parent=1 // pred_check_branch
      %14 = sbr.rel (0) target = $region13
    $region12: #{tpu_custom_call.1} parent=1 // pred_region
      %s16 = ssub.s32 7680, 7680
      %17 = vsyncadd [#allocation3], %s16
      %s18 = sshll.u32 [#allocation2], 4
      %s19 = int_to_ptr.vmem [resolvable:$true] %s18
      %24 = dma.hbm_to_vmem [thread:$0]  %s2, 7680, %s19, [#allocation3], 128, 128, 8
    $region13: #{tpu_custom_call.1} parent=1 // pred_fallthru
      _
    // Predicated region
    $region14: #{tpu_custom_call.1} parent=1 // pred_check
      _
    $region15: #{tpu_custom_call.1} parent=1 // pred_check_branch
      %26 = sbr.rel (0) target = $region17
    $region16: #{tpu_custom_call.1} parent=1 // pred_region
      %27 = dma.done [#allocation3], 7680
    $region17: #{tpu_custom_call.1} parent=1 // pred_fallthru
      _
    %v29 = vld [vmem:[#allocation2] sm:$0xff]
    %v30 = vld [vmem:[#allocation2 + $0x8] sm:$0xff]
    %v31 = vld [vmem:[#allocation2 + $0x10] sm:$0xff]
    %v32 = vld [vmem:[#allocation2 + $0x18] sm:$0xff]
    %v33 = vld [vmem:[#allocation2 + $0x20] sm:$0xff]
    %v34 = vld [vmem:[#allocation2 + $0x28] sm:$0xff]
    %v35 = vld [vmem:[#allocation2 + $0x30] sm:$0xff]
    %v36 = vld [vmem:[#allocation2 + $0x38] sm:$0xff]
    %v37 = vld [vmem:[#allocation2 + $0x40] sm:$0xff]
    %v38 = vld [vmem:[#allocation2 + $0x48] sm:$0xff]
    %v39 = vld [vmem:[#allocation2 + $0x50] sm:$0xff]
    %v40 = vld [vmem:[#allocation2 + $0x58] sm:$0xff]
    %v41 = vld [vmem:[#allocation2 + $0x60] sm:$0xff]
    %v42 = vld [vmem:[#allocation2 + $0x68] sm:$0xff]
    %v43 = vld [vmem:[#allocation2 + $0x70] sm:$0xff]
    %v44 = vld [vmem:[#allocation2 + $0x78] sm:$0xff]
    %v45 = vld [vmem:[#allocation2 + $0x80] sm:$0xff]
    %v46 = vld [vmem:[#allocation2 + $0x88] sm:$0xff]
    %v47 = vld [vmem:[#allocation2 + $0x90] sm:$0xff]
    %v48 = vld [vmem:[#allocation2 + $0x98] sm:$0xff]
    %vm49 = vcmask 130048
    %v51 = vsel %vm49, %v29, 0
    %v54 = vsel %vm49, %v30, 0
    %v57 = vsel %vm49, %v31, 0
    %v60 = vsel %vm49, %v32, 0
    %v63 = vsel %vm49, %v33, 0
    %v66 = vsel %vm49, %v34, 0
    %v69 = vsel %vm49, %v35, 0
    %v72 = vsel %vm49, %v36, 0
    %v75 = vsel %vm49, %v37, 0
    %v78 = vsel %vm49, %v38, 0
    %80 = vmatprep.subr.mxu0 0.0
    %81 = vmatpush1.msra.mxu0 %v41
    %82 = vmatprep.subr.mxu0 0.0
    %83 = vmatpush1.msra.mxu0 %v42
    %84 = vmatprep.subr.mxu0 0.0
    %85 = vmatpush1.msra.mxu0 0.0
    %86 = vmatprep.subr.mxu0 0.0
    %87 = vmatpush1.msra.mxu0 0.0
    %88 = vmatprep.subr.mxu0 0.0
    %89 = vmatpush1.msra.mxu0 0.0
    %90 = vmatprep.subr.mxu0 0.0
    %91 = vmatpush1.msra.mxu0 0.0
    %92 = vmatprep.subr.mxu0 0.0
    %93 = vmatpush1.msra.mxu0 0.0
    %94 = vmatprep.subr.mxu0 0.0
    %95 = vmatpush1.msra.mxu0 0.0
    %96 = vmatprep.subr.mxu0 0.0
    %97 = vmatpush1.msra.mxu0 0.0
    %98 = vmatprep.subr.mxu0 0.0
    %99 = vmatpush1.msra.mxu0 0.0
    %100 = vmatprep.subr.mxu0 0.0
    %101 = vmatpush1.msra.mxu0 0.0
    %102 = vmatprep.subr.mxu0 0.0
    %103 = vmatpush1.msra.mxu0 0.0
    %104 = vmatprep.subr.mxu0 0.0
    %105 = vmatpush1.msra.mxu0 0.0
    %106 = vmatprep.subr.mxu0 0.0
    %107 = vmatpush1.msra.mxu0 0.0
    %108 = vmatprep.subr.mxu0 0.0
    %109 = vmatpush1.msra.mxu0 0.0
    %110 = vmatprep.subr.mxu0 0.0
    %111 = vmatpush1.msra.mxu0 0.0
    %112 = vmatprep.subr.mxu0 0.0
    %113 = vmatpush1.msra.mxu0 0.0
    %114 = vmatprep.subr.mxu0 0.0
    %115 = vmatpush1.msra.mxu0 0.0
    %116 = vmatprep.subr.mxu0 0.0
    %117 = vmatpush1.msra.mxu0 0.0
    %118 = vmatprep.subr.mxu0 0.0
    %119 = vmatpush1.msra.mxu0 0.0
    %120 = vmatprep.subr.mxu0 0.0
    %121 = vmatpush1.msra.mxu0 0.0
    %122 = vmatprep.subr.mxu0 0.0
    %123 = vmatpush1.msra.mxu0 0.0
    %124 = vmatprep.subr.mxu0 0.0
    %125 = vmatpush1.msra.mxu0 0.0
    %126 = vmatprep.subr.mxu0 0.0
    %127 = vmatpush1.msra.mxu0 0.0
    %128 = vmatprep.subr.mxu0 0.0
    %129 = vmatpush1.msra.mxu0 0.0
    %130 = vmatprep.subr.mxu0 0.0
    %131 = vmatpush1.msra.mxu0 0.0
    %132 = vmatprep.subr.mxu0 0.0
    %133 = vmatpush1.msra.mxu0 0.0
    %134 = vmatprep.subr.mxu0 0.0
    %135 = vmatpush1.msra.mxu0 0.0
    %136 = vmatprep.subr.mxu0 0.0
    %137 = vmatpush1.msra.mxu0 0.0
    %138 = vmatprep.subr.mxu0 0.0
    %139 = vmatpush1.msra.mxu0 0.0
    %140 = vmatprep.subr.mxu0 0.0
    %141 = vmatpush1.msra.mxu0 0.0
    %142 = vmatprep.subr.mxu0 0.0
    %143 = vmatpush1.msra.mxu0 0.0
    %144 = vmatprep.mubr.f32.mxu0 0.0
    %145 = vmatmul.mubr.f32.gmra.mrb[0].mxu0 %v51
    %v146 = vpop.f32.mrb[0].mxu0
    %v147 = vadd.f32 0.0, %v146
    %v148 = vpop.f32.mrb[0].mxu0
    %149 = vmatprep.mubr.f32.mxu0 0.0
    %150 = vmatmul.mubr.f32.gmra.mrb[0].mxu0 %v54
    %v151 = vpop.f32.mrb[0].mxu0
    %v152 = vadd.f32 0.0, %v151
    %v153 = vpop.f32.mrb[0].mxu0
    %154 = vmatprep.mubr.f32.mxu0 0.0
    %155 = vmatmul.mubr.f32.gmra.mrb[0].mxu0 %v57
    %v156 = vpop.f32.mrb[0].mxu0
    %v157 = vadd.f32 0.0, %v156
    %v158 = vpop.f32.mrb[0].mxu0
    %159 = vmatprep.mubr.f32.mxu0 0.0
    %160 = vmatmul.mubr.f32.gmra.mrb[0].mxu0 %v60
    %v161 = vpop.f32.mrb[0].mxu0
    %v162 = vadd.f32 0.0, %v161
    %v163 = vpop.f32.mrb[0].mxu0
    %164 = vmatprep.mubr.f32.mxu0 0.0
    %165 = vmatmul.mubr.f32.gmra.mrb[0].mxu0 %v63
    %v166 = vpop.f32.mrb[0].mxu0
    %v167 = vadd.f32 0.0, %v166
    %v168 = vpop.f32.mrb[0].mxu0
    %169 = vmatprep.mubr.f32.mxu0 0.0
    %170 = vmatmul.mubr.f32.gmra.mrb[0].mxu0 %v66
    %v171 = vpop.f32.mrb[0].mxu0
    %v172 = vadd.f32 0.0, %v171
    %v173 = vpop.f32.mrb[0].mxu0
    %174 = vmatprep.mubr.f32.mxu0 0.0
    %175 = vmatmul.mubr.f32.gmra.mrb[0].mxu0 %v69
    %v176 = vpop.f32.mrb[0].mxu0
    %v177 = vadd.f32 0.0, %v176
    %v178 = vpop.f32.mrb[0].mxu0
    %179 = vmatprep.mubr.f32.mxu0 0.0
    %180 = vmatmul.mubr.f32.gmra.mrb[0].mxu0 %v72
    %v181 = vpop.f32.mrb[0].mxu0
    %v182 = vadd.f32 0.0, %v181
    %v183 = vpop.f32.mrb[0].mxu0
    %184 = vmatprep.mubr.f32.mxu0 0.0
    %185 = vmatmul.mubr.f32.gmra.mrb[0].mxu0 %v75
    %v186 = vpop.f32.mrb[0].mxu0
    %v187 = vadd.f32 0.0, %v186
    %v188 = vpop.f32.mrb[0].mxu0
    %189 = vmatprep.mubr.f32.mxu0 0.0
    %190 = vmatmul.mubr.f32.gmra.mrb[0].mxu0 %v78
    %v191 = vpop.f32.mrb[0].mxu0
    %v192 = vadd.f32 0.0, %v191
    %v193 = vpop.f32.mrb[0].mxu0
    %194 = vdwg.mxu0
    %v195 = vadd.f32 %v147, %v177
    %v196 = vadd.f32 %v152, %v182
    %v197 = vadd.f32 %v195, %v43
    %v198 = vadd.f32 %v196, %v44
    %v199 = vxor.u32 %v197, 2147483648
    %v200 = vxor.u32 %v198, 2147483648
    %v201 = vmul.f32 %v199, 1.442695
    %v202 = vpow.pop %v201
    %v203 = vmul.f32 %v200, 1.442695
    %v204 = vpow.pop %v203
    %v205 = vadd.f32 %v202, 1.0
    %v206 = vadd.f32 %v204, 1.0
    %v207 = vrcp.pop %v205
    %v208 = vmul.f32 1.0, %v207
    %v209 = vrcp.pop %v206
    %v210 = vmul.f32 1.0, %v209
    %v211 = vadd.f32 %v157, %v187
    %v212 = vadd.f32 %v162, %v192
    %v213 = vadd.f32 %v211, %v45
    %v214 = vadd.f32 %v212, %v46
    %v215 = vxor.u32 %v213, 2147483648
    %v216 = vxor.u32 %v214, 2147483648
    %v217 = vmul.f32 %v215, 1.442695
    %v218 = vpow.pop %v217
    %v219 = vmul.f32 %v216, 1.442695
    %v220 = vpow.pop %v219
    %v221 = vadd.f32 %v218, 1.0
    %v222 = vadd.f32 %v220, 1.0
    %v223 = vrcp.pop %v221
    %v224 = vmul.f32 1.0, %v223
    %v225 = vrcp.pop %v222
    %v226 = vmul.f32 1.0, %v225
    %v227 = vmul.f32 %v224, %v41
    %v228 = vmul.f32 %v226, %v42
    %v230 = vsel %vm49, %v39, 0
    %v233 = vsel %vm49, %v40, 0
    %235 = vmatprep.subr.mxu0 0.0
    %236 = vmatpush1.msra.mxu0 %v227
    %237 = vmatprep.subr.mxu0 0.0
    %238 = vmatpush1.msra.mxu0 %v228
    %239 = vmatprep.subr.mxu0 0.0
    %240 = vmatpush1.msra.mxu0 0.0
    %241 = vmatprep.subr.mxu0 0.0
    %242 = vmatpush1.msra.mxu0 0.0
    %243 = vmatprep.subr.mxu0 0.0
    %244 = vmatpush1.msra.mxu0 0.0
    %245 = vmatprep.subr.mxu0 0.0
    %246 = vmatpush1.msra.mxu0 0.0
    %247 = vmatprep.subr.mxu0 0.0
    %248 = vmatpush1.msra.mxu0 0.0
    %249 = vmatprep.subr.mxu0 0.0
    %250 = vmatpush1.msra.mxu0 0.0
    %251 = vmatprep.subr.mxu0 0.0
    %252 = vmatpush1.msra.mxu0 0.0
    %253 = vmatprep.subr.mxu0 0.0
    %254 = vmatpush1.msra.mxu0 0.0
    %255 = vmatprep.subr.mxu0 0.0
    %256 = vmatpush1.msra.mxu0 0.0
    %257 = vmatprep.subr.mxu0 0.0
    %258 = vmatpush1.msra.mxu0 0.0
    %259 = vmatprep.subr.mxu0 0.0
    %260 = vmatpush1.msra.mxu0 0.0
    %261 = vmatprep.subr.mxu0 0.0
    %262 = vmatpush1.msra.mxu0 0.0
    %263 = vmatprep.subr.mxu0 0.0
    %264 = vmatpush1.msra.mxu0 0.0
    %265 = vmatprep.subr.mxu0 0.0
    %266 = vmatpush1.msra.mxu0 0.0
    %267 = vmatprep.subr.mxu0 0.0
    %268 = vmatpush1.msra.mxu0 0.0
    %269 = vmatprep.subr.mxu0 0.0
    %270 = vmatpush1.msra.mxu0 0.0
    %271 = vmatprep.subr.mxu0 0.0
    %272 = vmatpush1.msra.mxu0 0.0
    %273 = vmatprep.subr.mxu0 0.0
    %274 = vmatpush1.msra.mxu0 0.0
    %275 = vmatprep.subr.mxu0 0.0
    %276 = vmatpush1.msra.mxu0 0.0
    %277 = vmatprep.subr.mxu0 0.0
    %278 = vmatpush1.msra.mxu0 0.0
    %279 = vmatprep.subr.mxu0 0.0
    %280 = vmatpush1.msra.mxu0 0.0
    %281 = vmatprep.subr.mxu0 0.0
    %282 = vmatpush1.msra.mxu0 0.0
    %283 = vmatprep.subr.mxu0 0.0
    %284 = vmatpush1.msra.mxu0 0.0
    %285 = vmatprep.subr.mxu0 0.0
    %286 = vmatpush1.msra.mxu0 0.0
    %287 = vmatprep.subr.mxu0 0.0
    %288 = vmatpush1.msra.mxu0 0.0
    %289 = vmatprep.subr.mxu0 0.0
    %290 = vmatpush1.msra.mxu0 0.0
    %291 = vmatprep.subr.mxu0 0.0
    %292 = vmatpush1.msra.mxu0 0.0
    %293 = vmatprep.subr.mxu0 0.0
    %294 = vmatpush1.msra.mxu0 0.0
    %295 = vmatprep.subr.mxu0 0.0
    %296 = vmatpush1.msra.mxu0 0.0
    %297 = vmatprep.subr.mxu0 0.0
    %298 = vmatpush1.msra.mxu0 0.0
    %299 = vmatprep.mubr.f32.mxu0 0.0
    %300 = vmatmul.mubr.f32.gmra.mrb[0].mxu0 %v230
    %v301 = vpop.f32.mrb[0].mxu0
    %v302 = vadd.f32 0.0, %v301
    %v303 = vpop.f32.mrb[0].mxu0
    %304 = vmatprep.mubr.f32.mxu0 0.0
    %305 = vmatmul.mubr.f32.gmra.mrb[0].mxu0 %v233
    %v306 = vpop.f32.mrb[0].mxu0
    %v307 = vadd.f32 0.0, %v306
    %v308 = vpop.f32.mrb[0].mxu0
    %309 = vdwg.mxu0
    %v310 = vadd.f32 %v167, %v302
    %v311 = vadd.f32 %v172, %v307
    %v312 = vadd.f32 %v310, %v47
    %v313 = vadd.f32 %v311, %v48
    %v314 = vtanh.pop %v312
    %v315 = vtanh.pop %v313
    %v316 = vsub.f32 1.0, %v208
    %v317 = vsub.f32 1.0, %v210
    %v318 = vmul.f32 %v316, %v41
    %v319 = vmul.f32 %v317, %v42
    %v320 = vmul.f32 %v208, %v314
    %v321 = vmul.f32 %v210, %v315
    %v322 = vadd.f32 %v318, %v320
    %v323 = vadd.f32 %v319, %v321
    %324 = vmatprep.subr.mxu0 0.0
    %325 = vmatpush1.msra.mxu0 %v322
    %326 = vmatprep.subr.mxu0 0.0
    %327 = vmatpush1.msra.mxu0 %v323
    %328 = vmatprep.subr.mxu0 0.0
    %329 = vmatpush1.msra.mxu0 0.0
    %330 = vmatprep.subr.mxu0 0.0
    %331 = vmatpush1.msra.mxu0 0.0
    %332 = vmatprep.subr.mxu0 0.0
    %333 = vmatpush1.msra.mxu0 0.0
    %334 = vmatprep.subr.mxu0 0.0
    %335 = vmatpush1.msra.mxu0 0.0
    %336 = vmatprep.subr.mxu0 0.0
    %337 = vmatpush1.msra.mxu0 0.0
    %338 = vmatprep.subr.mxu0 0.0
    %339 = vmatpush1.msra.mxu0 0.0
    %340 = vmatprep.subr.mxu0 0.0
    %341 = vmatpush1.msra.mxu0 0.0
    %342 = vmatprep.subr.mxu0 0.0
    %343 = vmatpush1.msra.mxu0 0.0
    %344 = vmatprep.subr.mxu0 0.0
    %345 = vmatpush1.msra.mxu0 0.0
    %346 = vmatprep.subr.mxu0 0.0
    %347 = vmatpush1.msra.mxu0 0.0
    %348 = vmatprep.subr.mxu0 0.0
    %349 = vmatpush1.msra.mxu0 0.0
    %350 = vmatprep.subr.mxu0 0.0
    %351 = vmatpush1.msra.mxu0 0.0
    %352 = vmatprep.subr.mxu0 0.0
    %353 = vmatpush1.msra.mxu0 0.0
    %354 = vmatprep.subr.mxu0 0.0
    %355 = vmatpush1.msra.mxu0 0.0
    %356 = vmatprep.subr.mxu0 0.0
    %357 = vmatpush1.msra.mxu0 0.0
    %358 = vmatprep.subr.mxu0 0.0
    %359 = vmatpush1.msra.mxu0 0.0
    %360 = vmatprep.subr.mxu0 0.0
    %361 = vmatpush1.msra.mxu0 0.0
    %362 = vmatprep.subr.mxu0 0.0
    %363 = vmatpush1.msra.mxu0 0.0
    %364 = vmatprep.subr.mxu0 0.0
    %365 = vmatpush1.msra.mxu0 0.0
    %366 = vmatprep.subr.mxu0 0.0
    %367 = vmatpush1.msra.mxu0 0.0
    %368 = vmatprep.subr.mxu0 0.0
    %369 = vmatpush1.msra.mxu0 0.0
    %370 = vmatprep.subr.mxu0 0.0
    %371 = vmatpush1.msra.mxu0 0.0
    %372 = vmatprep.subr.mxu0 0.0
    %373 = vmatpush1.msra.mxu0 0.0
    %374 = vmatprep.subr.mxu0 0.0
    %375 = vmatpush1.msra.mxu0 0.0
    %376 = vmatprep.subr.mxu0 0.0
    %377 = vmatpush1.msra.mxu0 0.0
    %378 = vmatprep.subr.mxu0 0.0
    %379 = vmatpush1.msra.mxu0 0.0
    %380 = vmatprep.subr.mxu0 0.0
    %381 = vmatpush1.msra.mxu0 0.0
    %382 = vmatprep.subr.mxu0 0.0
    %383 = vmatpush1.msra.mxu0 0.0
    %384 = vmatprep.subr.mxu0 0.0
    %385 = vmatpush1.msra.mxu0 0.0
    %386 = vmatprep.subr.mxu0 0.0
    %387 = vmatpush1.msra.mxu0 0.0
    %388 = vmatprep.mubr.f32.mxu0 0.0
    %389 = vmatmul.mubr.f32.gmra.mrb[0].mxu0 %v51
    %v390 = vpop.f32.mrb[0].mxu0
    %v391 = vadd.f32 0.0, %v390
    %v392 = vpop.f32.mrb[0].mxu0
    %393 = vmatprep.mubr.f32.mxu0 0.0
    %394 = vmatmul.mubr.f32.gmra.mrb[0].mxu0 %v54
    %v395 = vpop.f32.mrb[0].mxu0
    %v396 = vadd.f32 0.0, %v395
    %v397 = vpop.f32.mrb[0].mxu0
    %398 = vmatprep.mubr.f32.mxu0 0.0
    %399 = vmatmul.mubr.f32.gmra.mrb[0].mxu0 %v57
    %v400 = vpop.f32.mrb[0].mxu0
    %v401 = vadd.f32 0.0, %v400
    %v402 = vpop.f32.mrb[0].mxu0
    %403 = vmatprep.mubr.f32.mxu0 0.0
    %404 = vmatmul.mubr.f32.gmra.mrb[0].mxu0 %v60
    %v405 = vpop.f32.mrb[0].mxu0
    %v406 = vadd.f32 0.0, %v405
    %v407 = vpop.f32.mrb[0].mxu0
    %408 = vmatprep.mubr.f32.mxu0 0.0
    %409 = vmatmul.mubr.f32.gmra.mrb[0].mxu0 %v63
    %v410 = vpop.f32.mrb[0].mxu0
    %v411 = vadd.f32 0.0, %v410
    %v412 = vpop.f32.mrb[0].mxu0
    %413 = vmatprep.mubr.f32.mxu0 0.0
    %414 = vmatmul.mubr.f32.gmra.mrb[0].mxu0 %v66
    %v415 = vpop.f32.mrb[0].mxu0
    %v416 = vadd.f32 0.0, %v415
    %v417 = vpop.f32.mrb[0].mxu0
    %418 = vmatprep.mubr.f32.mxu0 0.0
    %419 = vmatmul.mubr.f32.gmra.mrb[0].mxu0 %v69
    %v420 = vpop.f32.mrb[0].mxu0
    %v421 = vadd.f32 0.0, %v420
    %v422 = vpop.f32.mrb[0].mxu0
    %423 = vmatprep.mubr.f32.mxu0 0.0
    %424 = vmatmul.mubr.f32.gmra.mrb[0].mxu0 %v72
    %v425 = vpop.f32.mrb[0].mxu0
    %v426 = vadd.f32 0.0, %v425
    %v427 = vpop.f32.mrb[0].mxu0
    %428 = vmatprep.mubr.f32.mxu0 0.0
    %429 = vmatmul.mubr.f32.gmra.mrb[0].mxu0 %v75
    %v430 = vpop.f32.mrb[0].mxu0
    %v431 = vadd.f32 0.0, %v430
    %v432 = vpop.f32.mrb[0].mxu0
    %433 = vmatprep.mubr.f32.mxu0 0.0
    %434 = vmatmul.mubr.f32.gmra.mrb[0].mxu0 %v78
    %v435 = vpop.f32.mrb[0].mxu0
    %v436 = vadd.f32 0.0, %v435
    %v437 = vpop.f32.mrb[0].mxu0
    %438 = vdwg.mxu0
    %v439 = vadd.f32 %v391, %v421
    %v440 = vadd.f32 %v396, %v426
    %v441 = vadd.f32 %v439, %v43
    %v442 = vadd.f32 %v440, %v44
    %v443 = vxor.u32 %v441, 2147483648
    %v444 = vxor.u32 %v442, 2147483648
    %v445 = vmul.f32 %v443, 1.442695
    %v446 = vpow.pop %v445
    %v447 = vmul.f32 %v444, 1.442695
    %v448 = vpow.pop %v447
    %v449 = vadd.f32 %v446, 1.0
    %v450 = vadd.f32 %v448, 1.0
    %v451 = vrcp.pop %v449
    %v452 = vmul.f32 1.0, %v451
    %v453 = vrcp.pop %v450
    %v454 = vmul.f32 1.0, %v453
    %v455 = vadd.f32 %v401, %v431
    %v456 = vadd.f32 %v406, %v436
    %v457 = vadd.f32 %v455, %v45
    %v458 = vadd.f32 %v456, %v46
    %v459 = vxor.u32 %v457, 2147483648
    %v460 = vxor.u32 %v458, 2147483648
    %v461 = vmul.f32 %v459, 1.442695
    %v462 = vpow.pop %v461
    %v463 = vmul.f32 %v460, 1.442695
    %v464 = vpow.pop %v463
    %v465 = vadd.f32 %v462, 1.0
    %v466 = vadd.f32 %v464, 1.0
    %v467 = vrcp.pop %v465
    %v468 = vmul.f32 1.0, %v467
    %v469 = vrcp.pop %v466
    %v470 = vmul.f32 1.0, %v469
    %v471 = vmul.f32 %v468, %v322
    %v472 = vmul.f32 %v470, %v323
    %473 = vmatprep.subr.mxu0 0.0
    %474 = vmatpush1.msra.mxu0 %v471
    %475 = vmatprep.subr.mxu0 0.0
    %476 = vmatpush1.msra.mxu0 %v472
    %477 = vmatprep.subr.mxu0 0.0
    %478 = vmatpush1.msra.mxu0 0.0
    %479 = vmatprep.subr.mxu0 0.0
    %480 = vmatpush1.msra.mxu0 0.0
    %481 = vmatprep.subr.mxu0 0.0
    %482 = vmatpush1.msra.mxu0 0.0
    %483 = vmatprep.subr.mxu0 0.0
    %484 = vmatpush1.msra.mxu0 0.0
    %485 = vmatprep.subr.mxu0 0.0
    %486 = vmatpush1.msra.mxu0 0.0
    %487 = vmatprep.subr.mxu0 0.0
    %488 = vmatpush1.msra.mxu0 0.0
    %489 = vmatprep.subr.mxu0 0.0
    %490 = vmatpush1.msra.mxu0 0.0
    %491 = vmatprep.subr.mxu0 0.0
    %492 = vmatpush1.msra.mxu0 0.0
    %493 = vmatprep.subr.mxu0 0.0
    %494 = vmatpush1.msra.mxu0 0.0
    %495 = vmatprep.subr.mxu0 0.0
    %496 = vmatpush1.msra.mxu0 0.0
    %497 = vmatprep.subr.mxu0 0.0
    %498 = vmatpush1.msra.mxu0 0.0
    %499 = vmatprep.subr.mxu0 0.0
    %500 = vmatpush1.msra.mxu0 0.0
    %501 = vmatprep.subr.mxu0 0.0
    %502 = vmatpush1.msra.mxu0 0.0
    %503 = vmatprep.subr.mxu0 0.0
    %504 = vmatpush1.msra.mxu0 0.0
    %505 = vmatprep.subr.mxu0 0.0
    %506 = vmatpush1.msra.mxu0 0.0
    %507 = vmatprep.subr.mxu0 0.0
    %508 = vmatpush1.msra.mxu0 0.0
    %509 = vmatprep.subr.mxu0 0.0
    %510 = vmatpush1.msra.mxu0 0.0
    %511 = vmatprep.subr.mxu0 0.0
    %512 = vmatpush1.msra.mxu0 0.0
    %513 = vmatprep.subr.mxu0 0.0
    %514 = vmatpush1.msra.mxu0 0.0
    %515 = vmatprep.subr.mxu0 0.0
    %516 = vmatpush1.msra.mxu0 0.0
    %517 = vmatprep.subr.mxu0 0.0
    %518 = vmatpush1.msra.mxu0 0.0
    %519 = vmatprep.subr.mxu0 0.0
    %520 = vmatpush1.msra.mxu0 0.0
    %521 = vmatprep.subr.mxu0 0.0
    %522 = vmatpush1.msra.mxu0 0.0
    %523 = vmatprep.subr.mxu0 0.0
    %524 = vmatpush1.msra.mxu0 0.0
    %525 = vmatprep.subr.mxu0 0.0
    %526 = vmatpush1.msra.mxu0 0.0
    %527 = vmatprep.subr.mxu0 0.0
    %528 = vmatpush1.msra.mxu0 0.0
    %529 = vmatprep.subr.mxu0 0.0
    %530 = vmatpush1.msra.mxu0 0.0
    %531 = vmatprep.subr.mxu0 0.0
    %532 = vmatpush1.msra.mxu0 0.0
    %533 = vmatprep.subr.mxu0 0.0
    %534 = vmatpush1.msra.mxu0 0.0
    %535 = vmatprep.subr.mxu0 0.0
    %536 = vmatpush1.msra.mxu0 0.0
    %537 = vmatprep.mubr.f32.mxu0 0.0
    %538 = vmatmul.mubr.f32.gmra.mrb[0].mxu0 %v230
    %v539 = vpop.f32.mrb[0].mxu0
    %v540 = vadd.f32 0.0, %v539
    %v541 = vpop.f32.mrb[0].mxu0
    %542 = vmatprep.mubr.f32.mxu0 0.0
    %543 = vmatmul.mubr.f32.gmra.mrb[0].mxu0 %v233
    %v544 = vpop.f32.mrb[0].mxu0
    %v545 = vadd.f32 0.0, %v544
    %v546 = vpop.f32.mrb[0].mxu0
    %547 = vdwg.mxu0
    %v548 = vadd.f32 %v411, %v540
    %v549 = vadd.f32 %v416, %v545
    %v550 = vadd.f32 %v548, %v47
    %v551 = vadd.f32 %v549, %v48
    %v552 = vtanh.pop %v550
    %v553 = vtanh.pop %v551
    %v554 = vsub.f32 1.0, %v452
    %v555 = vsub.f32 1.0, %v454
    %v556 = vmul.f32 %v554, %v322
    %v557 = vmul.f32 %v555, %v323
    %v558 = vmul.f32 %v452, %v552
    %v559 = vmul.f32 %v454, %v553
    %v560 = vadd.f32 %v556, %v558
    %v561 = vadd.f32 %v557, %v559
    %562 = vmatprep.subr.mxu0 0.0
    %563 = vmatpush1.msra.mxu0 %v560
    %564 = vmatprep.subr.mxu0 0.0
    %565 = vmatpush1.msra.mxu0 %v561
    %566 = vmatprep.subr.mxu0 0.0
    %567 = vmatpush1.msra.mxu0 0.0
    %568 = vmatprep.subr.mxu0 0.0
    %569 = vmatpush1.msra.mxu0 0.0
    %570 = vmatprep.subr.mxu0 0.0
    %571 = vmatpush1.msra.mxu0 0.0
    %572 = vmatprep.subr.mxu0 0.0
    %573 = vmatpush1.msra.mxu0 0.0
    %574 = vmatprep.subr.mxu0 0.0
    %575 = vmatpush1.msra.mxu0 0.0
    %576 = vmatprep.subr.mxu0 0.0
    %577 = vmatpush1.msra.mxu0 0.0
    %578 = vmatprep.subr.mxu0 0.0
    %579 = vmatpush1.msra.mxu0 0.0
    %580 = vmatprep.subr.mxu0 0.0
    %581 = vmatpush1.msra.mxu0 0.0
    %582 = vmatprep.subr.mxu0 0.0
    %583 = vmatpush1.msra.mxu0 0.0
    %584 = vmatprep.subr.mxu0 0.0
    %585 = vmatpush1.msra.mxu0 0.0
    %586 = vmatprep.subr.mxu0 0.0
    %587 = vmatpush1.msra.mxu0 0.0
    %588 = vmatprep.subr.mxu0 0.0
    %589 = vmatpush1.msra.mxu0 0.0
    %590 = vmatprep.subr.mxu0 0.0
    %591 = vmatpush1.msra.mxu0 0.0
    %592 = vmatprep.subr.mxu0 0.0
    %593 = vmatpush1.msra.mxu0 0.0
    %594 = vmatprep.subr.mxu0 0.0
    %595 = vmatpush1.msra.mxu0 0.0
    %596 = vmatprep.subr.mxu0 0.0
    %597 = vmatpush1.msra.mxu0 0.0
    %598 = vmatprep.subr.mxu0 0.0
    %599 = vmatpush1.msra.mxu0 0.0
    %600 = vmatprep.subr.mxu0 0.0
    %601 = vmatpush1.msra.mxu0 0.0
    %602 = vmatprep.subr.mxu0 0.0
    %603 = vmatpush1.msra.mxu0 0.0
    %604 = vmatprep.subr.mxu0 0.0
    %605 = vmatpush1.msra.mxu0 0.0
    %606 = vmatprep.subr.mxu0 0.0
    %607 = vmatpush1.msra.mxu0 0.0
    %608 = vmatprep.subr.mxu0 0.0
    %609 = vmatpush1.msra.mxu0 0.0
    %610 = vmatprep.subr.mxu0 0.0
    %611 = vmatpush1.msra.mxu0 0.0
    %612 = vmatprep.subr.mxu0 0.0
    %613 = vmatpush1.msra.mxu0 0.0
    %614 = vmatprep.subr.mxu0 0.0
    %615 = vmatpush1.msra.mxu0 0.0
    %616 = vmatprep.subr.mxu0 0.0
    %617 = vmatpush1.msra.mxu0 0.0
    %618 = vmatprep.subr.mxu0 0.0
    %619 = vmatpush1.msra.mxu0 0.0
    %620 = vmatprep.subr.mxu0 0.0
    %621 = vmatpush1.msra.mxu0 0.0
    %622 = vmatprep.subr.mxu0 0.0
    %623 = vmatpush1.msra.mxu0 0.0
    %624 = vmatprep.subr.mxu0 0.0
    %625 = vmatpush1.msra.mxu0 0.0
    %626 = vmatprep.mubr.f32.mxu0 0.0
    %627 = vmatmul.mubr.f32.gmra.mrb[0].mxu0 %v51
    %v628 = vpop.f32.mrb[0].mxu0
    %v629 = vadd.f32 0.0, %v628
    %v630 = vpop.f32.mrb[0].mxu0
    %631 = vmatprep.mubr.f32.mxu0 0.0
    %632 = vmatmul.mubr.f32.gmra.mrb[0].mxu0 %v54
    %v633 = vpop.f32.mrb[0].mxu0
    %v634 = vadd.f32 0.0, %v633
    %v635 = vpop.f32.mrb[0].mxu0
    %636 = vmatprep.mubr.f32.mxu0 0.0
    %637 = vmatmul.mubr.f32.gmra.mrb[0].mxu0 %v57
    %v638 = vpop.f32.mrb[0].mxu0
    %v639 = vadd.f32 0.0, %v638
    %v640 = vpop.f32.mrb[0].mxu0
    %641 = vmatprep.mubr.f32.mxu0 0.0
    %642 = vmatmul.mubr.f32.gmra.mrb[0].mxu0 %v60
    %v643 = vpop.f32.mrb[0].mxu0
    %v644 = vadd.f32 0.0, %v643
    %v645 = vpop.f32.mrb[0].mxu0
    %646 = vmatprep.mubr.f32.mxu0 0.0
    %647 = vmatmul.mubr.f32.gmra.mrb[0].mxu0 %v63
    %v648 = vpop.f32.mrb[0].mxu0
    %v649 = vadd.f32 0.0, %v648
    %v650 = vpop.f32.mrb[0].mxu0
    %651 = vmatprep.mubr.f32.mxu0 0.0
    %652 = vmatmul.mubr.f32.gmra.mrb[0].mxu0 %v66
    %v653 = vpop.f32.mrb[0].mxu0
    %v654 = vadd.f32 0.0, %v653
    %v655 = vpop.f32.mrb[0].mxu0
    %656 = vmatprep.mubr.f32.mxu0 0.0
    %657 = vmatmul.mubr.f32.gmra.mrb[0].mxu0 %v69
    %v658 = vpop.f32.mrb[0].mxu0
    %v659 = vadd.f32 0.0, %v658
    %v660 = vpop.f32.mrb[0].mxu0
    %661 = vmatprep.mubr.f32.mxu0 0.0
    %662 = vmatmul.mubr.f32.gmra.mrb[0].mxu0 %v72
    %v663 = vpop.f32.mrb[0].mxu0
    %v664 = vadd.f32 0.0, %v663
    %v665 = vpop.f32.mrb[0].mxu0
    %666 = vmatprep.mubr.f32.mxu0 0.0
    %667 = vmatmul.mubr.f32.gmra.mrb[0].mxu0 %v75
    %v668 = vpop.f32.mrb[0].mxu0
    %v669 = vadd.f32 0.0, %v668
    %v670 = vpop.f32.mrb[0].mxu0
    %671 = vmatprep.mubr.f32.mxu0 0.0
    %672 = vmatmul.mubr.f32.gmra.mrb[0].mxu0 %v78
    %v673 = vpop.f32.mrb[0].mxu0
    %v674 = vadd.f32 0.0, %v673
    %v675 = vpop.f32.mrb[0].mxu0
    %676 = vdwg.mxu0
    %v677 = vadd.f32 %v629, %v659
    %v678 = vadd.f32 %v634, %v664
    %v679 = vadd.f32 %v677, %v43
    %v680 = vadd.f32 %v678, %v44
    %v681 = vxor.u32 %v679, 2147483648
    %v682 = vxor.u32 %v680, 2147483648
    %v683 = vmul.f32 %v681, 1.442695
    %v684 = vpow.pop %v683
    %v685 = vmul.f32 %v682, 1.442695
    %v686 = vpow.pop %v685
    %v687 = vadd.f32 %v684, 1.0
    %v688 = vadd.f32 %v686, 1.0
    %v689 = vrcp.pop %v687
    %v690 = vmul.f32 1.0, %v689
    %v691 = vrcp.pop %v688
    %v692 = vmul.f32 1.0, %v691
    %v693 = vadd.f32 %v639, %v669
    %v694 = vadd.f32 %v644, %v674
    %v695 = vadd.f32 %v693, %v45
    %v696 = vadd.f32 %v694, %v46
    %v697 = vxor.u32 %v695, 2147483648
    %v698 = vxor.u32 %v696, 2147483648
    %v699 = vmul.f32 %v697, 1.442695
    %v700 = vpow.pop %v699
    %v701 = vmul.f32 %v698, 1.442695
    %v702 = vpow.pop %v701
    %v703 = vadd.f32 %v700, 1.0
    %v704 = vadd.f32 %v702, 1.0
    %v705 = vrcp.pop %v703
    %v706 = vmul.f32 1.0, %v705
    %v707 = vrcp.pop %v704
    %v708 = vmul.f32 1.0, %v707
    %v709 = vmul.f32 %v706, %v560
    %v710 = vmul.f32 %v708, %v561
    %711 = vmatprep.subr.mxu0 0.0
    %712 = vmatpush1.msra.mxu0 %v709
    %713 = vmatprep.subr.mxu0 0.0
    %714 = vmatpush1.msra.mxu0 %v710
    %715 = vmatprep.subr.mxu0 0.0
    %716 = vmatpush1.msra.mxu0 0.0
    %717 = vmatprep.subr.mxu0 0.0
    %718 = vmatpush1.msra.mxu0 0.0
    %719 = vmatprep.subr.mxu0 0.0
    %720 = vmatpush1.msra.mxu0 0.0
    %721 = vmatprep.subr.mxu0 0.0
    %722 = vmatpush1.msra.mxu0 0.0
    %723 = vmatprep.subr.mxu0 0.0
    %724 = vmatpush1.msra.mxu0 0.0
    %725 = vmatprep.subr.mxu0 0.0
    %726 = vmatpush1.msra.mxu0 0.0
    %727 = vmatprep.subr.mxu0 0.0
    %728 = vmatpush1.msra.mxu0 0.0
    %729 = vmatprep.subr.mxu0 0.0
    %730 = vmatpush1.msra.mxu0 0.0
    %731 = vmatprep.subr.mxu0 0.0
    %732 = vmatpush1.msra.mxu0 0.0
    %733 = vmatprep.subr.mxu0 0.0
    %734 = vmatpush1.msra.mxu0 0.0
    %735 = vmatprep.subr.mxu0 0.0
    %736 = vmatpush1.msra.mxu0 0.0
    %737 = vmatprep.subr.mxu0 0.0
    %738 = vmatpush1.msra.mxu0 0.0
    %739 = vmatprep.subr.mxu0 0.0
    %740 = vmatpush1.msra.mxu0 0.0
    %741 = vmatprep.subr.mxu0 0.0
    %742 = vmatpush1.msra.mxu0 0.0
    %743 = vmatprep.subr.mxu0 0.0
    %744 = vmatpush1.msra.mxu0 0.0
    %745 = vmatprep.subr.mxu0 0.0
    %746 = vmatpush1.msra.mxu0 0.0
    %747 = vmatprep.subr.mxu0 0.0
    %748 = vmatpush1.msra.mxu0 0.0
    %749 = vmatprep.subr.mxu0 0.0
    %750 = vmatpush1.msra.mxu0 0.0
    %751 = vmatprep.subr.mxu0 0.0
    %752 = vmatpush1.msra.mxu0 0.0
    %753 = vmatprep.subr.mxu0 0.0
    %754 = vmatpush1.msra.mxu0 0.0
    %755 = vmatprep.subr.mxu0 0.0
    %756 = vmatpush1.msra.mxu0 0.0
    %757 = vmatprep.subr.mxu0 0.0
    %758 = vmatpush1.msra.mxu0 0.0
    %759 = vmatprep.subr.mxu0 0.0
    %760 = vmatpush1.msra.mxu0 0.0
    %761 = vmatprep.subr.mxu0 0.0
    %762 = vmatpush1.msra.mxu0 0.0
    %763 = vmatprep.subr.mxu0 0.0
    %764 = vmatpush1.msra.mxu0 0.0
    %765 = vmatprep.subr.mxu0 0.0
    %766 = vmatpush1.msra.mxu0 0.0
    %767 = vmatprep.subr.mxu0 0.0
    %768 = vmatpush1.msra.mxu0 0.0
    %769 = vmatprep.subr.mxu0 0.0
    %770 = vmatpush1.msra.mxu0 0.0
    %771 = vmatprep.subr.mxu0 0.0
    %772 = vmatpush1.msra.mxu0 0.0
    %773 = vmatprep.subr.mxu0 0.0
    %774 = vmatpush1.msra.mxu0 0.0
    %775 = vmatprep.mubr.f32.mxu0 0.0
    %776 = vmatmul.mubr.f32.gmra.mrb[0].mxu0 %v230
    %v777 = vpop.f32.mrb[0].mxu0
    %v778 = vadd.f32 0.0, %v777
    %v779 = vpop.f32.mrb[0].mxu0
    %780 = vmatprep.mubr.f32.mxu0 0.0
    %781 = vmatmul.mubr.f32.gmra.mrb[0].mxu0 %v233
    %v782 = vpop.f32.mrb[0].mxu0
    %v783 = vadd.f32 0.0, %v782
    %v784 = vpop.f32.mrb[0].mxu0
    %785 = vdwg.mxu0
    %v786 = vadd.f32 %v649, %v778
    %v787 = vadd.f32 %v654, %v783
    %v788 = vadd.f32 %v786, %v47
    %v789 = vadd.f32 %v787, %v48
    %v790 = vtanh.pop %v788
    %v791 = vtanh.pop %v789
    %v792 = vsub.f32 1.0, %v690
    %v793 = vsub.f32 1.0, %v692
    %v794 = vmul.f32 %v792, %v560
    %v795 = vmul.f32 %v793, %v561
    %v796 = vmul.f32 %v690, %v790
    %v797 = vmul.f32 %v692, %v791
    %v798 = vadd.f32 %v794, %v796
    %v799 = vadd.f32 %v795, %v797
    %800 = vmatprep.subr.mxu0 0.0
    %801 = vmatpush1.msra.mxu0 %v798
    %802 = vmatprep.subr.mxu0 0.0
    %803 = vmatpush1.msra.mxu0 %v799
    %804 = vmatprep.subr.mxu0 0.0
    %805 = vmatpush1.msra.mxu0 0.0
    %806 = vmatprep.subr.mxu0 0.0
    %807 = vmatpush1.msra.mxu0 0.0
    %808 = vmatprep.subr.mxu0 0.0
    %809 = vmatpush1.msra.mxu0 0.0
    %810 = vmatprep.subr.mxu0 0.0
    %811 = vmatpush1.msra.mxu0 0.0
    %812 = vmatprep.subr.mxu0 0.0
    %813 = vmatpush1.msra.mxu0 0.0
    %814 = vmatprep.subr.mxu0 0.0
    %815 = vmatpush1.msra.mxu0 0.0
    %816 = vmatprep.subr.mxu0 0.0
    %817 = vmatpush1.msra.mxu0 0.0
    %818 = vmatprep.subr.mxu0 0.0
    %819 = vmatpush1.msra.mxu0 0.0
    %820 = vmatprep.subr.mxu0 0.0
    %821 = vmatpush1.msra.mxu0 0.0
    %822 = vmatprep.subr.mxu0 0.0
    %823 = vmatpush1.msra.mxu0 0.0
    %824 = vmatprep.subr.mxu0 0.0
    %825 = vmatpush1.msra.mxu0 0.0
    %826 = vmatprep.subr.mxu0 0.0
    %827 = vmatpush1.msra.mxu0 0.0
    %828 = vmatprep.subr.mxu0 0.0
    %829 = vmatpush1.msra.mxu0 0.0
    %830 = vmatprep.subr.mxu0 0.0
    %831 = vmatpush1.msra.mxu0 0.0
    %832 = vmatprep.subr.mxu0 0.0
    %833 = vmatpush1.msra.mxu0 0.0
    %834 = vmatprep.subr.mxu0 0.0
    %835 = vmatpush1.msra.mxu0 0.0
    %836 = vmatprep.subr.mxu0 0.0
    %837 = vmatpush1.msra.mxu0 0.0
    %838 = vmatprep.subr.mxu0 0.0
    %839 = vmatpush1.msra.mxu0 0.0
    %840 = vmatprep.subr.mxu0 0.0
    %841 = vmatpush1.msra.mxu0 0.0
    %842 = vmatprep.subr.mxu0 0.0
    %843 = vmatpush1.msra.mxu0 0.0
    %844 = vmatprep.subr.mxu0 0.0
    %845 = vmatpush1.msra.mxu0 0.0
    %846 = vmatprep.subr.mxu0 0.0
    %847 = vmatpush1.msra.mxu0 0.0
    %848 = vmatprep.subr.mxu0 0.0
    %849 = vmatpush1.msra.mxu0 0.0
    %850 = vmatprep.subr.mxu0 0.0
    %851 = vmatpush1.msra.mxu0 0.0
    %852 = vmatprep.subr.mxu0 0.0
    %853 = vmatpush1.msra.mxu0 0.0
    %854 = vmatprep.subr.mxu0 0.0
    %855 = vmatpush1.msra.mxu0 0.0
    %856 = vmatprep.subr.mxu0 0.0
    %857 = vmatpush1.msra.mxu0 0.0
    %858 = vmatprep.subr.mxu0 0.0
    %859 = vmatpush1.msra.mxu0 0.0
    %860 = vmatprep.subr.mxu0 0.0
    %861 = vmatpush1.msra.mxu0 0.0
    %862 = vmatprep.subr.mxu0 0.0
    %863 = vmatpush1.msra.mxu0 0.0
    %864 = vmatprep.mubr.f32.mxu0 0.0
    %865 = vmatmul.mubr.f32.gmra.mrb[0].mxu0 %v51
    %v866 = vpop.f32.mrb[0].mxu0
    %v867 = vadd.f32 0.0, %v866
    %v868 = vpop.f32.mrb[0].mxu0
    %869 = vmatprep.mubr.f32.mxu0 0.0
    %870 = vmatmul.mubr.f32.gmra.mrb[0].mxu0 %v54
    %v871 = vpop.f32.mrb[0].mxu0
    %v872 = vadd.f32 0.0, %v871
    %v873 = vpop.f32.mrb[0].mxu0
    %874 = vmatprep.mubr.f32.mxu0 0.0
    %875 = vmatmul.mubr.f32.gmra.mrb[0].mxu0 %v57
    %v876 = vpop.f32.mrb[0].mxu0
    %v877 = vadd.f32 0.0, %v876
    %v878 = vpop.f32.mrb[0].mxu0
    %879 = vmatprep.mubr.f32.mxu0 0.0
    %880 = vmatmul.mubr.f32.gmra.mrb[0].mxu0 %v60
    %v881 = vpop.f32.mrb[0].mxu0
    %v882 = vadd.f32 0.0, %v881
    %v883 = vpop.f32.mrb[0].mxu0
    %884 = vmatprep.mubr.f32.mxu0 0.0
    %885 = vmatmul.mubr.f32.gmra.mrb[0].mxu0 %v63
    %v886 = vpop.f32.mrb[0].mxu0
    %v887 = vadd.f32 0.0, %v886
    %v888 = vpop.f32.mrb[0].mxu0
    %889 = vmatprep.mubr.f32.mxu0 0.0
    %890 = vmatmul.mubr.f32.gmra.mrb[0].mxu0 %v66
    %v891 = vpop.f32.mrb[0].mxu0
    %v892 = vadd.f32 0.0, %v891
    %v893 = vpop.f32.mrb[0].mxu0
    %894 = vmatprep.mubr.f32.mxu0 0.0
    %895 = vmatmul.mubr.f32.gmra.mrb[0].mxu0 %v69
    %v896 = vpop.f32.mrb[0].mxu0
    %v897 = vadd.f32 0.0, %v896
    %v898 = vpop.f32.mrb[0].mxu0
    %899 = vmatprep.mubr.f32.mxu0 0.0
    %900 = vmatmul.mubr.f32.gmra.mrb[0].mxu0 %v72
    %v901 = vpop.f32.mrb[0].mxu0
    %v902 = vadd.f32 0.0, %v901
    %v903 = vpop.f32.mrb[0].mxu0
    %904 = vmatprep.mubr.f32.mxu0 0.0
    %905 = vmatmul.mubr.f32.gmra.mrb[0].mxu0 %v75
    %v906 = vpop.f32.mrb[0].mxu0
    %v907 = vadd.f32 0.0, %v906
    %v908 = vpop.f32.mrb[0].mxu0
    %909 = vmatprep.mubr.f32.mxu0 0.0
    %910 = vmatmul.mubr.f32.gmra.mrb[0].mxu0 %v78
    %v911 = vpop.f32.mrb[0].mxu0
    %v912 = vadd.f32 0.0, %v911
    %v913 = vpop.f32.mrb[0].mxu0
    %914 = vdwg.mxu0
    %v915 = vadd.f32 %v867, %v897
    %v916 = vadd.f32 %v872, %v902
    %v917 = vadd.f32 %v915, %v43
    %v918 = vadd.f32 %v916, %v44
    %v919 = vxor.u32 %v917, 2147483648
    %v920 = vxor.u32 %v918, 2147483648
    %v921 = vmul.f32 %v919, 1.442695
    %v922 = vpow.pop %v921
    %v923 = vmul.f32 %v920, 1.442695
    %v924 = vpow.pop %v923
    %v925 = vadd.f32 %v922, 1.0
    %v926 = vadd.f32 %v924, 1.0
    %v927 = vrcp.pop %v925
    %v928 = vmul.f32 1.0, %v927
    %v929 = vrcp.pop %v926
    %v930 = vmul.f32 1.0, %v929
    %v931 = vadd.f32 %v877, %v907
    %v932 = vadd.f32 %v882, %v912
    %v933 = vadd.f32 %v931, %v45
    %v934 = vadd.f32 %v932, %v46
    %v935 = vxor.u32 %v933, 2147483648
    %v936 = vxor.u32 %v934, 2147483648
    %v937 = vmul.f32 %v935, 1.442695
    %v938 = vpow.pop %v937
    %v939 = vmul.f32 %v936, 1.442695
    %v940 = vpow.pop %v939
    %v941 = vadd.f32 %v938, 1.0
    %v942 = vadd.f32 %v940, 1.0
    %v943 = vrcp.pop %v941
    %v944 = vmul.f32 1.0, %v943
    %v945 = vrcp.pop %v942
    %v946 = vmul.f32 1.0, %v945
    %v947 = vmul.f32 %v944, %v798
    %v948 = vmul.f32 %v946, %v799
    %949 = vmatprep.subr.mxu0 0.0
    %950 = vmatpush1.msra.mxu0 %v947
    %951 = vmatprep.subr.mxu0 0.0
    %952 = vmatpush1.msra.mxu0 %v948
    %953 = vmatprep.subr.mxu0 0.0
    %954 = vmatpush1.msra.mxu0 0.0
    %955 = vmatprep.subr.mxu0 0.0
    %956 = vmatpush1.msra.mxu0 0.0
    %957 = vmatprep.subr.mxu0 0.0
    %958 = vmatpush1.msra.mxu0 0.0
    %959 = vmatprep.subr.mxu0 0.0
    %960 = vmatpush1.msra.mxu0 0.0
    %961 = vmatprep.subr.mxu0 0.0
    %962 = vmatpush1.msra.mxu0 0.0
    %963 = vmatprep.subr.mxu0 0.0
    %964 = vmatpush1.msra.mxu0 0.0
    %965 = vmatprep.subr.mxu0 0.0
    %966 = vmatpush1.msra.mxu0 0.0
    %967 = vmatprep.subr.mxu0 0.0
    %968 = vmatpush1.msra.mxu0 0.0
    %969 = vmatprep.subr.mxu0 0.0
    %970 = vmatpush1.msra.mxu0 0.0
    %971 = vmatprep.subr.mxu0 0.0
    %972 = vmatpush1.msra.mxu0 0.0
    %973 = vmatprep.subr.mxu0 0.0
    %974 = vmatpush1.msra.mxu0 0.0
    %975 = vmatprep.subr.mxu0 0.0
    %976 = vmatpush1.msra.mxu0 0.0
    %977 = vmatprep.subr.mxu0 0.0
    %978 = vmatpush1.msra.mxu0 0.0
    %979 = vmatprep.subr.mxu0 0.0
    %980 = vmatpush1.msra.mxu0 0.0
    %981 = vmatprep.subr.mxu0 0.0
    %982 = vmatpush1.msra.mxu0 0.0
    %983 = vmatprep.subr.mxu0 0.0
    %984 = vmatpush1.msra.mxu0 0.0
    %985 = vmatprep.subr.mxu0 0.0
    %986 = vmatpush1.msra.mxu0 0.0
    %987 = vmatprep.subr.mxu0 0.0
    %988 = vmatpush1.msra.mxu0 0.0
    %989 = vmatprep.subr.mxu0 0.0
    %990 = vmatpush1.msra.mxu0 0.0
    %991 = vmatprep.subr.mxu0 0.0
    %992 = vmatpush1.msra.mxu0 0.0
    %993 = vmatprep.subr.mxu0 0.0
    %994 = vmatpush1.msra.mxu0 0.0
    %995 = vmatprep.subr.mxu0 0.0
    %996 = vmatpush1.msra.mxu0 0.0
    %997 = vmatprep.subr.mxu0 0.0
    %998 = vmatpush1.msra.mxu0 0.0
    %999 = vmatprep.subr.mxu0 0.0
    %1000 = vmatpush1.msra.mxu0 0.0
    %1001 = vmatprep.subr.mxu0 0.0
    %1002 = vmatpush1.msra.mxu0 0.0
    %1003 = vmatprep.subr.mxu0 0.0
    %1004 = vmatpush1.msra.mxu0 0.0
    %1005 = vmatprep.subr.mxu0 0.0
    %1006 = vmatpush1.msra.mxu0 0.0
    %1007 = vmatprep.subr.mxu0 0.0
    %1008 = vmatpush1.msra.mxu0 0.0
    %1009 = vmatprep.subr.mxu0 0.0
    %1010 = vmatpush1.msra.mxu0 0.0
    %1011 = vmatprep.subr.mxu0 0.0
    %1012 = vmatpush1.msra.mxu0 0.0
    %1013 = vmatprep.mubr.f32.mxu0 0.0
    %1014 = vmatmul.mubr.f32.gmra.mrb[0].mxu0 %v230
    %v1015 = vpop.f32.mrb[0].mxu0
    %v1016 = vadd.f32 0.0, %v1015
    %v1017 = vpop.f32.mrb[0].mxu0
    %1018 = vmatprep.mubr.f32.mxu0 0.0
    %1019 = vmatmul.mubr.f32.gmra.mrb[0].mxu0 %v233
    %v1020 = vpop.f32.mrb[0].mxu0
    %v1021 = vadd.f32 0.0, %v1020
    %v1022 = vpop.f32.mrb[0].mxu0
    %1023 = vdwg.mxu0
    %v1024 = vadd.f32 %v887, %v1016
    %v1025 = vadd.f32 %v892, %v1021
    %v1026 = vadd.f32 %v1024, %v47
    %v1027 = vadd.f32 %v1025, %v48
    %v1028 = vtanh.pop %v1026
    %v1029 = vtanh.pop %v1027
    %v1030 = vsub.f32 1.0, %v928
    %v1031 = vsub.f32 1.0, %v930
    %v1032 = vmul.f32 %v1030, %v798
    %v1033 = vmul.f32 %v1031, %v799
    %v1034 = vmul.f32 %v928, %v1028
    %v1035 = vmul.f32 %v930, %v1029
    %v1036 = vadd.f32 %v1032, %v1034
    %v1037 = vadd.f32 %v1033, %v1035
    %v1038 = vld [vmem:[#allocation2 + $0xa0] sm:$0xff]
    %v1039 = vld [vmem:[#allocation2 + $0xa8] sm:$0xff]
    %v1040 = vld [vmem:[#allocation2 + $0xb0] sm:$0xff]
    %v1041 = vld [vmem:[#allocation2 + $0xb8] sm:$0xff]
    %v1042 = vld [vmem:[#allocation2 + $0xc0] sm:$0xff]
    %v1043 = vld [vmem:[#allocation2 + $0xc8] sm:$0xff]
    %v1044 = vld [vmem:[#allocation2 + $0xd0] sm:$0xff]
    %v1045 = vld [vmem:[#allocation2 + $0xd8] sm:$0xff]
    %v1046 = vld [vmem:[#allocation2 + $0xe0] sm:$0xff]
    %v1047 = vld [vmem:[#allocation2 + $0xe8] sm:$0xff]
    %v1048 = vld [vmem:[#allocation2 + $0xf0] sm:$0xff]
    %v1049 = vld [vmem:[#allocation2 + $0xf8] sm:$0xff]
    %v1050 = vld [vmem:[#allocation2 + $0x100] sm:$0xff]
    %v1051 = vld [vmem:[#allocation2 + $0x108] sm:$0xff]
    %v1052 = vld [vmem:[#allocation2 + $0x110] sm:$0xff]
    %v1053 = vld [vmem:[#allocation2 + $0x118] sm:$0xff]
    %v1054 = vld [vmem:[#allocation2 + $0x120] sm:$0xff]
    %v1055 = vld [vmem:[#allocation2 + $0x128] sm:$0xff]
    %v1056 = vld [vmem:[#allocation2 + $0x130] sm:$0xff]
    %v1057 = vld [vmem:[#allocation2 + $0x138] sm:$0xff]
    %v1058 = vld [vmem:[#allocation2 + $0x140] sm:$0xff]
    %v1059 = vld [vmem:[#allocation2 + $0x148] sm:$0xff]
    %v1060 = vld [vmem:[#allocation2 + $0x150] sm:$0xff]
    %v1061 = vld [vmem:[#allocation2 + $0x158] sm:$0xff]
    %v1062 = vld [vmem:[#allocation2 + $0x160] sm:$0xff]
    %v1063 = vld [vmem:[#allocation2 + $0x168] sm:$0xff]
    %v1064 = vld [vmem:[#allocation2 + $0x170] sm:$0xff]
    %v1065 = vld [vmem:[#allocation2 + $0x178] sm:$0xff]
    %v1066 = vld [vmem:[#allocation2 + $0x180] sm:$0xff]
    %v1067 = vld [vmem:[#allocation2 + $0x188] sm:$0xff]
    %v1068 = vld [vmem:[#allocation2 + $0x190] sm:$0xff]
    %v1069 = vld [vmem:[#allocation2 + $0x198] sm:$0xff]
    %v1070 = vld [vmem:[#allocation2 + $0x1a0] sm:$0xff]
    %v1071 = vld [vmem:[#allocation2 + $0x1a8] sm:$0xff]
    %v1072 = vld [vmem:[#allocation2 + $0x1b0] sm:$0xff]
    %v1073 = vld [vmem:[#allocation2 + $0x1b8] sm:$0xff]
    %v1074 = vld [vmem:[#allocation2 + $0x1c0] sm:$0xff]
    %v1075 = vld [vmem:[#allocation2 + $0x1c8] sm:$0xff]
    %v1076 = vld [vmem:[#allocation2 + $0x1d0] sm:$0xff]
    %v1077 = vld [vmem:[#allocation2 + $0x1d8] sm:$0xff]
    %vm1078 = vcmask 261120
    %v1080 = vsel %vm1078, %v1038, 0
    %v1083 = vsel %vm1078, %v1039, 0
    %v1086 = vsel %vm1078, %v1040, 0
    %v1089 = vsel %vm1078, %v1041, 0
    %v1092 = vsel %vm1078, %v1042, 0
    %v1095 = vsel %vm1078, %v1043, 0
    %v1098 = vsel %vm1078, %v1044, 0
    %v1101 = vsel %vm1078, %v1045, 0
    %v1104 = vsel %vm1078, %v1046, 0
    %v1107 = vsel %vm1078, %v1047, 0
    %v1110 = vsel %vm1078, %v1048, 0
    %v1113 = vsel %vm1078, %v1049, 0
    %v1116 = vsel %vm1078, %v1050, 0
    %v1119 = vsel %vm1078, %v1051, 0
    %v1122 = vsel %vm1078, %v1052, 0
    %v1125 = vsel %vm1078, %v1053, 0
    %v1128 = vsel %vm1078, %v1054, 0
    %v1131 = vsel %vm1078, %v1055, 0
    %v1134 = vsel %vm1078, %v1056, 0
    %v1137 = vsel %vm1078, %v1057, 0
    %1139 = vmatprep.subr.mxu0 0.0
    %1140 = vmatpush1.msra.mxu0 %v1062
    %1141 = vmatprep.subr.mxu0 0.0
    %1142 = vmatpush1.msra.mxu0 %v1063
    %1143 = vmatprep.subr.mxu0 0.0
    %1144 = vmatpush1.msra.mxu0 %v1064
    %1145 = vmatprep.subr.mxu0 0.0
    %1146 = vmatpush1.msra.mxu0 %v1065
    %1147 = vmatprep.subr.mxu0 0.0
    %1148 = vmatpush1.msra.mxu0 0.0
    %1149 = vmatprep.subr.mxu0 0.0
    %1150 = vmatpush1.msra.mxu0 0.0
    %1151 = vmatprep.subr.mxu0 0.0
    %1152 = vmatpush1.msra.mxu0 0.0
    %1153 = vmatprep.subr.mxu0 0.0
    %1154 = vmatpush1.msra.mxu0 0.0
    %1155 = vmatprep.subr.mxu0 0.0
    %1156 = vmatpush1.msra.mxu0 0.0
    %1157 = vmatprep.subr.mxu0 0.0
    %1158 = vmatpush1.msra.mxu0 0.0
    %1159 = vmatprep.subr.mxu0 0.0
    %1160 = vmatpush1.msra.mxu0 0.0
    %1161 = vmatprep.subr.mxu0 0.0
    %1162 = vmatpush1.msra.mxu0 0.0
    %1163 = vmatprep.subr.mxu0 0.0
    %1164 = vmatpush1.msra.mxu0 0.0
    %1165 = vmatprep.subr.mxu0 0.0
    %1166 = vmatpush1.msra.mxu0 0.0
    %1167 = vmatprep.subr.mxu0 0.0
    %1168 = vmatpush1.msra.mxu0 0.0
    %1169 = vmatprep.subr.mxu0 0.0
    %1170 = vmatpush1.msra.mxu0 0.0
    %1171 = vmatprep.subr.mxu0 0.0
    %1172 = vmatpush1.msra.mxu0 0.0
    %1173 = vmatprep.subr.mxu0 0.0
    %1174 = vmatpush1.msra.mxu0 0.0
    %1175 = vmatprep.subr.mxu0 0.0
    %1176 = vmatpush1.msra.mxu0 0.0
    %1177 = vmatprep.subr.mxu0 0.0
    %1178 = vmatpush1.msra.mxu0 0.0
    %1179 = vmatprep.subr.mxu0 0.0
    %1180 = vmatpush1.msra.mxu0 0.0
    %1181 = vmatprep.subr.mxu0 0.0
    %1182 = vmatpush1.msra.mxu0 0.0
    %1183 = vmatprep.subr.mxu0 0.0
    %1184 = vmatpush1.msra.mxu0 0.0
    %1185 = vmatprep.subr.mxu0 0.0
    %1186 = vmatpush1.msra.mxu0 0.0
    %1187 = vmatprep.subr.mxu0 0.0
    %1188 = vmatpush1.msra.mxu0 0.0
    %1189 = vmatprep.subr.mxu0 0.0
    %1190 = vmatpush1.msra.mxu0 0.0
    %1191 = vmatprep.subr.mxu0 0.0
    %1192 = vmatpush1.msra.mxu0 0.0
    %1193 = vmatprep.subr.mxu0 0.0
    %1194 = vmatpush1.msra.mxu0 0.0
    %1195 = vmatprep.subr.mxu0 0.0
    %1196 = vmatpush1.msra.mxu0 0.0
    %1197 = vmatprep.subr.mxu0 0.0
    %1198 = vmatpush1.msra.mxu0 0.0
    %1199 = vmatprep.subr.mxu0 0.0
    %1200 = vmatpush1.msra.mxu0 0.0
    %1201 = vmatprep.subr.mxu0 0.0
    %1202 = vmatpush1.msra.mxu0 0.0
    %1203 = vmatprep.mubr.f32.mxu0 0.0
    %1204 = vmatmul.mubr.f32.gmra.mrb[0].mxu0 %v1080
    %v1205 = vpop.f32.mrb[0].mxu0
    %v1206 = vadd.f32 0.0, %v1205
    %v1207 = vpop.f32.mrb[0].mxu0
    %1208 = vmatprep.mubr.f32.mxu0 0.0
    %1209 = vmatmul.mubr.f32.gmra.mrb[0].mxu0 %v1083
    %v1210 = vpop.f32.mrb[0].mxu0
    %v1211 = vadd.f32 0.0, %v1210
    %v1212 = vpop.f32.mrb[0].mxu0
    %1213 = vmatprep.mubr.f32.mxu0 0.0
    %1214 = vmatmul.mubr.f32.gmra.mrb[0].mxu0 %v1086
    %v1215 = vpop.f32.mrb[0].mxu0
    %v1216 = vadd.f32 0.0, %v1215
    %v1217 = vpop.f32.mrb[0].mxu0
    %1218 = vmatprep.mubr.f32.mxu0 0.0
    %1219 = vmatmul.mubr.f32.gmra.mrb[0].mxu0 %v1089
    %v1220 = vpop.f32.mrb[0].mxu0
    %v1221 = vadd.f32 0.0, %v1220
    %v1222 = vpop.f32.mrb[0].mxu0
    %1223 = vmatprep.mubr.f32.mxu0 0.0
    %1224 = vmatmul.mubr.f32.gmra.mrb[0].mxu0 %v1092
    %v1225 = vpop.f32.mrb[0].mxu0
    %v1226 = vadd.f32 0.0, %v1225
    %v1227 = vpop.f32.mrb[0].mxu0
    %1228 = vmatprep.mubr.f32.mxu0 0.0
    %1229 = vmatmul.mubr.f32.gmra.mrb[0].mxu0 %v1095
    %v1230 = vpop.f32.mrb[0].mxu0
    %v1231 = vadd.f32 0.0, %v1230
    %v1232 = vpop.f32.mrb[0].mxu0
    %1233 = vmatprep.mubr.f32.mxu0 0.0
    %1234 = vmatmul.mubr.f32.gmra.mrb[0].mxu0 %v1098
    %v1235 = vpop.f32.mrb[0].mxu0
    %v1236 = vadd.f32 0.0, %v1235
    %v1237 = vpop.f32.mrb[0].mxu0
    %1238 = vmatprep.mubr.f32.mxu0 0.0
    %1239 = vmatmul.mubr.f32.gmra.mrb[0].mxu0 %v1101
    %v1240 = vpop.f32.mrb[0].mxu0
    %v1241 = vadd.f32 0.0, %v1240
    %v1242 = vpop.f32.mrb[0].mxu0
    %1243 = vmatprep.mubr.f32.mxu0 0.0
    %1244 = vmatmul.mubr.f32.gmra.mrb[0].mxu0 %v1104
    %v1245 = vpop.f32.mrb[0].mxu0
    %v1246 = vadd.f32 0.0, %v1245
    %v1247 = vpop.f32.mrb[0].mxu0
    %1248 = vmatprep.mubr.f32.mxu0 0.0
    %1249 = vmatmul.mubr.f32.gmra.mrb[0].mxu0 %v1107
    %v1250 = vpop.f32.mrb[0].mxu0
    %v1251 = vadd.f32 0.0, %v1250
    %v1252 = vpop.f32.mrb[0].mxu0
    %1253 = vmatprep.mubr.f32.mxu0 0.0
    %1254 = vmatmul.mubr.f32.gmra.mrb[0].mxu0 %v1110
    %v1255 = vpop.f32.mrb[0].mxu0
    %v1256 = vadd.f32 0.0, %v1255
    %v1257 = vpop.f32.mrb[0].mxu0
    %1258 = vmatprep.mubr.f32.mxu0 0.0
    %1259 = vmatmul.mubr.f32.gmra.mrb[0].mxu0 %v1113
    %v1260 = vpop.f32.mrb[0].mxu0
    %v1261 = vadd.f32 0.0, %v1260
    %v1262 = vpop.f32.mrb[0].mxu0
    %1263 = vmatprep.mubr.f32.mxu0 0.0
    %1264 = vmatmul.mubr.f32.gmra.mrb[0].mxu0 %v1116
    %v1265 = vpop.f32.mrb[0].mxu0
    %v1266 = vadd.f32 0.0, %v1265
    %v1267 = vpop.f32.mrb[0].mxu0
    %1268 = vmatprep.mubr.f32.mxu0 0.0
    %1269 = vmatmul.mubr.f32.gmra.mrb[0].mxu0 %v1119
    %v1270 = vpop.f32.mrb[0].mxu0
    %v1271 = vadd.f32 0.0, %v1270
    %v1272 = vpop.f32.mrb[0].mxu0
    %1273 = vmatprep.mubr.f32.mxu0 0.0
    %1274 = vmatmul.mubr.f32.gmra.mrb[0].mxu0 %v1122
    %v1275 = vpop.f32.mrb[0].mxu0
    %v1276 = vadd.f32 0.0, %v1275
    %v1277 = vpop.f32.mrb[0].mxu0
    %1278 = vmatprep.mubr.f32.mxu0 0.0
    %1279 = vmatmul.mubr.f32.gmra.mrb[0].mxu0 %v1125
    %v1280 = vpop.f32.mrb[0].mxu0
    %v1281 = vadd.f32 0.0, %v1280
    %v1282 = vpop.f32.mrb[0].mxu0
    %1283 = vmatprep.mubr.f32.mxu0 0.0
    %1284 = vmatmul.mubr.f32.gmra.mrb[0].mxu0 %v1128
    %v1285 = vpop.f32.mrb[0].mxu0
    %v1286 = vadd.f32 0.0, %v1285
    %v1287 = vpop.f32.mrb[0].mxu0
    %1288 = vmatprep.mubr.f32.mxu0 0.0
    %1289 = vmatmul.mubr.f32.gmra.mrb[0].mxu0 %v1131
    %v1290 = vpop.f32.mrb[0].mxu0
    %v1291 = vadd.f32 0.0, %v1290
    %v1292 = vpop.f32.mrb[0].mxu0
    %1293 = vmatprep.mubr.f32.mxu0 0.0
    %1294 = vmatmul.mubr.f32.gmra.mrb[0].mxu0 %v1134
    %v1295 = vpop.f32.mrb[0].mxu0
    %v1296 = vadd.f32 0.0, %v1295
    %v1297 = vpop.f32.mrb[0].mxu0
    %1298 = vmatprep.mubr.f32.mxu0 0.0
    %1299 = vmatmul.mubr.f32.gmra.mrb[0].mxu0 %v1137
    %v1300 = vpop.f32.mrb[0].mxu0
    %v1301 = vadd.f32 0.0, %v1300
    %v1302 = vpop.f32.mrb[0].mxu0
    %1303 = vdwg.mxu0
    %v1304 = vadd.f32 %v1206, %v1266
    %v1305 = vadd.f32 %v1211, %v1271
    %v1306 = vadd.f32 %v1216, %v1276
    %v1307 = vadd.f32 %v1221, %v1281
    %v1308 = vadd.f32 %v1304, %v1066
    %v1309 = vadd.f32 %v1305, %v1067
    %v1310 = vadd.f32 %v1306, %v1068
    %v1311 = vadd.f32 %v1307, %v1069
    %v1312 = vxor.u32 %v1308, 2147483648
    %v1313 = vxor.u32 %v1309, 2147483648
    %v1314 = vxor.u32 %v1310, 2147483648
    %v1315 = vxor.u32 %v1311, 2147483648
    %v1316 = vmul.f32 %v1312, 1.442695
    %v1317 = vpow.pop %v1316
    %v1318 = vmul.f32 %v1313, 1.442695
    %v1319 = vpow.pop %v1318
    %v1320 = vmul.f32 %v1314, 1.442695
    %v1321 = vpow.pop %v1320
    %v1322 = vmul.f32 %v1315, 1.442695
    %v1323 = vpow.pop %v1322
    %v1324 = vadd.f32 %v1317, 1.0
    %v1325 = vadd.f32 %v1319, 1.0
    %v1326 = vadd.f32 %v1321, 1.0
    %v1327 = vadd.f32 %v1323, 1.0
    %v1328 = vrcp.pop %v1324
    %v1329 = vmul.f32 1.0, %v1328
    %v1330 = vrcp.pop %v1325
    %v1331 = vmul.f32 1.0, %v1330
    %v1332 = vrcp.pop %v1326
    %v1333 = vmul.f32 1.0, %v1332
    %v1334 = vrcp.pop %v1327
    %v1335 = vmul.f32 1.0, %v1334
    %v1336 = vadd.f32 %v1226, %v1286
    %v1337 = vadd.f32 %v1231, %v1291
    %v1338 = vadd.f32 %v1236, %v1296
    %v1339 = vadd.f32 %v1241, %v1301
    %v1340 = vadd.f32 %v1336, %v1070
    %v1341 = vadd.f32 %v1337, %v1071
    %v1342 = vadd.f32 %v1338, %v1072
    %v1343 = vadd.f32 %v1339, %v1073
    %v1344 = vxor.u32 %v1340, 2147483648
    %v1345 = vxor.u32 %v1341, 2147483648
    %v1346 = vxor.u32 %v1342, 2147483648
    %v1347 = vxor.u32 %v1343, 2147483648
    %v1348 = vmul.f32 %v1344, 1.442695
    %v1349 = vpow.pop %v1348
    %v1350 = vmul.f32 %v1345, 1.442695
    %v1351 = vpow.pop %v1350
    %v1352 = vmul.f32 %v1346, 1.442695
    %v1353 = vpow.pop %v1352
    %v1354 = vmul.f32 %v1347, 1.442695
    %v1355 = vpow.pop %v1354
    %v1356 = vadd.f32 %v1349, 1.0
    %v1357 = vadd.f32 %v1351, 1.0
    %v1358 = vadd.f32 %v1353, 1.0
    %v1359 = vadd.f32 %v1355, 1.0
    %v1360 = vrcp.pop %v1356
    %v1361 = vmul.f32 1.0, %v1360
    %v1362 = vrcp.pop %v1357
    %v1363 = vmul.f32 1.0, %v1362
    %v1364 = vrcp.pop %v1358
    %v1365 = vmul.f32 1.0, %v1364
    %v1366 = vrcp.pop %v1359
    %v1367 = vmul.f32 1.0, %v1366
    %v1368 = vmul.f32 %v1361, %v1062
    %v1369 = vmul.f32 %v1363, %v1063
    %v1370 = vmul.f32 %v1365, %v1064
    %v1371 = vmul.f32 %v1367, %v1065
    %v1373 = vsel %vm1078, %v1058, 0
    %v1376 = vsel %vm1078, %v1059, 0
    %v1379 = vsel %vm1078, %v1060, 0
    %v1382 = vsel %vm1078, %v1061, 0
    %1384 = vmatprep.subr.mxu0 0.0
    %1385 = vmatpush1.msra.mxu0 %v1368
    %1386 = vmatprep.subr.mxu0 0.0
    %1387 = vmatpush1.msra.mxu0 %v1369
    %1388 = vmatprep.subr.mxu0 0.0
    %1389 = vmatpush1.msra.mxu0 %v1370
    %1390 = vmatprep.subr.mxu0 0.0
    %1391 = vmatpush1.msra.mxu0 %v1371
    %1392 = vmatprep.subr.mxu0 0.0
    %1393 = vmatpush1.msra.mxu0 0.0
    %1394 = vmatprep.subr.mxu0 0.0
    %1395 = vmatpush1.msra.mxu0 0.0
    %1396 = vmatprep.subr.mxu0 0.0
    %1397 = vmatpush1.msra.mxu0 0.0
    %1398 = vmatprep.subr.mxu0 0.0
    %1399 = vmatpush1.msra.mxu0 0.0
    %1400 = vmatprep.subr.mxu0 0.0
    %1401 = vmatpush1.msra.mxu0 0.0
    %1402 = vmatprep.subr.mxu0 0.0
    %1403 = vmatpush1.msra.mxu0 0.0
    %1404 = vmatprep.subr.mxu0 0.0
    %1405 = vmatpush1.msra.mxu0 0.0
    %1406 = vmatprep.subr.mxu0 0.0
    %1407 = vmatpush1.msra.mxu0 0.0
    %1408 = vmatprep.subr.mxu0 0.0
    %1409 = vmatpush1.msra.mxu0 0.0
    %1410 = vmatprep.subr.mxu0 0.0
    %1411 = vmatpush1.msra.mxu0 0.0
    %1412 = vmatprep.subr.mxu0 0.0
    %1413 = vmatpush1.msra.mxu0 0.0
    %1414 = vmatprep.subr.mxu0 0.0
    %1415 = vmatpush1.msra.mxu0 0.0
    %1416 = vmatprep.subr.mxu0 0.0
    %1417 = vmatpush1.msra.mxu0 0.0
    %1418 = vmatprep.subr.mxu0 0.0
    %1419 = vmatpush1.msra.mxu0 0.0
    %1420 = vmatprep.subr.mxu0 0.0
    %1421 = vmatpush1.msra.mxu0 0.0
    %1422 = vmatprep.subr.mxu0 0.0
    %1423 = vmatpush1.msra.mxu0 0.0
    %1424 = vmatprep.subr.mxu0 0.0
    %1425 = vmatpush1.msra.mxu0 0.0
    %1426 = vmatprep.subr.mxu0 0.0
    %1427 = vmatpush1.msra.mxu0 0.0
    %1428 = vmatprep.subr.mxu0 0.0
    %1429 = vmatpush1.msra.mxu0 0.0
    %1430 = vmatprep.subr.mxu0 0.0
    %1431 = vmatpush1.msra.mxu0 0.0
    %1432 = vmatprep.subr.mxu0 0.0
    %1433 = vmatpush1.msra.mxu0 0.0
    %1434 = vmatprep.subr.mxu0 0.0
    %1435 = vmatpush1.msra.mxu0 0.0
    %1436 = vmatprep.subr.mxu0 0.0
    %1437 = vmatpush1.msra.mxu0 0.0
    %1438 = vmatprep.subr.mxu0 0.0
    %1439 = vmatpush1.msra.mxu0 0.0
    %1440 = vmatprep.subr.mxu0 0.0
    %1441 = vmatpush1.msra.mxu0 0.0
    %1442 = vmatprep.subr.mxu0 0.0
    %1443 = vmatpush1.msra.mxu0 0.0
    %1444 = vmatprep.subr.mxu0 0.0
    %1445 = vmatpush1.msra.mxu0 0.0
    %1446 = vmatprep.subr.mxu0 0.0
    %1447 = vmatpush1.msra.mxu0 0.0
    %1448 = vmatprep.mubr.f32.mxu0 0.0
    %1449 = vmatmul.mubr.f32.gmra.mrb[0].mxu0 %v1373
    %v1450 = vpop.f32.mrb[0].mxu0
    %v1451 = vadd.f32 0.0, %v1450
    %v1452 = vpop.f32.mrb[0].mxu0
    %1453 = vmatprep.mubr.f32.mxu0 0.0
    %1454 = vmatmul.mubr.f32.gmra.mrb[0].mxu0 %v1376
    %v1455 = vpop.f32.mrb[0].mxu0
    %v1456 = vadd.f32 0.0, %v1455
    %v1457 = vpop.f32.mrb[0].mxu0
    %1458 = vmatprep.mubr.f32.mxu0 0.0
    %1459 = vmatmul.mubr.f32.gmra.mrb[0].mxu0 %v1379
    %v1460 = vpop.f32.mrb[0].mxu0
    %v1461 = vadd.f32 0.0, %v1460
    %v1462 = vpop.f32.mrb[0].mxu0
    %1463 = vmatprep.mubr.f32.mxu0 0.0
    %1464 = vmatmul.mubr.f32.gmra.mrb[0].mxu0 %v1382
    %v1465 = vpop.f32.mrb[0].mxu0
    %v1466 = vadd.f32 0.0, %v1465
    %v1467 = vpop.f32.mrb[0].mxu0
    %1468 = vdwg.mxu0
    %v1469 = vadd.f32 %v1246, %v1451
    %v1470 = vadd.f32 %v1251, %v1456
    %v1471 = vadd.f32 %v1256, %v1461
    %v1472 = vadd.f32 %v1261, %v1466
    %v1473 = vadd.f32 %v1469, %v1074
    %v1474 = vadd.f32 %v1470, %v1075
    %v1475 = vadd.f32 %v1471, %v1076
    %v1476 = vadd.f32 %v1472, %v1077
    %v1477 = vtanh.pop %v1473
    %v1478 = vtanh.pop %v1474
    %v1479 = vtanh.pop %v1475
    %v1480 = vtanh.pop %v1476
    %v1481 = vsub.f32 1.0, %v1329
    %v1482 = vsub.f32 1.0, %v1331
    %v1483 = vsub.f32 1.0, %v1333
    %v1484 = vsub.f32 1.0, %v1335
    %v1485 = vmul.f32 %v1481, %v1062
    %v1486 = vmul.f32 %v1482, %v1063
    %v1487 = vmul.f32 %v1483, %v1064
    %v1488 = vmul.f32 %v1484, %v1065
    %v1489 = vmul.f32 %v1329, %v1477
    %v1490 = vmul.f32 %v1331, %v1478
    %v1491 = vmul.f32 %v1333, %v1479
    %v1492 = vmul.f32 %v1335, %v1480
    %v1493 = vadd.f32 %v1485, %v1489
    %v1494 = vadd.f32 %v1486, %v1490
    %v1495 = vadd.f32 %v1487, %v1491
    %v1496 = vadd.f32 %v1488, %v1492
    %1497 = vmatprep.subr.mxu0 0.0
    %1498 = vmatpush1.msra.mxu0 %v1493
    %1499 = vmatprep.subr.mxu0 0.0
    %1500 = vmatpush1.msra.mxu0 %v1494
    %1501 = vmatprep.subr.mxu0 0.0
    %1502 = vmatpush1.msra.mxu0 %v1495
    %1503 = vmatprep.subr.mxu0 0.0
    %1504 = vmatpush1.msra.mxu0 %v1496
    %1505 = vmatprep.subr.mxu0 0.0
    %1506 = vmatpush1.msra.mxu0 0.0
    %1507 = vmatprep.subr.mxu0 0.0
    %1508 = vmatpush1.msra.mxu0 0.0
    %1509 = vmatprep.subr.mxu0 0.0
    %1510 = vmatpush1.msra.mxu0 0.0
    %1511 = vmatprep.subr.mxu0 0.0
    %1512 = vmatpush1.msra.mxu0 0.0
    %1513 = vmatprep.subr.mxu0 0.0
    %1514 = vmatpush1.msra.mxu0 0.0
    %1515 = vmatprep.subr.mxu0 0.0
    %1516 = vmatpush1.msra.mxu0 0.0
    %1517 = vmatprep.subr.mxu0 0.0
    %1518 = vmatpush1.msra.mxu0 0.0
    %1519 = vmatprep.subr.mxu0 0.0
    %1520 = vmatpush1.msra.mxu0 0.0
    %1521 = vmatprep.subr.mxu0 0.0
    %1522 = vmatpush1.msra.mxu0 0.0
    %1523 = vmatprep.subr.mxu0 0.0
    %1524 = vmatpush1.msra.mxu0 0.0
    %1525 = vmatprep.subr.mxu0 0.0
    %1526 = vmatpush1.msra.mxu0 0.0
    %1527 = vmatprep.subr.mxu0 0.0
    %1528 = vmatpush1.msra.mxu0 0.0
    %1529 = vmatprep.subr.mxu0 0.0
    %1530 = vmatpush1.msra.mxu0 0.0
    %1531 = vmatprep.subr.mxu0 0.0
    %1532 = vmatpush1.msra.mxu0 0.0
    %1533 = vmatprep.subr.mxu0 0.0
    %1534 = vmatpush1.msra.mxu0 0.0
    %1535 = vmatprep.subr.mxu0 0.0
    %1536 = vmatpush1.msra.mxu0 0.0
    %1537 = vmatprep.subr.mxu0 0.0
    %1538 = vmatpush1.msra.mxu0 0.0
    %1539 = vmatprep.subr.mxu0 0.0
    %1540 = vmatpush1.msra.mxu0 0.0
    %1541 = vmatprep.subr.mxu0 0.0
    %1542 = vmatpush1.msra.mxu0 0.0
    %1543 = vmatprep.subr.mxu0 0.0
    %1544 = vmatpush1.msra.mxu0 0.0
    %1545 = vmatprep.subr.mxu0 0.0
    %1546 = vmatpush1.msra.mxu0 0.0
    %1547 = vmatprep.subr.mxu0 0.0
    %1548 = vmatpush1.msra.mxu0 0.0
    %1549 = vmatprep.subr.mxu0 0.0
    %1550 = vmatpush1.msra.mxu0 0.0
    %1551 = vmatprep.subr.mxu0 0.0
    %1552 = vmatpush1.msra.mxu0 0.0
    %1553 = vmatprep.subr.mxu0 0.0
    %1554 = vmatpush1.msra.mxu0 0.0
    %1555 = vmatprep.subr.mxu0 0.0
    %1556 = vmatpush1.msra.mxu0 0.0
    %1557 = vmatprep.subr.mxu0 0.0
    %1558 = vmatpush1.msra.mxu0 0.0
    %1559 = vmatprep.subr.mxu0 0.0
    %1560 = vmatpush1.msra.mxu0 0.0
    %1561 = vmatprep.mubr.f32.mxu0 0.0
    %1562 = vmatmul.mubr.f32.gmra.mrb[0].mxu0 %v1080
    %v1563 = vpop.f32.mrb[0].mxu0
    %v1564 = vadd.f32 0.0, %v1563
    %v1565 = vpop.f32.mrb[0].mxu0
    %1566 = vmatprep.mubr.f32.mxu0 0.0
    %1567 = vmatmul.mubr.f32.gmra.mrb[0].mxu0 %v1083
    %v1568 = vpop.f32.mrb[0].mxu0
    %v1569 = vadd.f32 0.0, %v1568
    %v1570 = vpop.f32.mrb[0].mxu0
    %1571 = vmatprep.mubr.f32.mxu0 0.0
    %1572 = vmatmul.mubr.f32.gmra.mrb[0].mxu0 %v1086
    %v1573 = vpop.f32.mrb[0].mxu0
    %v1574 = vadd.f32 0.0, %v1573
    %v1575 = vpop.f32.mrb[0].mxu0
    %1576 = vmatprep.mubr.f32.mxu0 0.0
    %1577 = vmatmul.mubr.f32.gmra.mrb[0].mxu0 %v1089
    %v1578 = vpop.f32.mrb[0].mxu0
    %v1579 = vadd.f32 0.0, %v1578
    %v1580 = vpop.f32.mrb[0].mxu0
    %1581 = vmatprep.mubr.f32.mxu0 0.0
    %1582 = vmatmul.mubr.f32.gmra.mrb[0].mxu0 %v1092
    %v1583 = vpop.f32.mrb[0].mxu0
    %v1584 = vadd.f32 0.0, %v1583
    %v1585 = vpop.f32.mrb[0].mxu0
    %1586 = vmatprep.mubr.f32.mxu0 0.0
    %1587 = vmatmul.mubr.f32.gmra.mrb[0].mxu0 %v1095
    %v1588 = vpop.f32.mrb[0].mxu0
    %v1589 = vadd.f32 0.0, %v1588
    %v1590 = vpop.f32.mrb[0].mxu0
    %1591 = vmatprep.mubr.f32.mxu0 0.0
    %1592 = vmatmul.mubr.f32.gmra.mrb[0].mxu0 %v1098
    %v1593 = vpop.f32.mrb[0].mxu0
    %v1594 = vadd.f32 0.0, %v1593
    %v1595 = vpop.f32.mrb[0].mxu0
    %1596 = vmatprep.mubr.f32.mxu0 0.0
    %1597 = vmatmul.mubr.f32.gmra.mrb[0].mxu0 %v1101
    %v1598 = vpop.f32.mrb[0].mxu0
    %v1599 = vadd.f32 0.0, %v1598
    %v1600 = vpop.f32.mrb[0].mxu0
    %1601 = vmatprep.mubr.f32.mxu0 0.0
    %1602 = vmatmul.mubr.f32.gmra.mrb[0].mxu0 %v1104
    %v1603 = vpop.f32.mrb[0].mxu0
    %v1604 = vadd.f32 0.0, %v1603
    %v1605 = vpop.f32.mrb[0].mxu0
    %1606 = vmatprep.mubr.f32.mxu0 0.0
    %1607 = vmatmul.mubr.f32.gmra.mrb[0].mxu0 %v1107
    %v1608 = vpop.f32.mrb[0].mxu0
    %v1609 = vadd.f32 0.0, %v1608
    %v1610 = vpop.f32.mrb[0].mxu0
    %1611 = vmatprep.mubr.f32.mxu0 0.0
    %1612 = vmatmul.mubr.f32.gmra.mrb[0].mxu0 %v1110
    %v1613 = vpop.f32.mrb[0].mxu0
    %v1614 = vadd.f32 0.0, %v1613
    %v1615 = vpop.f32.mrb[0].mxu0
    %1616 = vmatprep.mubr.f32.mxu0 0.0
    %1617 = vmatmul.mubr.f32.gmra.mrb[0].mxu0 %v1113
    %v1618 = vpop.f32.mrb[0].mxu0
    %v1619 = vadd.f32 0.0, %v1618
    %v1620 = vpop.f32.mrb[0].mxu0
    %1621 = vmatprep.mubr.f32.mxu0 0.0
    %1622 = vmatmul.mubr.f32.gmra.mrb[0].mxu0 %v1116
    %v1623 = vpop.f32.mrb[0].mxu0
    %v1624 = vadd.f32 0.0, %v1623
    %v1625 = vpop.f32.mrb[0].mxu0
    %1626 = vmatprep.mubr.f32.mxu0 0.0
    %1627 = vmatmul.mubr.f32.gmra.mrb[0].mxu0 %v1119
    %v1628 = vpop.f32.mrb[0].mxu0
    %v1629 = vadd.f32 0.0, %v1628
    %v1630 = vpop.f32.mrb[0].mxu0
    %1631 = vmatprep.mubr.f32.mxu0 0.0
    %1632 = vmatmul.mubr.f32.gmra.mrb[0].mxu0 %v1122
    %v1633 = vpop.f32.mrb[0].mxu0
    %v1634 = vadd.f32 0.0, %v1633
    %v1635 = vpop.f32.mrb[0].mxu0
    %1636 = vmatprep.mubr.f32.mxu0 0.0
    %1637 = vmatmul.mubr.f32.gmra.mrb[0].mxu0 %v1125
    %v1638 = vpop.f32.mrb[0].mxu0
    %v1639 = vadd.f32 0.0, %v1638
    %v1640 = vpop.f32.mrb[0].mxu0
    %1641 = vmatprep.mubr.f32.mxu0 0.0
    %1642 = vmatmul.mubr.f32.gmra.mrb[0].mxu0 %v1128
    %v1643 = vpop.f32.mrb[0].mxu0
    %v1644 = vadd.f32 0.0, %v1643
    %v1645 = vpop.f32.mrb[0].mxu0
    %1646 = vmatprep.mubr.f32.mxu0 0.0
    %1647 = vmatmul.mubr.f32.gmra.mrb[0].mxu0 %v1131
    %v1648 = vpop.f32.mrb[0].mxu0
    %v1649 = vadd.f32 0.0, %v1648
    %v1650 = vpop.f32.mrb[0].mxu0
    %1651 = vmatprep.mubr.f32.mxu0 0.0
    %1652 = vmatmul.mubr.f32.gmra.mrb[0].mxu0 %v1134
    %v1653 = vpop.f32.mrb[0].mxu0
    %v1654 = vadd.f32 0.0, %v1653
    %v1655 = vpop.f32.mrb[0].mxu0
    %1656 = vmatprep.mubr.f32.mxu0 0.0
    %1657 = vmatmul.mubr.f32.gmra.mrb[0].mxu0 %v1137
    %v1658 = vpop.f32.mrb[0].mxu0
    %v1659 = vadd.f32 0.0, %v1658
    %v1660 = vpop.f32.mrb[0].mxu0
    %1661 = vdwg.mxu0
    %v1662 = vadd.f32 %v1564, %v1624
    %v1663 = vadd.f32 %v1569, %v1629
    %v1664 = vadd.f32 %v1574, %v1634
    %v1665 = vadd.f32 %v1579, %v1639
    %v1666 = vadd.f32 %v1662, %v1066
    %v1667 = vadd.f32 %v1663, %v1067
    %v1668 = vadd.f32 %v1664, %v1068
    %v1669 = vadd.f32 %v1665, %v1069
    %v1670 = vxor.u32 %v1666, 2147483648
    %v1671 = vxor.u32 %v1667, 2147483648
    %v1672 = vxor.u32 %v1668, 2147483648
    %v1673 = vxor.u32 %v1669, 2147483648
    %v1674 = vmul.f32 %v1670, 1.442695
    %v1675 = vpow.pop %v1674
    %v1676 = vmul.f32 %v1671, 1.442695
    %v1677 = vpow.pop %v1676
    %v1678 = vmul.f32 %v1672, 1.442695
    %v1679 = vpow.pop %v1678
    %v1680 = vmul.f32 %v1673, 1.442695
    %v1681 = vpow.pop %v1680
    %v1682 = vadd.f32 %v1675, 1.0
    %v1683 = vadd.f32 %v1677, 1.0
    %v1684 = vadd.f32 %v1679, 1.0
    %v1685 = vadd.f32 %v1681, 1.0
    %v1686 = vrcp.pop %v1682
    %v1687 = vmul.f32 1.0, %v1686
    %v1688 = vrcp.pop %v1683
    %v1689 = vmul.f32 1.0, %v1688
    %v1690 = vrcp.pop %v1684
    %v1691 = vmul.f32 1.0, %v1690
    %v1692 = vrcp.pop %v1685
    %v1693 = vmul.f32 1.0, %v1692
    %v1694 = vadd.f32 %v1584, %v1644
    %v1695 = vadd.f32 %v1589, %v1649
    %v1696 = vadd.f32 %v1594, %v1654
    %v1697 = vadd.f32 %v1599, %v1659
    %v1698 = vadd.f32 %v1694, %v1070
    %v1699 = vadd.f32 %v1695, %v1071
    %v1700 = vadd.f32 %v1696, %v1072
    %v1701 = vadd.f32 %v1697, %v1073
    %v1702 = vxor.u32 %v1698, 2147483648
    %v1703 = vxor.u32 %v1699, 2147483648
    %v1704 = vxor.u32 %v1700, 2147483648
    %v1705 = vxor.u32 %v1701, 2147483648
    %v1706 = vmul.f32 %v1702, 1.442695
    %v1707 = vpow.pop %v1706
    %v1708 = vmul.f32 %v1703, 1.442695
    %v1709 = vpow.pop %v1708
    %v1710 = vmul.f32 %v1704, 1.442695
    %v1711 = vpow.pop %v1710
    %v1712 = vmul.f32 %v1705, 1.442695
    %v1713 = vpow.pop %v1712
    %v1714 = vadd.f32 %v1707, 1.0
    %v1715 = vadd.f32 %v1709, 1.0
    %v1716 = vadd.f32 %v1711, 1.0
    %v1717 = vadd.f32 %v1713, 1.0
    %v1718 = vrcp.pop %v1714
    %v1719 = vmul.f32 1.0, %v1718
    %v1720 = vrcp.pop %v1715
    %v1721 = vmul.f32 1.0, %v1720
    %v1722 = vrcp.pop %v1716
    %v1723 = vmul.f32 1.0, %v1722
    %v1724 = vrcp.pop %v1717
    %v1725 = vmul.f32 1.0, %v1724
    %v1726 = vmul.f32 %v1719, %v1493
    %v1727 = vmul.f32 %v1721, %v1494
    %v1728 = vmul.f32 %v1723, %v1495
    %v1729 = vmul.f32 %v1725, %v1496
    %1730 = vmatprep.subr.mxu0 0.0
    %1731 = vmatpush1.msra.mxu0 %v1726
    %1732 = vmatprep.subr.mxu0 0.0
    %1733 = vmatpush1.msra.mxu0 %v1727
    %1734 = vmatprep.subr.mxu0 0.0
    %1735 = vmatpush1.msra.mxu0 %v1728
    %1736 = vmatprep.subr.mxu0 0.0
    %1737 = vmatpush1.msra.mxu0 %v1729
    %1738 = vmatprep.subr.mxu0 0.0
    %1739 = vmatpush1.msra.mxu0 0.0
    %1740 = vmatprep.subr.mxu0 0.0
    %1741 = vmatpush1.msra.mxu0 0.0
    %1742 = vmatprep.subr.mxu0 0.0
    %1743 = vmatpush1.msra.mxu0 0.0
    %1744 = vmatprep.subr.mxu0 0.0
    %1745 = vmatpush1.msra.mxu0 0.0
    %1746 = vmatprep.subr.mxu0 0.0
    %1747 = vmatpush1.msra.mxu0 0.0
    %1748 = vmatprep.subr.mxu0 0.0
    %1749 = vmatpush1.msra.mxu0 0.0
    %1750 = vmatprep.subr.mxu0 0.0
    %1751 = vmatpush1.msra.mxu0 0.0
    %1752 = vmatprep.subr.mxu0 0.0
    %1753 = vmatpush1.msra.mxu0 0.0
    %1754 = vmatprep.subr.mxu0 0.0
    %1755 = vmatpush1.msra.mxu0 0.0
    %1756 = vmatprep.subr.mxu0 0.0
    %1757 = vmatpush1.msra.mxu0 0.0
    %1758 = vmatprep.subr.mxu0 0.0
    %1759 = vmatpush1.msra.mxu0 0.0
    %1760 = vmatprep.subr.mxu0 0.0
    %1761 = vmatpush1.msra.mxu0 0.0
    %1762 = vmatprep.subr.mxu0 0.0
    %1763 = vmatpush1.msra.mxu0 0.0
    %1764 = vmatprep.subr.mxu0 0.0
    %1765 = vmatpush1.msra.mxu0 0.0
    %1766 = vmatprep.subr.mxu0 0.0
    %1767 = vmatpush1.msra.mxu0 0.0
    %1768 = vmatprep.subr.mxu0 0.0
    %1769 = vmatpush1.msra.mxu0 0.0
    %1770 = vmatprep.subr.mxu0 0.0
    %1771 = vmatpush1.msra.mxu0 0.0
    %1772 = vmatprep.subr.mxu0 0.0
    %1773 = vmatpush1.msra.mxu0 0.0
    %1774 = vmatprep.subr.mxu0 0.0
    %1775 = vmatpush1.msra.mxu0 0.0
    %1776 = vmatprep.subr.mxu0 0.0
    %1777 = vmatpush1.msra.mxu0 0.0
    %1778 = vmatprep.subr.mxu0 0.0
    %1779 = vmatpush1.msra.mxu0 0.0
    %1780 = vmatprep.subr.mxu0 0.0
    %1781 = vmatpush1.msra.mxu0 0.0
    %1782 = vmatprep.subr.mxu0 0.0
    %1783 = vmatpush1.msra.mxu0 0.0
    %1784 = vmatprep.subr.mxu0 0.0
    %1785 = vmatpush1.msra.mxu0 0.0
    %1786 = vmatprep.subr.mxu0 0.0
    %1787 = vmatpush1.msra.mxu0 0.0
    %1788 = vmatprep.subr.mxu0 0.0
    %1789 = vmatpush1.msra.mxu0 0.0
    %1790 = vmatprep.subr.mxu0 0.0
    %1791 = vmatpush1.msra.mxu0 0.0
    %1792 = vmatprep.subr.mxu0 0.0
    %1793 = vmatpush1.msra.mxu0 0.0
    %1794 = vmatprep.mubr.f32.mxu0 0.0
    %1795 = vmatmul.mubr.f32.gmra.mrb[0].mxu0 %v1373
    %v1796 = vpop.f32.mrb[0].mxu0
    %v1797 = vadd.f32 0.0, %v1796
    %v1798 = vpop.f32.mrb[0].mxu0
    %1799 = vmatprep.mubr.f32.mxu0 0.0
    %1800 = vmatmul.mubr.f32.gmra.mrb[0].mxu0 %v1376
    %v1801 = vpop.f32.mrb[0].mxu0
    %v1802 = vadd.f32 0.0, %v1801
    %v1803 = vpop.f32.mrb[0].mxu0
    %1804 = vmatprep.mubr.f32.mxu0 0.0
    %1805 = vmatmul.mubr.f32.gmra.mrb[0].mxu0 %v1379
    %v1806 = vpop.f32.mrb[0].mxu0
    %v1807 = vadd.f32 0.0, %v1806
    %v1808 = vpop.f32.mrb[0].mxu0
    %1809 = vmatprep.mubr.f32.mxu0 0.0
    %1810 = vmatmul.mubr.f32.gmra.mrb[0].mxu0 %v1382
    %v1811 = vpop.f32.mrb[0].mxu0
    %v1812 = vadd.f32 0.0, %v1811
    %v1813 = vpop.f32.mrb[0].mxu0
    %1814 = vdwg.mxu0
    %v1815 = vadd.f32 %v1604, %v1797
    %v1816 = vadd.f32 %v1609, %v1802
    %v1817 = vadd.f32 %v1614, %v1807
    %v1818 = vadd.f32 %v1619, %v1812
    %v1819 = vadd.f32 %v1815, %v1074
    %v1820 = vadd.f32 %v1816, %v1075
    %v1821 = vadd.f32 %v1817, %v1076
    %v1822 = vadd.f32 %v1818, %v1077
    %v1823 = vtanh.pop %v1819
    %v1824 = vtanh.pop %v1820
    %v1825 = vtanh.pop %v1821
    %v1826 = vtanh.pop %v1822
    %v1827 = vsub.f32 1.0, %v1687
    %v1828 = vsub.f32 1.0, %v1689
    %v1829 = vsub.f32 1.0, %v1691
    %v1830 = vsub.f32 1.0, %v1693
    %v1831 = vmul.f32 %v1827, %v1493
    %v1832 = vmul.f32 %v1828, %v1494
    %v1833 = vmul.f32 %v1829, %v1495
    %v1834 = vmul.f32 %v1830, %v1496
    %v1835 = vmul.f32 %v1687, %v1823
    %v1836 = vmul.f32 %v1689, %v1824
    %v1837 = vmul.f32 %v1691, %v1825
    %v1838 = vmul.f32 %v1693, %v1826
    %v1839 = vadd.f32 %v1831, %v1835
    %v1840 = vadd.f32 %v1832, %v1836
    %v1841 = vadd.f32 %v1833, %v1837
    %v1842 = vadd.f32 %v1834, %v1838
    %1843 = vmatprep.subr.mxu0 0.0
    %1844 = vmatpush1.msra.mxu0 %v1839
    %1845 = vmatprep.subr.mxu0 0.0
    %1846 = vmatpush1.msra.mxu0 %v1840
    %1847 = vmatprep.subr.mxu0 0.0
    %1848 = vmatpush1.msra.mxu0 %v1841
    %1849 = vmatprep.subr.mxu0 0.0
    %1850 = vmatpush1.msra.mxu0 %v1842
    %1851 = vmatprep.subr.mxu0 0.0
    %1852 = vmatpush1.msra.mxu0 0.0
    %1853 = vmatprep.subr.mxu0 0.0
    %1854 = vmatpush1.msra.mxu0 0.0
    %1855 = vmatprep.subr.mxu0 0.0
    %1856 = vmatpush1.msra.mxu0 0.0
    %1857 = vmatprep.subr.mxu0 0.0
    %1858 = vmatpush1.msra.mxu0 0.0
    %1859 = vmatprep.subr.mxu0 0.0
    %1860 = vmatpush1.msra.mxu0 0.0
    %1861 = vmatprep.subr.mxu0 0.0
    %1862 = vmatpush1.msra.mxu0 0.0
    %1863 = vmatprep.subr.mxu0 0.0
    %1864 = vmatpush1.msra.mxu0 0.0
    %1865 = vmatprep.subr.mxu0 0.0
    %1866 = vmatpush1.msra.mxu0 0.0
    %1867 = vmatprep.subr.mxu0 0.0
    %1868 = vmatpush1.msra.mxu0 0.0
    %1869 = vmatprep.subr.mxu0 0.0
    %1870 = vmatpush1.msra.mxu0 0.0
    %1871 = vmatprep.subr.mxu0 0.0
    %1872 = vmatpush1.msra.mxu0 0.0
    %1873 = vmatprep.subr.mxu0 0.0
    %1874 = vmatpush1.msra.mxu0 0.0
    %1875 = vmatprep.subr.mxu0 0.0
    %1876 = vmatpush1.msra.mxu0 0.0
    %1877 = vmatprep.subr.mxu0 0.0
    %1878 = vmatpush1.msra.mxu0 0.0
    %1879 = vmatprep.subr.mxu0 0.0
    %1880 = vmatpush1.msra.mxu0 0.0
    %1881 = vmatprep.subr.mxu0 0.0
    %1882 = vmatpush1.msra.mxu0 0.0
    %1883 = vmatprep.subr.mxu0 0.0
    %1884 = vmatpush1.msra.mxu0 0.0
    %1885 = vmatprep.subr.mxu0 0.0
    %1886 = vmatpush1.msra.mxu0 0.0
    %1887 = vmatprep.subr.mxu0 0.0
    %1888 = vmatpush1.msra.mxu0 0.0
    %1889 = vmatprep.subr.mxu0 0.0
    %1890 = vmatpush1.msra.mxu0 0.0
    %1891 = vmatprep.subr.mxu0 0.0
    %1892 = vmatpush1.msra.mxu0 0.0
    %1893 = vmatprep.subr.mxu0 0.0
    %1894 = vmatpush1.msra.mxu0 0.0
    %1895 = vmatprep.subr.mxu0 0.0
    %1896 = vmatpush1.msra.mxu0 0.0
    %1897 = vmatprep.subr.mxu0 0.0
    %1898 = vmatpush1.msra.mxu0 0.0
    %1899 = vmatprep.subr.mxu0 0.0
    %1900 = vmatpush1.msra.mxu0 0.0
    %1901 = vmatprep.subr.mxu0 0.0
    %1902 = vmatpush1.msra.mxu0 0.0
    %1903 = vmatprep.subr.mxu0 0.0
    %1904 = vmatpush1.msra.mxu0 0.0
    %1905 = vmatprep.subr.mxu0 0.0
    %1906 = vmatpush1.msra.mxu0 0.0
    %1907 = vmatprep.mubr.f32.mxu0 0.0
    %1908 = vmatmul.mubr.f32.gmra.mrb[0].mxu0 %v1080
    %v1909 = vpop.f32.mrb[0].mxu0
    %v1910 = vadd.f32 0.0, %v1909
    %v1911 = vpop.f32.mrb[0].mxu0
    %1912 = vmatprep.mubr.f32.mxu0 0.0
    %1913 = vmatmul.mubr.f32.gmra.mrb[0].mxu0 %v1083
    %v1914 = vpop.f32.mrb[0].mxu0
    %v1915 = vadd.f32 0.0, %v1914
    %v1916 = vpop.f32.mrb[0].mxu0
    %1917 = vmatprep.mubr.f32.mxu0 0.0
    %1918 = vmatmul.mubr.f32.gmra.mrb[0].mxu0 %v1086
    %v1919 = vpop.f32.mrb[0].mxu0
    %v1920 = vadd.f32 0.0, %v1919
    %v1921 = vpop.f32.mrb[0].mxu0
    %1922 = vmatprep.mubr.f32.mxu0 0.0
    %1923 = vmatmul.mubr.f32.gmra.mrb[0].mxu0 %v1089
    %v1924 = vpop.f32.mrb[0].mxu0
    %v1925 = vadd.f32 0.0, %v1924
    %v1926 = vpop.f32.mrb[0].mxu0
    %1927 = vmatprep.mubr.f32.mxu0 0.0
    %1928 = vmatmul.mubr.f32.gmra.mrb[0].mxu0 %v1092
    %v1929 = vpop.f32.mrb[0].mxu0
    %v1930 = vadd.f32 0.0, %v1929
    %v1931 = vpop.f32.mrb[0].mxu0
    %1932 = vmatprep.mubr.f32.mxu0 0.0
    %1933 = vmatmul.mubr.f32.gmra.mrb[0].mxu0 %v1095
    %v1934 = vpop.f32.mrb[0].mxu0
    %v1935 = vadd.f32 0.0, %v1934
    %v1936 = vpop.f32.mrb[0].mxu0
    %1937 = vmatprep.mubr.f32.mxu0 0.0
    %1938 = vmatmul.mubr.f32.gmra.mrb[0].mxu0 %v1098
    %v1939 = vpop.f32.mrb[0].mxu0
    %v1940 = vadd.f32 0.0, %v1939
    %v1941 = vpop.f32.mrb[0].mxu0
    %1942 = vmatprep.mubr.f32.mxu0 0.0
    %1943 = vmatmul.mubr.f32.gmra.mrb[0].mxu0 %v1101
    %v1944 = vpop.f32.mrb[0].mxu0
    %v1945 = vadd.f32 0.0, %v1944
    %v1946 = vpop.f32.mrb[0].mxu0
    %1947 = vmatprep.mubr.f32.mxu0 0.0
    %1948 = vmatmul.mubr.f32.gmra.mrb[0].mxu0 %v1104
    %v1949 = vpop.f32.mrb[0].mxu0
    %v1950 = vadd.f32 0.0, %v1949
    %v1951 = vpop.f32.mrb[0].mxu0
    %1952 = vmatprep.mubr.f32.mxu0 0.0
    %1953 = vmatmul.mubr.f32.gmra.mrb[0].mxu0 %v1107
    %v1954 = vpop.f32.mrb[0].mxu0
    %v1955 = vadd.f32 0.0, %v1954
    %v1956 = vpop.f32.mrb[0].mxu0
    %1957 = vmatprep.mubr.f32.mxu0 0.0
    %1958 = vmatmul.mubr.f32.gmra.mrb[0].mxu0 %v1110
    %v1959 = vpop.f32.mrb[0].mxu0
    %v1960 = vadd.f32 0.0, %v1959
    %v1961 = vpop.f32.mrb[0].mxu0
    %1962 = vmatprep.mubr.f32.mxu0 0.0
    %1963 = vmatmul.mubr.f32.gmra.mrb[0].mxu0 %v1113
    %v1964 = vpop.f32.mrb[0].mxu0
    %v1965 = vadd.f32 0.0, %v1964
    %v1966 = vpop.f32.mrb[0].mxu0
    %1967 = vmatprep.mubr.f32.mxu0 0.0
    %1968 = vmatmul.mubr.f32.gmra.mrb[0].mxu0 %v1116
    %v1969 = vpop.f32.mrb[0].mxu0
    %v1970 = vadd.f32 0.0, %v1969
    %v1971 = vpop.f32.mrb[0].mxu0
    %1972 = vmatprep.mubr.f32.mxu0 0.0
    %1973 = vmatmul.mubr.f32.gmra.mrb[0].mxu0 %v1119
    %v1974 = vpop.f32.mrb[0].mxu0
    %v1975 = vadd.f32 0.0, %v1974
    %v1976 = vpop.f32.mrb[0].mxu0
    %1977 = vmatprep.mubr.f32.mxu0 0.0
    %1978 = vmatmul.mubr.f32.gmra.mrb[0].mxu0 %v1122
    %v1979 = vpop.f32.mrb[0].mxu0
    %v1980 = vadd.f32 0.0, %v1979
    %v1981 = vpop.f32.mrb[0].mxu0
    %1982 = vmatprep.mubr.f32.mxu0 0.0
    %1983 = vmatmul.mubr.f32.gmra.mrb[0].mxu0 %v1125
    %v1984 = vpop.f32.mrb[0].mxu0
    %v1985 = vadd.f32 0.0, %v1984
    %v1986 = vpop.f32.mrb[0].mxu0
    %1987 = vmatprep.mubr.f32.mxu0 0.0
    %1988 = vmatmul.mubr.f32.gmra.mrb[0].mxu0 %v1128
    %v1989 = vpop.f32.mrb[0].mxu0
    %v1990 = vadd.f32 0.0, %v1989
    %v1991 = vpop.f32.mrb[0].mxu0
    %1992 = vmatprep.mubr.f32.mxu0 0.0
    %1993 = vmatmul.mubr.f32.gmra.mrb[0].mxu0 %v1131
    %v1994 = vpop.f32.mrb[0].mxu0
    %v1995 = vadd.f32 0.0, %v1994
    %v1996 = vpop.f32.mrb[0].mxu0
    %1997 = vmatprep.mubr.f32.mxu0 0.0
    %1998 = vmatmul.mubr.f32.gmra.mrb[0].mxu0 %v1134
    %v1999 = vpop.f32.mrb[0].mxu0
    %v2000 = vadd.f32 0.0, %v1999
    %v2001 = vpop.f32.mrb[0].mxu0
    %2002 = vmatprep.mubr.f32.mxu0 0.0
    %2003 = vmatmul.mubr.f32.gmra.mrb[0].mxu0 %v1137
    %v2004 = vpop.f32.mrb[0].mxu0
    %v2005 = vadd.f32 0.0, %v2004
    %v2006 = vpop.f32.mrb[0].mxu0
    %2007 = vdwg.mxu0
    %v2008 = vadd.f32 %v1910, %v1970
    %v2009 = vadd.f32 %v1915, %v1975
    %v2010 = vadd.f32 %v1920, %v1980
    %v2011 = vadd.f32 %v1925, %v1985
    %v2012 = vadd.f32 %v2008, %v1066
    %v2013 = vadd.f32 %v2009, %v1067
    %v2014 = vadd.f32 %v2010, %v1068
    %v2015 = vadd.f32 %v2011, %v1069
    %v2016 = vxor.u32 %v2012, 2147483648
    %v2017 = vxor.u32 %v2013, 2147483648
    %v2018 = vxor.u32 %v2014, 2147483648
    %v2019 = vxor.u32 %v2015, 2147483648
    %v2020 = vmul.f32 %v2016, 1.442695
    %v2021 = vpow.pop %v2020
    %v2022 = vmul.f32 %v2017, 1.442695
    %v2023 = vpow.pop %v2022
    %v2024 = vmul.f32 %v2018, 1.442695
    %v2025 = vpow.pop %v2024
    %v2026 = vmul.f32 %v2019, 1.442695
    %v2027 = vpow.pop %v2026
    %v2028 = vadd.f32 %v2021, 1.0
    %v2029 = vadd.f32 %v2023, 1.0
    %v2030 = vadd.f32 %v2025, 1.0
    %v2031 = vadd.f32 %v2027, 1.0
    %v2032 = vrcp.pop %v2028
    %v2033 = vmul.f32 1.0, %v2032
    %v2034 = vrcp.pop %v2029
    %v2035 = vmul.f32 1.0, %v2034
    %v2036 = vrcp.pop %v2030
    %v2037 = vmul.f32 1.0, %v2036
    %v2038 = vrcp.pop %v2031
    %v2039 = vmul.f32 1.0, %v2038
    %v2040 = vadd.f32 %v1930, %v1990
    %v2041 = vadd.f32 %v1935, %v1995
    %v2042 = vadd.f32 %v1940, %v2000
    %v2043 = vadd.f32 %v1945, %v2005
    %v2044 = vadd.f32 %v2040, %v1070
    %v2045 = vadd.f32 %v2041, %v1071
    %v2046 = vadd.f32 %v2042, %v1072
    %v2047 = vadd.f32 %v2043, %v1073
    %v2048 = vxor.u32 %v2044, 2147483648
    %v2049 = vxor.u32 %v2045, 2147483648
    %v2050 = vxor.u32 %v2046, 2147483648
    %v2051 = vxor.u32 %v2047, 2147483648
    %v2052 = vmul.f32 %v2048, 1.442695
    %v2053 = vpow.pop %v2052
    %v2054 = vmul.f32 %v2049, 1.442695
    %v2055 = vpow.pop %v2054
    %v2056 = vmul.f32 %v2050, 1.442695
    %v2057 = vpow.pop %v2056
    %v2058 = vmul.f32 %v2051, 1.442695
    %v2059 = vpow.pop %v2058
    %v2060 = vadd.f32 %v2053, 1.0
    %v2061 = vadd.f32 %v2055, 1.0
    %v2062 = vadd.f32 %v2057, 1.0
    %v2063 = vadd.f32 %v2059, 1.0
    %v2064 = vrcp.pop %v2060
    %v2065 = vmul.f32 1.0, %v2064
    %v2066 = vrcp.pop %v2061
    %v2067 = vmul.f32 1.0, %v2066
    %v2068 = vrcp.pop %v2062
    %v2069 = vmul.f32 1.0, %v2068
    %v2070 = vrcp.pop %v2063
    %v2071 = vmul.f32 1.0, %v2070
    %v2072 = vmul.f32 %v2065, %v1839
    %v2073 = vmul.f32 %v2067, %v1840
    %v2074 = vmul.f32 %v2069, %v1841
    %v2075 = vmul.f32 %v2071, %v1842
    %2076 = vmatprep.subr.mxu0 0.0
    %2077 = vmatpush1.msra.mxu0 %v2072
    %2078 = vmatprep.subr.mxu0 0.0
    %2079 = vmatpush1.msra.mxu0 %v2073
    %2080 = vmatprep.subr.mxu0 0.0
    %2081 = vmatpush1.msra.mxu0 %v2074
    %2082 = vmatprep.subr.mxu0 0.0
    %2083 = vmatpush1.msra.mxu0 %v2075
    %2084 = vmatprep.subr.mxu0 0.0
    %2085 = vmatpush1.msra.mxu0 0.0
    %2086 = vmatprep.subr.mxu0 0.0
    %2087 = vmatpush1.msra.mxu0 0.0
    %2088 = vmatprep.subr.mxu0 0.0
    %2089 = vmatpush1.msra.mxu0 0.0
    %2090 = vmatprep.subr.mxu0 0.0
    %2091 = vmatpush1.msra.mxu0 0.0
    %2092 = vmatprep.subr.mxu0 0.0
    %2093 = vmatpush1.msra.mxu0 0.0
    %2094 = vmatprep.subr.mxu0 0.0
    %2095 = vmatpush1.msra.mxu0 0.0
    %2096 = vmatprep.subr.mxu0 0.0
    %2097 = vmatpush1.msra.mxu0 0.0
    %2098 = vmatprep.subr.mxu0 0.0
    %2099 = vmatpush1.msra.mxu0 0.0
    %2100 = vmatprep.subr.mxu0 0.0
    %2101 = vmatpush1.msra.mxu0 0.0
    %2102 = vmatprep.subr.mxu0 0.0
    %2103 = vmatpush1.msra.mxu0 0.0
    %2104 = vmatprep.subr.mxu0 0.0
    %2105 = vmatpush1.msra.mxu0 0.0
    %2106 = vmatprep.subr.mxu0 0.0
    %2107 = vmatpush1.msra.mxu0 0.0
    %2108 = vmatprep.subr.mxu0 0.0
    %2109 = vmatpush1.msra.mxu0 0.0
    %2110 = vmatprep.subr.mxu0 0.0
    %2111 = vmatpush1.msra.mxu0 0.0
    %2112 = vmatprep.subr.mxu0 0.0
    %2113 = vmatpush1.msra.mxu0 0.0
    %2114 = vmatprep.subr.mxu0 0.0
    %2115 = vmatpush1.msra.mxu0 0.0
    %2116 = vmatprep.subr.mxu0 0.0
    %2117 = vmatpush1.msra.mxu0 0.0
    %2118 = vmatprep.subr.mxu0 0.0
    %2119 = vmatpush1.msra.mxu0 0.0
    %2120 = vmatprep.subr.mxu0 0.0
    %2121 = vmatpush1.msra.mxu0 0.0
    %2122 = vmatprep.subr.mxu0 0.0
    %2123 = vmatpush1.msra.mxu0 0.0
    %2124 = vmatprep.subr.mxu0 0.0
    %2125 = vmatpush1.msra.mxu0 0.0
    %2126 = vmatprep.subr.mxu0 0.0
    %2127 = vmatpush1.msra.mxu0 0.0
    %2128 = vmatprep.subr.mxu0 0.0
    %2129 = vmatpush1.msra.mxu0 0.0
    %2130 = vmatprep.subr.mxu0 0.0
    %2131 = vmatpush1.msra.mxu0 0.0
    %2132 = vmatprep.subr.mxu0 0.0
    %2133 = vmatpush1.msra.mxu0 0.0
    %2134 = vmatprep.subr.mxu0 0.0
    %2135 = vmatpush1.msra.mxu0 0.0
    %2136 = vmatprep.subr.mxu0 0.0
    %2137 = vmatpush1.msra.mxu0 0.0
    %2138 = vmatprep.subr.mxu0 0.0
    %2139 = vmatpush1.msra.mxu0 0.0
    %2140 = vmatprep.mubr.f32.mxu0 0.0
    %2141 = vmatmul.mubr.f32.gmra.mrb[0].mxu0 %v1373
    %v2142 = vpop.f32.mrb[0].mxu0
    %v2143 = vadd.f32 0.0, %v2142
    %v2144 = vpop.f32.mrb[0].mxu0
    %2145 = vmatprep.mubr.f32.mxu0 0.0
    %2146 = vmatmul.mubr.f32.gmra.mrb[0].mxu0 %v1376
    %v2147 = vpop.f32.mrb[0].mxu0
    %v2148 = vadd.f32 0.0, %v2147
    %v2149 = vpop.f32.mrb[0].mxu0
    %2150 = vmatprep.mubr.f32.mxu0 0.0
    %2151 = vmatmul.mubr.f32.gmra.mrb[0].mxu0 %v1379
    %v2152 = vpop.f32.mrb[0].mxu0
    %v2153 = vadd.f32 0.0, %v2152
    %v2154 = vpop.f32.mrb[0].mxu0
    %2155 = vmatprep.mubr.f32.mxu0 0.0
    %2156 = vmatmul.mubr.f32.gmra.mrb[0].mxu0 %v1382
    %v2157 = vpop.f32.mrb[0].mxu0
    %v2158 = vadd.f32 0.0, %v2157
    %v2159 = vpop.f32.mrb[0].mxu0
    %2160 = vdwg.mxu0
    %v2161 = vadd.f32 %v1950, %v2143
    %v2162 = vadd.f32 %v1955, %v2148
    %v2163 = vadd.f32 %v1960, %v2153
    %v2164 = vadd.f32 %v1965, %v2158
    %v2165 = vadd.f32 %v2161, %v1074
    %v2166 = vadd.f32 %v2162, %v1075
    %v2167 = vadd.f32 %v2163, %v1076
    %v2168 = vadd.f32 %v2164, %v1077
    %v2169 = vtanh.pop %v2165
    %v2170 = vtanh.pop %v2166
    %v2171 = vtanh.pop %v2167
    %v2172 = vtanh.pop %v2168
    %v2173 = vsub.f32 1.0, %v2033
    %v2174 = vsub.f32 1.0, %v2035
    %v2175 = vsub.f32 1.0, %v2037
    %v2176 = vsub.f32 1.0, %v2039
    %v2177 = vmul.f32 %v2173, %v1839
    %v2178 = vmul.f32 %v2174, %v1840
    %v2179 = vmul.f32 %v2175, %v1841
    %v2180 = vmul.f32 %v2176, %v1842
    %v2181 = vmul.f32 %v2033, %v2169
    %v2182 = vmul.f32 %v2035, %v2170
    %v2183 = vmul.f32 %v2037, %v2171
    %v2184 = vmul.f32 %v2039, %v2172
    %v2185 = vadd.f32 %v2177, %v2181
    %v2186 = vadd.f32 %v2178, %v2182
    %v2187 = vadd.f32 %v2179, %v2183
    %v2188 = vadd.f32 %v2180, %v2184
    %2189 = vmatprep.subr.mxu0 0.0
    %2190 = vmatpush1.msra.mxu0 %v2185
    %2191 = vmatprep.subr.mxu0 0.0
    %2192 = vmatpush1.msra.mxu0 %v2186
    %2193 = vmatprep.subr.mxu0 0.0
    %2194 = vmatpush1.msra.mxu0 %v2187
    %2195 = vmatprep.subr.mxu0 0.0
    %2196 = vmatpush1.msra.mxu0 %v2188
    %2197 = vmatprep.subr.mxu0 0.0
    %2198 = vmatpush1.msra.mxu0 0.0
    %2199 = vmatprep.subr.mxu0 0.0
    %2200 = vmatpush1.msra.mxu0 0.0
    %2201 = vmatprep.subr.mxu0 0.0
    %2202 = vmatpush1.msra.mxu0 0.0
    %2203 = vmatprep.subr.mxu0 0.0
    %2204 = vmatpush1.msra.mxu0 0.0
    %2205 = vmatprep.subr.mxu0 0.0
    %2206 = vmatpush1.msra.mxu0 0.0
    %2207 = vmatprep.subr.mxu0 0.0
    %2208 = vmatpush1.msra.mxu0 0.0
    %2209 = vmatprep.subr.mxu0 0.0
    %2210 = vmatpush1.msra.mxu0 0.0
    %2211 = vmatprep.subr.mxu0 0.0
    %2212 = vmatpush1.msra.mxu0 0.0
    %2213 = vmatprep.subr.mxu0 0.0
    %2214 = vmatpush1.msra.mxu0 0.0
    %2215 = vmatprep.subr.mxu0 0.0
    %2216 = vmatpush1.msra.mxu0 0.0
    %2217 = vmatprep.subr.mxu0 0.0
    %2218 = vmatpush1.msra.mxu0 0.0
    %2219 = vmatprep.subr.mxu0 0.0
    %2220 = vmatpush1.msra.mxu0 0.0
    %2221 = vmatprep.subr.mxu0 0.0
    %2222 = vmatpush1.msra.mxu0 0.0
    %2223 = vmatprep.subr.mxu0 0.0
    %2224 = vmatpush1.msra.mxu0 0.0
    %2225 = vmatprep.subr.mxu0 0.0
    %2226 = vmatpush1.msra.mxu0 0.0
    %2227 = vmatprep.subr.mxu0 0.0
    %2228 = vmatpush1.msra.mxu0 0.0
    %2229 = vmatprep.subr.mxu0 0.0
    %2230 = vmatpush1.msra.mxu0 0.0
    %2231 = vmatprep.subr.mxu0 0.0
    %2232 = vmatpush1.msra.mxu0 0.0
    %2233 = vmatprep.subr.mxu0 0.0
    %2234 = vmatpush1.msra.mxu0 0.0
    %2235 = vmatprep.subr.mxu0 0.0
    %2236 = vmatpush1.msra.mxu0 0.0
    %2237 = vmatprep.subr.mxu0 0.0
    %2238 = vmatpush1.msra.mxu0 0.0
    %2239 = vmatprep.subr.mxu0 0.0
    %2240 = vmatpush1.msra.mxu0 0.0
    %2241 = vmatprep.subr.mxu0 0.0
    %2242 = vmatpush1.msra.mxu0 0.0
    %2243 = vmatprep.subr.mxu0 0.0
    %2244 = vmatpush1.msra.mxu0 0.0
    %2245 = vmatprep.subr.mxu0 0.0
    %2246 = vmatpush1.msra.mxu0 0.0
    %2247 = vmatprep.subr.mxu0 0.0
    %2248 = vmatpush1.msra.mxu0 0.0
    %2249 = vmatprep.subr.mxu0 0.0
    %2250 = vmatpush1.msra.mxu0 0.0
    %2251 = vmatprep.subr.mxu0 0.0
    %2252 = vmatpush1.msra.mxu0 0.0
    %2253 = vmatprep.mubr.f32.mxu0 0.0
    %2254 = vmatmul.mubr.f32.gmra.mrb[0].mxu0 %v1080
    %v2255 = vpop.f32.mrb[0].mxu0
    %v2256 = vadd.f32 0.0, %v2255
    %v2257 = vpop.f32.mrb[0].mxu0
    %2258 = vmatprep.mubr.f32.mxu0 0.0
    %2259 = vmatmul.mubr.f32.gmra.mrb[0].mxu0 %v1083
    %v2260 = vpop.f32.mrb[0].mxu0
    %v2261 = vadd.f32 0.0, %v2260
    %v2262 = vpop.f32.mrb[0].mxu0
    %2263 = vmatprep.mubr.f32.mxu0 0.0
    %2264 = vmatmul.mubr.f32.gmra.mrb[0].mxu0 %v1086
    %v2265 = vpop.f32.mrb[0].mxu0
    %v2266 = vadd.f32 0.0, %v2265
    %v2267 = vpop.f32.mrb[0].mxu0
    %2268 = vmatprep.mubr.f32.mxu0 0.0
    %2269 = vmatmul.mubr.f32.gmra.mrb[0].mxu0 %v1089
    %v2270 = vpop.f32.mrb[0].mxu0
    %v2271 = vadd.f32 0.0, %v2270
    %v2272 = vpop.f32.mrb[0].mxu0
    %2273 = vmatprep.mubr.f32.mxu0 0.0
    %2274 = vmatmul.mubr.f32.gmra.mrb[0].mxu0 %v1092
    %v2275 = vpop.f32.mrb[0].mxu0
    %v2276 = vadd.f32 0.0, %v2275
    %v2277 = vpop.f32.mrb[0].mxu0
    %2278 = vmatprep.mubr.f32.mxu0 0.0
    %2279 = vmatmul.mubr.f32.gmra.mrb[0].mxu0 %v1095
    %v2280 = vpop.f32.mrb[0].mxu0
    %v2281 = vadd.f32 0.0, %v2280
    %v2282 = vpop.f32.mrb[0].mxu0
    %2283 = vmatprep.mubr.f32.mxu0 0.0
    %2284 = vmatmul.mubr.f32.gmra.mrb[0].mxu0 %v1098
    %v2285 = vpop.f32.mrb[0].mxu0
    %v2286 = vadd.f32 0.0, %v2285
    %v2287 = vpop.f32.mrb[0].mxu0
    %2288 = vmatprep.mubr.f32.mxu0 0.0
    %2289 = vmatmul.mubr.f32.gmra.mrb[0].mxu0 %v1101
    %v2290 = vpop.f32.mrb[0].mxu0
    %v2291 = vadd.f32 0.0, %v2290
    %v2292 = vpop.f32.mrb[0].mxu0
    %2293 = vmatprep.mubr.f32.mxu0 0.0
    %2294 = vmatmul.mubr.f32.gmra.mrb[0].mxu0 %v1104
    %v2295 = vpop.f32.mrb[0].mxu0
    %v2296 = vadd.f32 0.0, %v2295
    %v2297 = vpop.f32.mrb[0].mxu0
    %2298 = vmatprep.mubr.f32.mxu0 0.0
    %2299 = vmatmul.mubr.f32.gmra.mrb[0].mxu0 %v1107
    %v2300 = vpop.f32.mrb[0].mxu0
    %v2301 = vadd.f32 0.0, %v2300
    %v2302 = vpop.f32.mrb[0].mxu0
    %2303 = vmatprep.mubr.f32.mxu0 0.0
    %2304 = vmatmul.mubr.f32.gmra.mrb[0].mxu0 %v1110
    %v2305 = vpop.f32.mrb[0].mxu0
    %v2306 = vadd.f32 0.0, %v2305
    %v2307 = vpop.f32.mrb[0].mxu0
    %2308 = vmatprep.mubr.f32.mxu0 0.0
    %2309 = vmatmul.mubr.f32.gmra.mrb[0].mxu0 %v1113
    %v2310 = vpop.f32.mrb[0].mxu0
    %v2311 = vadd.f32 0.0, %v2310
    %v2312 = vpop.f32.mrb[0].mxu0
    %2313 = vmatprep.mubr.f32.mxu0 0.0
    %2314 = vmatmul.mubr.f32.gmra.mrb[0].mxu0 %v1116
    %v2315 = vpop.f32.mrb[0].mxu0
    %v2316 = vadd.f32 0.0, %v2315
    %v2317 = vpop.f32.mrb[0].mxu0
    %2318 = vmatprep.mubr.f32.mxu0 0.0
    %2319 = vmatmul.mubr.f32.gmra.mrb[0].mxu0 %v1119
    %v2320 = vpop.f32.mrb[0].mxu0
    %v2321 = vadd.f32 0.0, %v2320
    %v2322 = vpop.f32.mrb[0].mxu0
    %2323 = vmatprep.mubr.f32.mxu0 0.0
    %2324 = vmatmul.mubr.f32.gmra.mrb[0].mxu0 %v1122
    %v2325 = vpop.f32.mrb[0].mxu0
    %v2326 = vadd.f32 0.0, %v2325
    %v2327 = vpop.f32.mrb[0].mxu0
    %2328 = vmatprep.mubr.f32.mxu0 0.0
    %2329 = vmatmul.mubr.f32.gmra.mrb[0].mxu0 %v1125
    %v2330 = vpop.f32.mrb[0].mxu0
    %v2331 = vadd.f32 0.0, %v2330
    %v2332 = vpop.f32.mrb[0].mxu0
    %2333 = vmatprep.mubr.f32.mxu0 0.0
    %2334 = vmatmul.mubr.f32.gmra.mrb[0].mxu0 %v1128
    %v2335 = vpop.f32.mrb[0].mxu0
    %v2336 = vadd.f32 0.0, %v2335
    %v2337 = vpop.f32.mrb[0].mxu0
    %2338 = vmatprep.mubr.f32.mxu0 0.0
    %2339 = vmatmul.mubr.f32.gmra.mrb[0].mxu0 %v1131
    %v2340 = vpop.f32.mrb[0].mxu0
    %v2341 = vadd.f32 0.0, %v2340
    %v2342 = vpop.f32.mrb[0].mxu0
    %2343 = vmatprep.mubr.f32.mxu0 0.0
    %2344 = vmatmul.mubr.f32.gmra.mrb[0].mxu0 %v1134
    %v2345 = vpop.f32.mrb[0].mxu0
    %v2346 = vadd.f32 0.0, %v2345
    %v2347 = vpop.f32.mrb[0].mxu0
    %2348 = vmatprep.mubr.f32.mxu0 0.0
    %2349 = vmatmul.mubr.f32.gmra.mrb[0].mxu0 %v1137
    %v2350 = vpop.f32.mrb[0].mxu0
    %v2351 = vadd.f32 0.0, %v2350
    %v2352 = vpop.f32.mrb[0].mxu0
    %2353 = vdwg.mxu0
    %v2354 = vadd.f32 %v2256, %v2316
    %v2355 = vadd.f32 %v2261, %v2321
    %v2356 = vadd.f32 %v2266, %v2326
    %v2357 = vadd.f32 %v2271, %v2331
    %v2358 = vadd.f32 %v2354, %v1066
    %v2359 = vadd.f32 %v2355, %v1067
    %v2360 = vadd.f32 %v2356, %v1068
    %v2361 = vadd.f32 %v2357, %v1069
    %v2362 = vxor.u32 %v2358, 2147483648
    %v2363 = vxor.u32 %v2359, 2147483648
    %v2364 = vxor.u32 %v2360, 2147483648
    %v2365 = vxor.u32 %v2361, 2147483648
    %v2366 = vmul.f32 %v2362, 1.442695
    %v2367 = vpow.pop %v2366
    %v2368 = vmul.f32 %v2363, 1.442695
    %v2369 = vpow.pop %v2368
    %v2370 = vmul.f32 %v2364, 1.442695
    %v2371 = vpow.pop %v2370
    %v2372 = vmul.f32 %v2365, 1.442695
    %v2373 = vpow.pop %v2372
    %v2374 = vadd.f32 %v2367, 1.0
    %v2375 = vadd.f32 %v2369, 1.0
    %v2376 = vadd.f32 %v2371, 1.0
    %v2377 = vadd.f32 %v2373, 1.0
    %v2378 = vrcp.pop %v2374
    %v2379 = vmul.f32 1.0, %v2378
    %v2380 = vrcp.pop %v2375
    %v2381 = vmul.f32 1.0, %v2380
    %v2382 = vrcp.pop %v2376
    %v2383 = vmul.f32 1.0, %v2382
    %v2384 = vrcp.pop %v2377
    %v2385 = vmul.f32 1.0, %v2384
    %v2386 = vadd.f32 %v2276, %v2336
    %v2387 = vadd.f32 %v2281, %v2341
    %v2388 = vadd.f32 %v2286, %v2346
    %v2389 = vadd.f32 %v2291, %v2351
    %v2390 = vadd.f32 %v2386, %v1070
    %v2391 = vadd.f32 %v2387, %v1071
    %v2392 = vadd.f32 %v2388, %v1072
    %v2393 = vadd.f32 %v2389, %v1073
    %v2394 = vxor.u32 %v2390, 2147483648
    %v2395 = vxor.u32 %v2391, 2147483648
    %v2396 = vxor.u32 %v2392, 2147483648
    %v2397 = vxor.u32 %v2393, 2147483648
    %v2398 = vmul.f32 %v2394, 1.442695
    %v2399 = vpow.pop %v2398
    %v2400 = vmul.f32 %v2395, 1.442695
    %v2401 = vpow.pop %v2400
    %v2402 = vmul.f32 %v2396, 1.442695
    %v2403 = vpow.pop %v2402
    %v2404 = vmul.f32 %v2397, 1.442695
    %v2405 = vpow.pop %v2404
    %v2406 = vadd.f32 %v2399, 1.0
    %v2407 = vadd.f32 %v2401, 1.0
    %v2408 = vadd.f32 %v2403, 1.0
    %v2409 = vadd.f32 %v2405, 1.0
    %v2410 = vrcp.pop %v2406
    %v2411 = vmul.f32 1.0, %v2410
    %v2412 = vrcp.pop %v2407
    %v2413 = vmul.f32 1.0, %v2412
    %v2414 = vrcp.pop %v2408
    %v2415 = vmul.f32 1.0, %v2414
    %v2416 = vrcp.pop %v2409
    %v2417 = vmul.f32 1.0, %v2416
    %v2418 = vmul.f32 %v2411, %v2185
    %v2419 = vmul.f32 %v2413, %v2186
    %v2420 = vmul.f32 %v2415, %v2187
    %v2421 = vmul.f32 %v2417, %v2188
    %2422 = vmatprep.subr.mxu0 0.0
    %2423 = vmatpush1.msra.mxu0 %v2418
    %2424 = vmatprep.subr.mxu0 0.0
    %2425 = vmatpush1.msra.mxu0 %v2419
    %2426 = vmatprep.subr.mxu0 0.0
    %2427 = vmatpush1.msra.mxu0 %v2420
    %2428 = vmatprep.subr.mxu0 0.0
    %2429 = vmatpush1.msra.mxu0 %v2421
    %2430 = vmatprep.subr.mxu0 0.0
    %2431 = vmatpush1.msra.mxu0 0.0
    %2432 = vmatprep.subr.mxu0 0.0
    %2433 = vmatpush1.msra.mxu0 0.0
    %2434 = vmatprep.subr.mxu0 0.0
    %2435 = vmatpush1.msra.mxu0 0.0
    %2436 = vmatprep.subr.mxu0 0.0
    %2437 = vmatpush1.msra.mxu0 0.0
    %2438 = vmatprep.subr.mxu0 0.0
    %2439 = vmatpush1.msra.mxu0 0.0
    %2440 = vmatprep.subr.mxu0 0.0
    %2441 = vmatpush1.msra.mxu0 0.0
    %2442 = vmatprep.subr.mxu0 0.0
    %2443 = vmatpush1.msra.mxu0 0.0
    %2444 = vmatprep.subr.mxu0 0.0
    %2445 = vmatpush1.msra.mxu0 0.0
    %2446 = vmatprep.subr.mxu0 0.0
    %2447 = vmatpush1.msra.mxu0 0.0
    %2448 = vmatprep.subr.mxu0 0.0
    %2449 = vmatpush1.msra.mxu0 0.0
    %2450 = vmatprep.subr.mxu0 0.0
    %2451 = vmatpush1.msra.mxu0 0.0
    %2452 = vmatprep.subr.mxu0 0.0
    %2453 = vmatpush1.msra.mxu0 0.0
    %2454 = vmatprep.subr.mxu0 0.0
    %2455 = vmatpush1.msra.mxu0 0.0
    %2456 = vmatprep.subr.mxu0 0.0
    %2457 = vmatpush1.msra.mxu0 0.0
    %2458 = vmatprep.subr.mxu0 0.0
    %2459 = vmatpush1.msra.mxu0 0.0
    %2460 = vmatprep.subr.mxu0 0.0
    %2461 = vmatpush1.msra.mxu0 0.0
    %2462 = vmatprep.subr.mxu0 0.0
    %2463 = vmatpush1.msra.mxu0 0.0
    %2464 = vmatprep.subr.mxu0 0.0
    %2465 = vmatpush1.msra.mxu0 0.0
    %2466 = vmatprep.subr.mxu0 0.0
    %2467 = vmatpush1.msra.mxu0 0.0
    %2468 = vmatprep.subr.mxu0 0.0
    %2469 = vmatpush1.msra.mxu0 0.0
    %2470 = vmatprep.subr.mxu0 0.0
    %2471 = vmatpush1.msra.mxu0 0.0
    %2472 = vmatprep.subr.mxu0 0.0
    %2473 = vmatpush1.msra.mxu0 0.0
    %2474 = vmatprep.subr.mxu0 0.0
    %2475 = vmatpush1.msra.mxu0 0.0
    %2476 = vmatprep.subr.mxu0 0.0
    %2477 = vmatpush1.msra.mxu0 0.0
    %2478 = vmatprep.subr.mxu0 0.0
    %2479 = vmatpush1.msra.mxu0 0.0
    %2480 = vmatprep.subr.mxu0 0.0
    %2481 = vmatpush1.msra.mxu0 0.0
    %2482 = vmatprep.subr.mxu0 0.0
    %2483 = vmatpush1.msra.mxu0 0.0
    %2484 = vmatprep.subr.mxu0 0.0
    %2485 = vmatpush1.msra.mxu0 0.0
    %2486 = vmatprep.mubr.f32.mxu0 0.0
    %2487 = vmatmul.mubr.f32.gmra.mrb[0].mxu0 %v1373
    %v2488 = vpop.f32.mrb[0].mxu0
    %v2489 = vadd.f32 0.0, %v2488
    %v2490 = vpop.f32.mrb[0].mxu0
    %2491 = vmatprep.mubr.f32.mxu0 0.0
    %2492 = vmatmul.mubr.f32.gmra.mrb[0].mxu0 %v1376
    %v2493 = vpop.f32.mrb[0].mxu0
    %v2494 = vadd.f32 0.0, %v2493
    %v2495 = vpop.f32.mrb[0].mxu0
    %2496 = vmatprep.mubr.f32.mxu0 0.0
    %2497 = vmatmul.mubr.f32.gmra.mrb[0].mxu0 %v1379
    %v2498 = vpop.f32.mrb[0].mxu0
    %v2499 = vadd.f32 0.0, %v2498
    %v2500 = vpop.f32.mrb[0].mxu0
    %2501 = vmatprep.mubr.f32.mxu0 0.0
    %2502 = vmatmul.mubr.f32.gmra.mrb[0].mxu0 %v1382
    %v2503 = vpop.f32.mrb[0].mxu0
    %v2504 = vadd.f32 0.0, %v2503
    %v2505 = vpop.f32.mrb[0].mxu0
    %2506 = vdwg.mxu0
    %v2507 = vadd.f32 %v2296, %v2489
    %v2508 = vadd.f32 %v2301, %v2494
    %v2509 = vadd.f32 %v2306, %v2499
    %v2510 = vadd.f32 %v2311, %v2504
    %v2511 = vadd.f32 %v2507, %v1074
    %v2512 = vadd.f32 %v2508, %v1075
    %v2513 = vadd.f32 %v2509, %v1076
    %v2514 = vadd.f32 %v2510, %v1077
    %v2515 = vtanh.pop %v2511
    %v2516 = vtanh.pop %v2512
    %v2517 = vtanh.pop %v2513
    %v2518 = vtanh.pop %v2514
    %v2519 = vsub.f32 1.0, %v2379
    %v2520 = vsub.f32 1.0, %v2381
    %v2521 = vsub.f32 1.0, %v2383
    %v2522 = vsub.f32 1.0, %v2385
    %v2523 = vmul.f32 %v2519, %v2185
    %v2524 = vmul.f32 %v2520, %v2186
    %v2525 = vmul.f32 %v2521, %v2187
    %v2526 = vmul.f32 %v2522, %v2188
    %v2527 = vmul.f32 %v2379, %v2515
    %v2528 = vmul.f32 %v2381, %v2516
    %v2529 = vmul.f32 %v2383, %v2517
    %v2530 = vmul.f32 %v2385, %v2518
    %v2531 = vadd.f32 %v2523, %v2527
    %v2532 = vadd.f32 %v2524, %v2528
    %v2533 = vadd.f32 %v2525, %v2529
    %v2534 = vadd.f32 %v2526, %v2530
    %v2535 = vld [vmem:[%s0] sm:$0xff]
    %v2536 = vld [vmem:[%s0 + $0x8] sm:$0xff]
    %v2537 = vld [vmem:[%s0 + $0x10] sm:$0xff]
    %v2538 = vld [vmem:[%s0 + $0x18] sm:$0xff]
    %v2539 = vpack.c.bf16 %v2536, %v2535
    %v2540 = vpack.c.bf16 %v2538, %v2537
    %v2541 = vld [vmem:[%s1] sm:$0xff]
    %v2542 = vld [vmem:[%s1 + $0x8] sm:$0xff]
    %v2543 = vld [vmem:[%s1 + $0x10] sm:$0xff]
    %v2544 = vld [vmem:[%s1 + $0x18] sm:$0xff]
    %v2545 = vpack.c.bf16 %v2542, %v2541
    %v2546 = vpack.c.bf16 %v2544, %v2543
    %v2547 = vpack.c.bf16 %v1037, %v1036
    %v2549 = vsel %vm1078, %v2539, 0
    %v2552 = vsel %vm1078, %v2540, 0
    %2554 = vmatprep.subr.bf16.mxu0 0
    %2555 = vmatpush1.bf16.msra.mxu0 %v2545
    %2556 = vmatprep.subr.bf16.mxu0 0
    %2557 = vmatpush1.bf16.msra.mxu0 %v2546
    %2558 = vmatprep.subr.bf16.mxu0 0
    %2559 = vmatpush1.bf16.msra.mxu0 0
    %2560 = vmatprep.subr.bf16.mxu0 0
    %2561 = vmatpush1.bf16.msra.mxu0 0
    %2562 = vmatprep.subr.bf16.mxu0 0
    %2563 = vmatpush1.bf16.msra.mxu0 0
    %2564 = vmatprep.subr.bf16.mxu0 0
    %2565 = vmatpush1.bf16.msra.mxu0 0
    %2566 = vmatprep.subr.bf16.mxu0 0
    %2567 = vmatpush1.bf16.msra.mxu0 0
    %2568 = vmatprep.subr.bf16.mxu0 0
    %2569 = vmatpush1.bf16.msra.mxu0 0
    %2570 = vmatprep.subr.bf16.mxu0 0
    %2571 = vmatpush1.bf16.msra.mxu0 0
    %2572 = vmatprep.subr.bf16.mxu0 0
    %2573 = vmatpush1.bf16.msra.mxu0 0
    %2574 = vmatprep.subr.bf16.mxu0 0
    %2575 = vmatpush1.bf16.msra.mxu0 0
    %2576 = vmatprep.subr.bf16.mxu0 0
    %2577 = vmatpush1.bf16.msra.mxu0 0
    %2578 = vmatprep.subr.bf16.mxu0 0
    %2579 = vmatpush1.bf16.msra.mxu0 0
    %2580 = vmatprep.subr.bf16.mxu0 0
    %2581 = vmatpush1.bf16.msra.mxu0 0
    %2582 = vmatprep.subr.bf16.mxu0 0
    %2583 = vmatpush1.bf16.msra.mxu0 0
    %2584 = vmatprep.subr.bf16.mxu0 0
    %2585 = vmatpush1.bf16.msra.mxu0 0
    %2586 = vmatprep.mubr.bf16.mxu0 0
    %2587 = vmatmul.mubr.bf16.gmra.mrb[0].mxu0 %v2549
    %v2588 = vpop.f32.mrb[0].mxu0
    %v2589 = vadd.f32 0.0, %v2588
    %v2590 = vpop.f32.mrb[0].mxu0
    %v2591 = vpop.f32.mrb[0].mxu0
    %v2592 = vadd.f32 0.0, %v2591
    %v2593 = vpop.f32.mrb[0].mxu0
    %2594 = vmatprep.mubr.bf16.mxu0 0
    %2595 = vmatmul.mubr.bf16.gmra.mrb[0].mxu0 %v2552
    %v2596 = vpop.f32.mrb[0].mxu0
    %v2597 = vadd.f32 0.0, %v2596
    %v2598 = vpop.f32.mrb[0].mxu0
    %v2599 = vpop.f32.mrb[0].mxu0
    %v2600 = vadd.f32 0.0, %v2599
    %v2601 = vpop.f32.mrb[0].mxu0
    %2602 = vdwg.mxu0
    %v2603 = vpack.c.bf16 %v2592, %v2589
    %v2604 = vpack.c.bf16 %v2600, %v2597
    %v2606 = vsel %vm49, %v2603, 0
    %v2609 = vsel %vm49, %v2604, 0
    %2611 = vmatprep.subr.bf16.mxu0 0
    %2612 = vmatpush1.bf16.msra.mxu0 %v2547
    %2613 = vmatprep.subr.bf16.mxu0 0
    %2614 = vmatpush1.bf16.msra.mxu0 0
    %2615 = vmatprep.subr.bf16.mxu0 0
    %2616 = vmatpush1.bf16.msra.mxu0 0
    %2617 = vmatprep.subr.bf16.mxu0 0
    %2618 = vmatpush1.bf16.msra.mxu0 0
    %2619 = vmatprep.subr.bf16.mxu0 0
    %2620 = vmatpush1.bf16.msra.mxu0 0
    %2621 = vmatprep.subr.bf16.mxu0 0
    %2622 = vmatpush1.bf16.msra.mxu0 0
    %2623 = vmatprep.subr.bf16.mxu0 0
    %2624 = vmatpush1.bf16.msra.mxu0 0
    %2625 = vmatprep.subr.bf16.mxu0 0
    %2626 = vmatpush1.bf16.msra.mxu0 0
    %2627 = vmatprep.subr.bf16.mxu0 0
    %2628 = vmatpush1.bf16.msra.mxu0 0
    %2629 = vmatprep.subr.bf16.mxu0 0
    %2630 = vmatpush1.bf16.msra.mxu0 0
    %2631 = vmatprep.subr.bf16.mxu0 0
    %2632 = vmatpush1.bf16.msra.mxu0 0
    %2633 = vmatprep.subr.bf16.mxu0 0
    %2634 = vmatpush1.bf16.msra.mxu0 0
    %2635 = vmatprep.subr.bf16.mxu0 0
    %2636 = vmatpush1.bf16.msra.mxu0 0
    %2637 = vmatprep.subr.bf16.mxu0 0
    %2638 = vmatpush1.bf16.msra.mxu0 0
    %2639 = vmatprep.subr.bf16.mxu0 0
    %2640 = vmatpush1.bf16.msra.mxu0 0
    %2641 = vmatprep.subr.bf16.mxu0 0
    %2642 = vmatpush1.bf16.msra.mxu0 0
    %2643 = vmatprep.mubr.bf16.mxu0 0
    %2644 = vmatmul.mubr.bf16.gmra.mrb[0].mxu0 %v2606
    %v2645 = vpop.f32.mrb[0].mxu0
    %v2646 = vadd.f32 0.0, %v2645
    %v2647 = vpop.f32.mrb[0].mxu0
    %v2648 = vpop.f32.mrb[0].mxu0
    %v2649 = vadd.f32 0.0, %v2648
    %v2650 = vpop.f32.mrb[0].mxu0
    %2651 = vmatprep.mubr.bf16.mxu0 0
    %2652 = vmatmul.mubr.bf16.gmra.mrb[0].mxu0 %v2609
    %v2653 = vpop.f32.mrb[0].mxu0
    %v2654 = vadd.f32 0.0, %v2653
    %v2655 = vpop.f32.mrb[0].mxu0
    %v2656 = vpop.f32.mrb[0].mxu0
    %v2657 = vadd.f32 0.0, %v2656
    %v2658 = vpop.f32.mrb[0].mxu0
    %2659 = vdwg.mxu0
    %vm2660 = vcmp.ge.f32.partialorder %v2646, 0.0
    %vm2661 = vcmp.ge.f32.partialorder %v2649, 0.0
    %vm2662 = vcmp.ge.f32.partialorder %v2654, 0.0
    %vm2663 = vcmp.ge.f32.partialorder %v2657, 0.0
    %v2664 = vmul.f32 %v2646, 0.22916667
    %v2665 = vmul.f32 %v2649, 0.22916667
    %v2666 = vmul.f32 %v2654, 0.22916667
    %v2667 = vmul.f32 %v2657, 0.22916667
    %v2668 = vsel %vm2660, %v2646, %v2664
    %v2669 = vsel %vm2661, %v2649, %v2665
    %v2670 = vsel %vm2662, %v2654, %v2666
    %v2671 = vsel %vm2663, %v2657, %v2667
    %v2672 = vpack.c.bf16 %v2669, %v2668
    %v2673 = vpack.c.bf16 %v2671, %v2670
    %v2674 = vpack.c.bf16 %v2532, %v2531
    %v2675 = vpack.c.bf16 %v2534, %v2533
    %v2677 = vsel %vm1078, %v2672, 0
    %v2680 = vsel %vm1078, %v2673, 0
    %2682 = vmatprep.subr.bf16.mxu0 0
    %2683 = vmatpush1.bf16.msra.mxu0 %v2674
    %2684 = vmatprep.subr.bf16.mxu0 0
    %2685 = vmatpush1.bf16.msra.mxu0 %v2675
    %2686 = vmatprep.subr.bf16.mxu0 0
    %2687 = vmatpush1.bf16.msra.mxu0 0
    %2688 = vmatprep.subr.bf16.mxu0 0
    %2689 = vmatpush1.bf16.msra.mxu0 0
    %2690 = vmatprep.subr.bf16.mxu0 0
    %2691 = vmatpush1.bf16.msra.mxu0 0
    %2692 = vmatprep.subr.bf16.mxu0 0
    %2693 = vmatpush1.bf16.msra.mxu0 0
    %2694 = vmatprep.subr.bf16.mxu0 0
    %2695 = vmatpush1.bf16.msra.mxu0 0
    %2696 = vmatprep.subr.bf16.mxu0 0
    %2697 = vmatpush1.bf16.msra.mxu0 0
    %2698 = vmatprep.subr.bf16.mxu0 0
    %2699 = vmatpush1.bf16.msra.mxu0 0
    %2700 = vmatprep.subr.bf16.mxu0 0
    %2701 = vmatpush1.bf16.msra.mxu0 0
    %2702 = vmatprep.subr.bf16.mxu0 0
    %2703 = vmatpush1.bf16.msra.mxu0 0
    %2704 = vmatprep.subr.bf16.mxu0 0
    %2705 = vmatpush1.bf16.msra.mxu0 0
    %2706 = vmatprep.subr.bf16.mxu0 0
    %2707 = vmatpush1.bf16.msra.mxu0 0
    %2708 = vmatprep.subr.bf16.mxu0 0
    %2709 = vmatpush1.bf16.msra.mxu0 0
    %2710 = vmatprep.subr.bf16.mxu0 0
    %2711 = vmatpush1.bf16.msra.mxu0 0
    %2712 = vmatprep.subr.bf16.mxu0 0
    %2713 = vmatpush1.bf16.msra.mxu0 0
    %2714 = vmatprep.mubr.bf16.mxu0 0
    %2715 = vmatmul.mubr.bf16.gmra.mrb[0].mxu0 %v2677
    %v2716 = vpop.f32.mrb[0].mxu0
    %v2717 = vadd.f32 0.0, %v2716
    %v2718 = vpop.f32.mrb[0].mxu0
    %v2719 = vpop.f32.mrb[0].mxu0
    %v2720 = vadd.f32 0.0, %v2719
    %v2721 = vpop.f32.mrb[0].mxu0
    %2722 = vmatprep.mubr.bf16.mxu0 0
    %2723 = vmatmul.mubr.bf16.gmra.mrb[0].mxu0 %v2680
    %v2724 = vpop.f32.mrb[0].mxu0
    %v2725 = vadd.f32 0.0, %v2724
    %v2726 = vpop.f32.mrb[0].mxu0
    %v2727 = vpop.f32.mrb[0].mxu0
    %v2728 = vadd.f32 0.0, %v2727
    %v2729 = vpop.f32.mrb[0].mxu0
    %2730 = vdwg.mxu0
    %v2731 = vpack.c.bf16 %v2720, %v2717
    %v2732 = vpack.c.bf16 %v2728, %v2725
    %2733 = vmatprep.subr.bf16.mxu0 0
    %2734 = vmatpush1.bf16.msra.mxu0 %v2731
    %2735 = vmatprep.subr.bf16.mxu0 0
    %2736 = vmatpush1.bf16.msra.mxu0 %v2732
    %2737 = vmatprep.subr.bf16.mxu0 0
    %2738 = vmatpush1.bf16.msra.mxu0 0
    %2739 = vmatprep.subr.bf16.mxu0 0
    %2740 = vmatpush1.bf16.msra.mxu0 0
    %2741 = vmatprep.subr.bf16.mxu0 0
    %2742 = vmatpush1.bf16.msra.mxu0 0
    %2743 = vmatprep.subr.bf16.mxu0 0
    %2744 = vmatpush1.bf16.msra.mxu0 0
    %2745 = vmatprep.subr.bf16.mxu0 0
    %2746 = vmatpush1.bf16.msra.mxu0 0
    %2747 = vmatprep.subr.bf16.mxu0 0
    %2748 = vmatpush1.bf16.msra.mxu0 0
    %2749 = vmatprep.subr.bf16.mxu0 0
    %2750 = vmatpush1.bf16.msra.mxu0 0
    %2751 = vmatprep.subr.bf16.mxu0 0
    %2752 = vmatpush1.bf16.msra.mxu0 0
    %2753 = vmatprep.subr.bf16.mxu0 0
    %2754 = vmatpush1.bf16.msra.mxu0 0
    %2755 = vmatprep.subr.bf16.mxu0 0
    %2756 = vmatpush1.bf16.msra.mxu0 0
    %2757 = vmatprep.subr.bf16.mxu0 0
    %2758 = vmatpush1.bf16.msra.mxu0 0
    %2759 = vmatprep.subr.bf16.mxu0 0
    %2760 = vmatpush1.bf16.msra.mxu0 0
    %2761 = vmatprep.subr.bf16.mxu0 0
    %2762 = vmatpush1.bf16.msra.mxu0 0
    %2763 = vmatprep.subr.bf16.mxu0 0
    %2764 = vmatpush1.bf16.msra.mxu0 0
    %2765 = vmatprep.mubr.bf16.mxu0 0
    %2766 = vmatmul.mubr.bf16.gmra.mrb[0].mxu0 %v2549
    %v2767 = vpop.f32.mrb[0].mxu0
    %v2768 = vadd.f32 0.0, %v2767
    %v2769 = vpop.f32.mrb[0].mxu0
    %v2770 = vpop.f32.mrb[0].mxu0
    %v2771 = vadd.f32 0.0, %v2770
    %v2772 = vpop.f32.mrb[0].mxu0
    %2773 = vmatprep.mubr.bf16.mxu0 0
    %2774 = vmatmul.mubr.bf16.gmra.mrb[0].mxu0 %v2552
    %v2775 = vpop.f32.mrb[0].mxu0
    %v2776 = vadd.f32 0.0, %v2775
    %v2777 = vpop.f32.mrb[0].mxu0
    %v2778 = vpop.f32.mrb[0].mxu0
    %v2779 = vadd.f32 0.0, %v2778
    %v2780 = vpop.f32.mrb[0].mxu0
    %2781 = vdwg.mxu0
    %vm2782 = vcmp.ge.f32.partialorder %v2768, 0.0
    %vm2783 = vcmp.ge.f32.partialorder %v2771, 0.0
    %vm2784 = vcmp.ge.f32.partialorder %v2776, 0.0
    %vm2785 = vcmp.ge.f32.partialorder %v2779, 0.0
    %v2786 = vmul.f32 %v2768, 0.22916667
    %v2787 = vmul.f32 %v2771, 0.22916667
    %v2788 = vmul.f32 %v2776, 0.22916667
    %v2789 = vmul.f32 %v2779, 0.22916667
    %v2790 = vsel %vm2782, %v2768, %v2786
    %v2791 = vsel %vm2783, %v2771, %v2787
    %v2792 = vsel %vm2784, %v2776, %v2788
    %v2793 = vsel %vm2785, %v2779, %v2789
    %2794 = vst.msk [vmem:[%s3] sm:$0xff] %vm49, %v2790
    %2795 = vst.msk [vmem:[%s3 + $0x8] sm:$0xff] %vm49, %v2791
    %2796 = vst.msk [vmem:[%s3 + $0x10] sm:$0xff] %vm49, %v2792
    %2797 = vst.msk [vmem:[%s3 + $0x18] sm:$0xff] %vm49, %v2793
    // Predicated region
    $region18: #{tpu_custom_call.1} parent=1 // pred_check
      _
    $region19: #{tpu_custom_call.1} parent=1 // pred_check_branch
      %2799 = sbr.rel (0) target = $region21
    $region20: #{tpu_custom_call.1} parent=1 // pred_region
      _
    $region21: #{tpu_custom_call.1} parent=1 // pred_fallthru
      _
    // Predicated region
    $region22: #{tpu_custom_call.1} parent=1 // pred_check
      _
    $region23: #{tpu_custom_call.1} parent=1 // pred_check_branch
      %2801 = sbr.rel (0) target = $region25
    $region24: #{tpu_custom_call.1} parent=1 // pred_region
      _
    $region25: #{tpu_custom_call.1} parent=1 // pred_fallthru
      _
    %2802 = vsyncpa [#allocation3], 1

</llo_original>
